<compile_context>
chip_gen: v7x
topology: tpu7x:2x2x1
jax: 0.10.0
libtpu: 0.0.40
codegen_flags: <defaults>
</compile_context>

<pallas_src>
import functools

import jax
import jax.numpy as jnp
from jax.experimental import pallas as pl
from jax.experimental.pallas import tpu as pltpu

# ---------------- config (small, synthetic "bert" config) ----------------
VOCAB = 100
TYPE_VOCAB = 2
MAX_POS = 16
HIDDEN = 32            # bert.config.hidden_size
N_HEADS = 2
HEAD_DIM = HIDDEN // N_HEADS
N_LAYERS = 2
INTERMEDIATE = 64
MIDDLE_HIDDEN = 16     # config.middle_hidden_size
LN_EPS = 1e-12


def _gelu(x):
    # tanh approximation of GELU ("gelu_new"); original BERT uses erf-based GELU.
    # TODO(synk): switch to erf GELU if real pretrained weights are ever loaded.
    return 0.5 * x * (1.0 + jnp.tanh(0.7978845608028654 * (x + 0.044715 * x * x * x)))


# ---------------- the single fused Pallas kernel ----------------
def _fused_bert_kernel(emb_ref, mask_ref, eg_ref, eb_ref,
                       wqkv_ref, bqkv_ref, wo_ref, bo_ref,
                       ln1g_ref, ln1b_ref, w1_ref, b1_ref,
                       w2_ref, b2_ref, ln2g_ref, ln2b_ref,
                       wp_ref, bp_ref, wt_ref, bt_ref,
                       o_ref, ctx_ref, cls_ref, *, batch, seq):
    """Entire BERT-encoder + pooler + trans head forward, resident in VMEM."""

    def layer_norm(x, g, b):
        mu = jnp.mean(x, axis=-1, keepdims=True)
        var = jnp.mean((x - mu) ** 2, axis=-1, keepdims=True)
        return (x - mu) * jax.lax.rsqrt(var + LN_EPS) * g + b

    def matmul(x, w):
        return jnp.dot(x, w, preferred_element_type=jnp.float32)

    # embeddings already summed (gather is XLA glue); fused embedding LayerNorm
    h = layer_norm(emb_ref[...], eg_ref[...], eb_ref[...])        # (B*S, H)
    mask = mask_ref[...]                                          # (B, S) additive bias
    scale = 1.0 / (HEAD_DIM ** 0.5)

    for l in range(N_LAYERS):                                     # static unroll
        # ---- fused QKV projection: one (H, 3H) matmul ----
        qkv = matmul(h, wqkv_ref[l]) + bqkv_ref[l]                # (B*S, 3H)

        # ---- multi-head attention, all heads in-kernel (static unroll) ----
        for b in range(batch):
            r0 = b * seq
            bias = mask[b:b + 1, :]                               # (1, S)
            for hd in range(N_HEADS):
                c0 = hd * HEAD_DIM
                q = qkv[r0:r0 + seq, c0:c0 + HEAD_DIM]                        # (S, Dh)
                k = qkv[r0:r0 + seq, HIDDEN + c0:HIDDEN + c0 + HEAD_DIM]      # (S, Dh)
                v = qkv[r0:r0 + seq, 2 * HIDDEN + c0:2 * HIDDEN + c0 + HEAD_DIM]
                # q . k^T without materializing a transpose (MXU NT matmul)
                s = jax.lax.dot_general(
                    q, k, (((1,), (1,)), ((), ())),
                    preferred_element_type=jnp.float32) * scale + bias        # (S, S)
                s = s - jnp.max(s, axis=-1, keepdims=True)
                p = jnp.exp(s)
                p = p * pl.reciprocal(jnp.sum(p, axis=-1, keepdims=True),
                                      approx=True)
                ctx_ref[r0:r0 + seq, c0:c0 + HEAD_DIM] = matmul(p, v)

        # ---- output projection + residual + post-LN ----
        a = matmul(ctx_ref[...], wo_ref[l]) + bo_ref[l]
        h = layer_norm(a + h, ln1g_ref[l], ln1b_ref[l])

        # ---- FFN (GELU) + residual + post-LN ----
        f = _gelu(matmul(h, w1_ref[l]) + b1_ref[l])
        f = matmul(f, w2_ref[l]) + b2_ref[l]
        h = layer_norm(f + h, ln2g_ref[l], ln2b_ref[l])

    # ---- pooler (tanh on [CLS]) + trans head (Dropout=identity -> Linear -> ReLU) ----
    for b in range(batch):
        cls_ref[b:b + 1, :] = h[b * seq:b * seq + 1, :]
    pooled = jnp.tanh(matmul(cls_ref[...], wp_ref[...]) + bp_ref[...])
    y = matmul(pooled, wt_ref[...]) + bt_ref[...]
    o_ref[...] = jnp.maximum(y, 0.0)


# ---------------- deterministic parameter init (stacked per-layer weights) ----------------
def init_params(key):
    def nrm(k, shape, scale=0.02):
        return scale * jax.random.normal(k, shape, dtype=jnp.float32)

    ks = jax.random.split(key, 9)
    params = {
        "word_emb": nrm(ks[0], (VOCAB, HIDDEN)),
        "pos_emb": nrm(ks[1], (MAX_POS, HIDDEN)),
        "type_emb": nrm(ks[2], (TYPE_VOCAB, HIDDEN)),
        "emb_ln_g": jnp.ones((1, HIDDEN), jnp.float32),
        "emb_ln_b": jnp.zeros((1, HIDDEN), jnp.float32),
        # per-layer weights stacked along a leading layer axis; QKV fused.
        "wqkv": nrm(ks[3], (N_LAYERS, HIDDEN, 3 * HIDDEN)),
        "bqkv": jnp.zeros((N_LAYERS, 1, 3 * HIDDEN), jnp.float32),
        "wo": nrm(ks[4], (N_LAYERS, HIDDEN, HIDDEN)),
        "bo": jnp.zeros((N_LAYERS, 1, HIDDEN), jnp.float32),
        "ln1_g": jnp.ones((N_LAYERS, 1, HIDDEN), jnp.float32),
        "ln1_b": jnp.zeros((N_LAYERS, 1, HIDDEN), jnp.float32),
        "w1": nrm(ks[5], (N_LAYERS, HIDDEN, INTERMEDIATE)),
        "b1": jnp.zeros((N_LAYERS, 1, INTERMEDIATE), jnp.float32),
        "w2": nrm(ks[6], (N_LAYERS, INTERMEDIATE, HIDDEN)),
        "b2": jnp.zeros((N_LAYERS, 1, HIDDEN), jnp.float32),
        "ln2_g": jnp.ones((N_LAYERS, 1, HIDDEN), jnp.float32),
        "ln2_b": jnp.zeros((N_LAYERS, 1, HIDDEN), jnp.float32),
        "pooler_w": nrm(ks[7], (HIDDEN, HIDDEN)),
        "pooler_b": jnp.zeros((1, HIDDEN), jnp.float32),
        "trans_w": nrm(ks[8], (HIDDEN, MIDDLE_HIDDEN)),
        "trans_b": jnp.zeros((1, MIDDLE_HIDDEN), jnp.float32),
    }
    return params


# ---------------- TextModel.forward (wrapper: gathers in XLA, one pallas_call) ----------------
def text_model_forward(params, bert_inputs, masks, token_type_ids=None):
    assert bert_inputs.shape == masks.shape, "error! bert_inputs and masks must have same shape!"
    B, S = bert_inputs.shape
    if token_type_ids is None:
        token_type_ids = jnp.zeros((B, S), jnp.int32)

    # embeddings: gathers are XLA glue; everything after them is one fused kernel.
    pos = jnp.arange(S, dtype=jnp.int32)
    emb = (params["word_emb"][bert_inputs]
           + params["pos_emb"][pos][None, :, :]
           + params["type_emb"][token_type_ids]).reshape(B * S, HIDDEN)

    # additive attention mask: 0 where attended, -1e9 where masked (f32-safe)
    mask_bias = (1.0 - masks.astype(jnp.float32)) * -1e9          # (B, S)

    kernel = functools.partial(_fused_bert_kernel, batch=B, seq=S)
    out = pl.pallas_call(
        kernel,
        out_shape=jax.ShapeDtypeStruct((B, MIDDLE_HIDDEN), jnp.float32),
        scratch_shapes=[
            pltpu.VMEM((B * S, HIDDEN), jnp.float32),   # attention context buffer
            pltpu.VMEM((B, HIDDEN), jnp.float32),       # gathered [CLS] rows
        ],
    )(emb, mask_bias, params["emb_ln_g"], params["emb_ln_b"],
      params["wqkv"], params["bqkv"], params["wo"], params["bo"],
      params["ln1_g"], params["ln1_b"], params["w1"], params["b1"],
      params["w2"], params["b2"], params["ln2_g"], params["ln2_b"],
      params["pooler_w"], params["pooler_b"], params["trans_w"], params["trans_b"])
    return out


# ---------------- pure-JAX reference (for sanity checking) ----------------
def reference_forward(params, bert_inputs, masks, token_type_ids=None):
    B, S = bert_inputs.shape
    if token_type_ids is None:
        token_type_ids = jnp.zeros((B, S), jnp.int32)
    pos = jnp.arange(S, dtype=jnp.int32)
    emb = (params["word_emb"][bert_inputs]
           + params["pos_emb"][pos][None, :, :]
           + params["type_emb"][token_type_ids])                  # (B,S,H)

    def ln(x, g, b):
        mu = x.mean(-1, keepdims=True)
        var = ((x - mu) ** 2).mean(-1, keepdims=True)
        return (x - mu) * jax.lax.rsqrt(var + LN_EPS) * g + b

    h = ln(emb, params["emb_ln_g"], params["emb_ln_b"])
    bias = ((1.0 - masks.astype(jnp.float32)) * -1e9)[:, None, None, :]  # (B,1,1,S)

    for l in range(N_LAYERS):
        qkv = h @ params["wqkv"][l] + params["bqkv"][l]
        q, k, v = jnp.split(qkv, 3, axis=-1)

        def heads(x):
            return x.reshape(B, S, N_HEADS, HEAD_DIM).transpose(0, 2, 1, 3)

        qh, kh, vh = heads(q), heads(k), heads(v)
        s = jnp.einsum("bhqd,bhkd->bhqk", qh, kh) / (HEAD_DIM ** 0.5) + bias
        p = jax.nn.softmax(s, axis=-1)
        ctx = jnp.einsum("bhqk,bhkd->bhqd", p, vh).transpose(0, 2, 1, 3).reshape(B, S, HIDDEN)
        a = ctx @ params["wo"][l] + params["bo"][l]
        h = ln(a + h, params["ln1_g"][l], params["ln1_b"][l])
        f = _gelu(h @ params["w1"][l] + params["b1"][l])
        f = f @ params["w2"][l] + params["b2"][l]
        h = ln(f + h, params["ln2_g"][l], params["ln2_b"][l])

    cls = h[:, 0, :]
    pooled = jnp.tanh(cls @ params["pooler_w"] + params["pooler_b"])
    y = pooled @ params["trans_w"] + params["trans_b"]
    return jnp.maximum(y, 0.0)


if __name__ == "__main__":
    key = jax.random.PRNGKey(0)
    pkey, ikey = jax.random.split(key)
    params = init_params(pkey)

    B, S = 2, 8
    bert_inputs = jax.random.randint(ikey, (B, S), 0, VOCAB, dtype=jnp.int32)
    masks = jnp.array([[1, 1, 1, 1, 1, 1, 1, 1],
                       [1, 1, 1, 1, 1, 1, 0, 0]], dtype=jnp.int32)

    out = text_model_forward(params, bert_inputs, masks)
    out = jax.block_until_ready(out)

    ref = jax.block_until_ready(reference_forward(params, bert_inputs, masks))

    assert out.shape == (B, MIDDLE_HIDDEN)
    assert bool(jnp.all(jnp.isfinite(out)))
    assert bool(jnp.all(out >= 0.0))                       # ReLU output
    assert bool(jnp.allclose(out, ref, atol=5e-3, rtol=5e-2)), (out, ref)
    print("KERNEL_OK")
</pallas_src>

<mosaic_0001>
module attributes {stable_mosaic.version = 11 : i64} {
  func.func @_fused_bert_kernel(%arg0: memref<16x32xf32, #tpu.memory_space<vmem>>, %arg1: memref<2x8xf32, #tpu.memory_space<vmem>>, %arg2: memref<1x32xf32, #tpu.memory_space<vmem>>, %arg3: memref<1x32xf32, #tpu.memory_space<vmem>>, %arg4: memref<2x32x96xf32, #tpu.memory_space<vmem>>, %arg5: memref<2x1x96xf32, #tpu.memory_space<vmem>>, %arg6: memref<2x32x32xf32, #tpu.memory_space<vmem>>, %arg7: memref<2x1x32xf32, #tpu.memory_space<vmem>>, %arg8: memref<2x1x32xf32, #tpu.memory_space<vmem>>, %arg9: memref<2x1x32xf32, #tpu.memory_space<vmem>>, %arg10: memref<2x32x64xf32, #tpu.memory_space<vmem>>, %arg11: memref<2x1x64xf32, #tpu.memory_space<vmem>>, %arg12: memref<2x64x32xf32, #tpu.memory_space<vmem>>, %arg13: memref<2x1x32xf32, #tpu.memory_space<vmem>>, %arg14: memref<2x1x32xf32, #tpu.memory_space<vmem>>, %arg15: memref<2x1x32xf32, #tpu.memory_space<vmem>>, %arg16: memref<32x32xf32, #tpu.memory_space<vmem>>, %arg17: memref<1x32xf32, #tpu.memory_space<vmem>>, %arg18: memref<32x16xf32, #tpu.memory_space<vmem>>, %arg19: memref<1x16xf32, #tpu.memory_space<vmem>>, %arg20: memref<2x16xf32, #tpu.memory_space<vmem>>, %arg21: memref<16x32xf32, #tpu.memory_space<vmem>>, %arg22: memref<2x32xf32, #tpu.memory_space<vmem>>) attributes {dimension_semantics = [], scalar_prefetch = 0 : i64, scratch_operands = 2 : i64, tpu.core_type = #tpu.core_type<tc>} {
    %c0 = arith.constant 0 : index
    %c0_0 = arith.constant 0 : index
    %0 = vector.load %arg0[%c0, %c0_0] : memref<16x32xf32, #tpu.memory_space<vmem>>, vector<16x32xf32>
    %c0_1 = arith.constant 0 : index
    %c0_2 = arith.constant 0 : index
    %1 = vector.load %arg2[%c0_1, %c0_2] : memref<1x32xf32, #tpu.memory_space<vmem>>, vector<1x32xf32>
    %c0_3 = arith.constant 0 : index
    %c0_4 = arith.constant 0 : index
    %2 = vector.load %arg3[%c0_3, %c0_4] : memref<1x32xf32, #tpu.memory_space<vmem>>, vector<1x32xf32>
    %cst = arith.constant dense<0.000000e+00> : vector<16xf32>
    %3 = vector.multi_reduction <add>, %0, %cst [1] : vector<16x32xf32> to vector<16xf32>
    %4 = vector.shape_cast %3 : vector<16xf32> to vector<16x1xf32>
    %cst_5 = arith.constant 3.200000e+01 : f32
    %5 = vector.broadcast %cst_5 : f32 to vector<16x1xf32>
    %6 = arith.divf %4, %5 : vector<16x1xf32>
    %7 = vector.broadcast %6 : vector<16x1xf32> to vector<16x32xf32>
    %8 = arith.subf %0, %7 : vector<16x32xf32>
    %9 = arith.mulf %8, %8 : vector<16x32xf32>
    %cst_6 = arith.constant dense<0.000000e+00> : vector<16xf32>
    %10 = vector.multi_reduction <add>, %9, %cst_6 [1] : vector<16x32xf32> to vector<16xf32>
    %11 = vector.shape_cast %10 : vector<16xf32> to vector<16x1xf32>
    %cst_7 = arith.constant 3.200000e+01 : f32
    %12 = vector.broadcast %cst_7 : f32 to vector<16x1xf32>
    %13 = arith.divf %11, %12 : vector<16x1xf32>
    %14 = vector.broadcast %6 : vector<16x1xf32> to vector<16x32xf32>
    %15 = arith.subf %0, %14 : vector<16x32xf32>
    %cst_8 = arith.constant 9.99999996E-13 : f32
    %16 = vector.broadcast %cst_8 : f32 to vector<16x1xf32>
    %17 = arith.addf %13, %16 : vector<16x1xf32>
    %18 = math.rsqrt %17 : vector<16x1xf32>
    %19 = vector.broadcast %18 : vector<16x1xf32> to vector<16x32xf32>
    %20 = arith.mulf %15, %19 : vector<16x32xf32>
    %21 = vector.broadcast %1 : vector<1x32xf32> to vector<16x32xf32>
    %22 = arith.mulf %20, %21 : vector<16x32xf32>
    %23 = vector.broadcast %2 : vector<1x32xf32> to vector<16x32xf32>
    %24 = arith.addf %22, %23 : vector<16x32xf32>
    %c0_9 = arith.constant 0 : index
    %c0_10 = arith.constant 0 : index
    %25 = vector.load %arg1[%c0_9, %c0_10] : memref<2x8xf32, #tpu.memory_space<vmem>>, vector<2x8xf32>
    %c0_11 = arith.constant 0 : index
    %c0_12 = arith.constant 0 : index
    %c0_13 = arith.constant 0 : index
    %26 = vector.load %arg4[%c0_11, %c0_12, %c0_13] : memref<2x32x96xf32, #tpu.memory_space<vmem>>, vector<1x32x96xf32>
    %27 = vector.shape_cast %26 : vector<1x32x96xf32> to vector<32x96xf32>
    %cst_14 = arith.constant dense<0.000000e+00> : vector<16x96xf32>
    %28 = tpu.matmul %24, %27, %cst_14 {dimension_numbers = #tpu.dot_dimension_numbers<[1], [0], [0], [1], [0, 0, 1, 1], [], []>} : vector<16x32xf32>, vector<32x96xf32>, vector<16x96xf32> -> vector<16x96xf32>
    %c0_15 = arith.constant 0 : index
    %c0_16 = arith.constant 0 : index
    %c0_17 = arith.constant 0 : index
    %29 = vector.load %arg5[%c0_15, %c0_16, %c0_17] : memref<2x1x96xf32, #tpu.memory_space<vmem>>, vector<1x1x96xf32>
    %30 = vector.shape_cast %29 : vector<1x1x96xf32> to vector<1x96xf32>
    %31 = vector.broadcast %30 : vector<1x96xf32> to vector<16x96xf32>
    %32 = arith.addf %28, %31 : vector<16x96xf32>
    %33 = vector.extract_strided_slice %25 {offsets = [0, 0], sizes = [1, 8], strides = [1, 1]} : vector<2x8xf32> to vector<1x8xf32>
    %34 = vector.extract_strided_slice %32 {offsets = [0, 0], sizes = [8, 16], strides = [1, 1]} : vector<16x96xf32> to vector<8x16xf32>
    %35 = vector.extract_strided_slice %32 {offsets = [0, 32], sizes = [8, 16], strides = [1, 1]} : vector<16x96xf32> to vector<8x16xf32>
    %36 = vector.extract_strided_slice %32 {offsets = [0, 64], sizes = [8, 16], strides = [1, 1]} : vector<16x96xf32> to vector<8x16xf32>
    %cst_18 = arith.constant dense<0.000000e+00> : vector<8x8xf32>
    %37 = tpu.matmul %34, %35, %cst_18 {dimension_numbers = #tpu.dot_dimension_numbers<[1], [1], [0], [0], [0, 0, 1, 0], [], []>} : vector<8x16xf32>, vector<8x16xf32>, vector<8x8xf32> -> vector<8x8xf32>
    %cst_19 = arith.constant 2.500000e-01 : f32
    %38 = vector.broadcast %cst_19 : f32 to vector<8x8xf32>
    %39 = arith.mulf %37, %38 : vector<8x8xf32>
    %40 = vector.broadcast %33 : vector<1x8xf32> to vector<8x8xf32>
    %41 = arith.addf %39, %40 : vector<8x8xf32>
    %cst_20 = arith.constant dense<0xFF800000> : vector<8xf32>
    %42 = vector.multi_reduction <maximumf>, %41, %cst_20 [1] : vector<8x8xf32> to vector<8xf32>
    %43 = vector.shape_cast %42 : vector<8xf32> to vector<8x1xf32>
    %44 = vector.broadcast %43 : vector<8x1xf32> to vector<8x8xf32>
    %45 = arith.subf %41, %44 : vector<8x8xf32>
    %46 = math.exp %45 : vector<8x8xf32>
    %cst_21 = arith.constant dense<0.000000e+00> : vector<8xf32>
    %47 = vector.multi_reduction <add>, %46, %cst_21 [1] : vector<8x8xf32> to vector<8xf32>
    %48 = vector.shape_cast %47 : vector<8xf32> to vector<8x1xf32>
    %49 = tpu.reciprocal %48 {approx = true} : vector<8x1xf32> -> vector<8x1xf32>
    %50 = vector.broadcast %49 : vector<8x1xf32> to vector<8x8xf32>
    %51 = arith.mulf %46, %50 : vector<8x8xf32>
    %cst_22 = arith.constant dense<0.000000e+00> : vector<8x16xf32>
    %52 = tpu.matmul %51, %36, %cst_22 {dimension_numbers = #tpu.dot_dimension_numbers<[1], [0], [0], [1], [0, 0, 1, 1], [], []>} : vector<8x8xf32>, vector<8x16xf32>, vector<8x16xf32> -> vector<8x16xf32>
    %c0_23 = arith.constant 0 : index
    %c0_24 = arith.constant 0 : index
    %53 = vector.load %arg21[%c0_23, %c0_24] : memref<16x32xf32, #tpu.memory_space<vmem>>, vector<8x16xf32>
    tpu.vector_store %arg21[%c0_23, %c0_24], %52 {strides = array<i32>} : memref<16x32xf32, #tpu.memory_space<vmem>>, vector<8x16xf32>,
    %54 = vector.extract_strided_slice %32 {offsets = [0, 16], sizes = [8, 16], strides = [1, 1]} : vector<16x96xf32> to vector<8x16xf32>
    %55 = vector.extract_strided_slice %32 {offsets = [0, 48], sizes = [8, 16], strides = [1, 1]} : vector<16x96xf32> to vector<8x16xf32>
    %56 = vector.extract_strided_slice %32 {offsets = [0, 80], sizes = [8, 16], strides = [1, 1]} : vector<16x96xf32> to vector<8x16xf32>
    %cst_25 = arith.constant dense<0.000000e+00> : vector<8x8xf32>
    %57 = tpu.matmul %54, %55, %cst_25 {dimension_numbers = #tpu.dot_dimension_numbers<[1], [1], [0], [0], [0, 0, 1, 0], [], []>} : vector<8x16xf32>, vector<8x16xf32>, vector<8x8xf32> -> vector<8x8xf32>
    %cst_26 = arith.constant 2.500000e-01 : f32
    %58 = vector.broadcast %cst_26 : f32 to vector<8x8xf32>
    %59 = arith.mulf %57, %58 : vector<8x8xf32>
    %60 = vector.broadcast %33 : vector<1x8xf32> to vector<8x8xf32>
    %61 = arith.addf %59, %60 : vector<8x8xf32>
    %cst_27 = arith.constant dense<0xFF800000> : vector<8xf32>
    %62 = vector.multi_reduction <maximumf>, %61, %cst_27 [1] : vector<8x8xf32> to vector<8xf32>
    %63 = vector.shape_cast %62 : vector<8xf32> to vector<8x1xf32>
    %64 = vector.broadcast %63 : vector<8x1xf32> to vector<8x8xf32>
    %65 = arith.subf %61, %64 : vector<8x8xf32>
    %66 = math.exp %65 : vector<8x8xf32>
    %cst_28 = arith.constant dense<0.000000e+00> : vector<8xf32>
    %67 = vector.multi_reduction <add>, %66, %cst_28 [1] : vector<8x8xf32> to vector<8xf32>
    %68 = vector.shape_cast %67 : vector<8xf32> to vector<8x1xf32>
    %69 = tpu.reciprocal %68 {approx = true} : vector<8x1xf32> -> vector<8x1xf32>
    %70 = vector.broadcast %69 : vector<8x1xf32> to vector<8x8xf32>
    %71 = arith.mulf %66, %70 : vector<8x8xf32>
    %cst_29 = arith.constant dense<0.000000e+00> : vector<8x16xf32>
    %72 = tpu.matmul %71, %56, %cst_29 {dimension_numbers = #tpu.dot_dimension_numbers<[1], [0], [0], [1], [0, 0, 1, 1], [], []>} : vector<8x8xf32>, vector<8x16xf32>, vector<8x16xf32> -> vector<8x16xf32>
    %c0_30 = arith.constant 0 : index
    %c16 = arith.constant 16 : index
    %73 = vector.load %arg21[%c0_30, %c16] : memref<16x32xf32, #tpu.memory_space<vmem>>, vector<8x16xf32>
    tpu.vector_store %arg21[%c0_30, %c16], %72 {strides = array<i32>} : memref<16x32xf32, #tpu.memory_space<vmem>>, vector<8x16xf32>,
    %74 = vector.extract_strided_slice %25 {offsets = [1, 0], sizes = [1, 8], strides = [1, 1]} : vector<2x8xf32> to vector<1x8xf32>
    %75 = vector.extract_strided_slice %32 {offsets = [8, 0], sizes = [8, 16], strides = [1, 1]} : vector<16x96xf32> to vector<8x16xf32>
    %76 = vector.extract_strided_slice %32 {offsets = [8, 32], sizes = [8, 16], strides = [1, 1]} : vector<16x96xf32> to vector<8x16xf32>
    %77 = vector.extract_strided_slice %32 {offsets = [8, 64], sizes = [8, 16], strides = [1, 1]} : vector<16x96xf32> to vector<8x16xf32>
    %cst_31 = arith.constant dense<0.000000e+00> : vector<8x8xf32>
    %78 = tpu.matmul %75, %76, %cst_31 {dimension_numbers = #tpu.dot_dimension_numbers<[1], [1], [0], [0], [0, 0, 1, 0], [], []>} : vector<8x16xf32>, vector<8x16xf32>, vector<8x8xf32> -> vector<8x8xf32>
    %cst_32 = arith.constant 2.500000e-01 : f32
    %79 = vector.broadcast %cst_32 : f32 to vector<8x8xf32>
    %80 = arith.mulf %78, %79 : vector<8x8xf32>
    %81 = vector.broadcast %74 : vector<1x8xf32> to vector<8x8xf32>
    %82 = arith.addf %80, %81 : vector<8x8xf32>
    %cst_33 = arith.constant dense<0xFF800000> : vector<8xf32>
    %83 = vector.multi_reduction <maximumf>, %82, %cst_33 [1] : vector<8x8xf32> to vector<8xf32>
    %84 = vector.shape_cast %83 : vector<8xf32> to vector<8x1xf32>
    %85 = vector.broadcast %84 : vector<8x1xf32> to vector<8x8xf32>
    %86 = arith.subf %82, %85 : vector<8x8xf32>
    %87 = math.exp %86 : vector<8x8xf32>
    %cst_34 = arith.constant dense<0.000000e+00> : vector<8xf32>
    %88 = vector.multi_reduction <add>, %87, %cst_34 [1] : vector<8x8xf32> to vector<8xf32>
    %89 = vector.shape_cast %88 : vector<8xf32> to vector<8x1xf32>
    %90 = tpu.reciprocal %89 {approx = true} : vector<8x1xf32> -> vector<8x1xf32>
    %91 = vector.broadcast %90 : vector<8x1xf32> to vector<8x8xf32>
    %92 = arith.mulf %87, %91 : vector<8x8xf32>
    %cst_35 = arith.constant dense<0.000000e+00> : vector<8x16xf32>
    %93 = tpu.matmul %92, %77, %cst_35 {dimension_numbers = #tpu.dot_dimension_numbers<[1], [0], [0], [1], [0, 0, 1, 1], [], []>} : vector<8x8xf32>, vector<8x16xf32>, vector<8x16xf32> -> vector<8x16xf32>
    %c8 = arith.constant 8 : index
    %c0_36 = arith.constant 0 : index
    %94 = vector.load %arg21[%c8, %c0_36] : memref<16x32xf32, #tpu.memory_space<vmem>>, vector<8x16xf32>
    tpu.vector_store %arg21[%c8, %c0_36], %93 {strides = array<i32>} : memref<16x32xf32, #tpu.memory_space<vmem>>, vector<8x16xf32>,
    %95 = vector.extract_strided_slice %32 {offsets = [8, 16], sizes = [8, 16], strides = [1, 1]} : vector<16x96xf32> to vector<8x16xf32>
    %96 = vector.extract_strided_slice %32 {offsets = [8, 48], sizes = [8, 16], strides = [1, 1]} : vector<16x96xf32> to vector<8x16xf32>
    %97 = vector.extract_strided_slice %32 {offsets = [8, 80], sizes = [8, 16], strides = [1, 1]} : vector<16x96xf32> to vector<8x16xf32>
    %cst_37 = arith.constant dense<0.000000e+00> : vector<8x8xf32>
    %98 = tpu.matmul %95, %96, %cst_37 {dimension_numbers = #tpu.dot_dimension_numbers<[1], [1], [0], [0], [0, 0, 1, 0], [], []>} : vector<8x16xf32>, vector<8x16xf32>, vector<8x8xf32> -> vector<8x8xf32>
    %cst_38 = arith.constant 2.500000e-01 : f32
    %99 = vector.broadcast %cst_38 : f32 to vector<8x8xf32>
    %100 = arith.mulf %98, %99 : vector<8x8xf32>
    %101 = vector.broadcast %74 : vector<1x8xf32> to vector<8x8xf32>
    %102 = arith.addf %100, %101 : vector<8x8xf32>
    %cst_39 = arith.constant dense<0xFF800000> : vector<8xf32>
    %103 = vector.multi_reduction <maximumf>, %102, %cst_39 [1] : vector<8x8xf32> to vector<8xf32>
    %104 = vector.shape_cast %103 : vector<8xf32> to vector<8x1xf32>
    %105 = vector.broadcast %104 : vector<8x1xf32> to vector<8x8xf32>
    %106 = arith.subf %102, %105 : vector<8x8xf32>
    %107 = math.exp %106 : vector<8x8xf32>
    %cst_40 = arith.constant dense<0.000000e+00> : vector<8xf32>
    %108 = vector.multi_reduction <add>, %107, %cst_40 [1] : vector<8x8xf32> to vector<8xf32>
    %109 = vector.shape_cast %108 : vector<8xf32> to vector<8x1xf32>
    %110 = tpu.reciprocal %109 {approx = true} : vector<8x1xf32> -> vector<8x1xf32>
    %111 = vector.broadcast %110 : vector<8x1xf32> to vector<8x8xf32>
    %112 = arith.mulf %107, %111 : vector<8x8xf32>
    %cst_41 = arith.constant dense<0.000000e+00> : vector<8x16xf32>
    %113 = tpu.matmul %112, %97, %cst_41 {dimension_numbers = #tpu.dot_dimension_numbers<[1], [0], [0], [1], [0, 0, 1, 1], [], []>} : vector<8x8xf32>, vector<8x16xf32>, vector<8x16xf32> -> vector<8x16xf32>
    %c8_42 = arith.constant 8 : index
    %c16_43 = arith.constant 16 : index
    %114 = vector.load %arg21[%c8_42, %c16_43] : memref<16x32xf32, #tpu.memory_space<vmem>>, vector<8x16xf32>
    tpu.vector_store %arg21[%c8_42, %c16_43], %113 {strides = array<i32>} : memref<16x32xf32, #tpu.memory_space<vmem>>, vector<8x16xf32>,
    %c0_44 = arith.constant 0 : index
    %c0_45 = arith.constant 0 : index
    %115 = vector.load %arg21[%c0_44, %c0_45] : memref<16x32xf32, #tpu.memory_space<vmem>>, vector<16x32xf32>
    %c0_46 = arith.constant 0 : index
    %c0_47 = arith.constant 0 : index
    %c0_48 = arith.constant 0 : index
    %116 = vector.load %arg6[%c0_46, %c0_47, %c0_48] : memref<2x32x32xf32, #tpu.memory_space<vmem>>, vector<1x32x32xf32>
    %117 = vector.shape_cast %116 : vector<1x32x32xf32> to vector<32x32xf32>
    %cst_49 = arith.constant dense<0.000000e+00> : vector<16x32xf32>
    %118 = tpu.matmul %115, %117, %cst_49 {dimension_numbers = #tpu.dot_dimension_numbers<[1], [0], [0], [1], [0, 0, 1, 1], [], []>} : vector<16x32xf32>, vector<32x32xf32>, vector<16x32xf32> -> vector<16x32xf32>
    %c0_50 = arith.constant 0 : index
    %c0_51 = arith.constant 0 : index
    %c0_52 = arith.constant 0 : index
    %119 = vector.load %arg7[%c0_50, %c0_51, %c0_52] : memref<2x1x32xf32, #tpu.memory_space<vmem>>, vector<1x1x32xf32>
    %120 = vector.shape_cast %119 : vector<1x1x32xf32> to vector<1x32xf32>
    %121 = vector.broadcast %120 : vector<1x32xf32> to vector<16x32xf32>
    %122 = arith.addf %118, %121 : vector<16x32xf32>
    %123 = arith.addf %122, %24 : vector<16x32xf32>
    %c0_53 = arith.constant 0 : index
    %c0_54 = arith.constant 0 : index
    %c0_55 = arith.constant 0 : index
    %124 = vector.load %arg8[%c0_53, %c0_54, %c0_55] : memref<2x1x32xf32, #tpu.memory_space<vmem>>, vector<1x1x32xf32>
    %125 = vector.shape_cast %124 : vector<1x1x32xf32> to vector<1x32xf32>
    %c0_56 = arith.constant 0 : index
    %c0_57 = arith.constant 0 : index
    %c0_58 = arith.constant 0 : index
    %126 = vector.load %arg9[%c0_56, %c0_57, %c0_58] : memref<2x1x32xf32, #tpu.memory_space<vmem>>, vector<1x1x32xf32>
    %127 = vector.shape_cast %126 : vector<1x1x32xf32> to vector<1x32xf32>
    %cst_59 = arith.constant dense<0.000000e+00> : vector<16xf32>
    %128 = vector.multi_reduction <add>, %123, %cst_59 [1] : vector<16x32xf32> to vector<16xf32>
    %129 = vector.shape_cast %128 : vector<16xf32> to vector<16x1xf32>
    %cst_60 = arith.constant 3.200000e+01 : f32
    %130 = vector.broadcast %cst_60 : f32 to vector<16x1xf32>
    %131 = arith.divf %129, %130 : vector<16x1xf32>
    %132 = vector.broadcast %131 : vector<16x1xf32> to vector<16x32xf32>
    %133 = arith.subf %123, %132 : vector<16x32xf32>
    %134 = arith.mulf %133, %133 : vector<16x32xf32>
    %cst_61 = arith.constant dense<0.000000e+00> : vector<16xf32>
    %135 = vector.multi_reduction <add>, %134, %cst_61 [1] : vector<16x32xf32> to vector<16xf32>
    %136 = vector.shape_cast %135 : vector<16xf32> to vector<16x1xf32>
    %cst_62 = arith.constant 3.200000e+01 : f32
    %137 = vector.broadcast %cst_62 : f32 to vector<16x1xf32>
    %138 = arith.divf %136, %137 : vector<16x1xf32>
    %139 = vector.broadcast %131 : vector<16x1xf32> to vector<16x32xf32>
    %140 = arith.subf %123, %139 : vector<16x32xf32>
    %cst_63 = arith.constant 9.99999996E-13 : f32
    %141 = vector.broadcast %cst_63 : f32 to vector<16x1xf32>
    %142 = arith.addf %138, %141 : vector<16x1xf32>
    %143 = math.rsqrt %142 : vector<16x1xf32>
    %144 = vector.broadcast %143 : vector<16x1xf32> to vector<16x32xf32>
    %145 = arith.mulf %140, %144 : vector<16x32xf32>
    %146 = vector.broadcast %125 : vector<1x32xf32> to vector<16x32xf32>
    %147 = arith.mulf %145, %146 : vector<16x32xf32>
    %148 = vector.broadcast %127 : vector<1x32xf32> to vector<16x32xf32>
    %149 = arith.addf %147, %148 : vector<16x32xf32>
    %c0_64 = arith.constant 0 : index
    %c0_65 = arith.constant 0 : index
    %c0_66 = arith.constant 0 : index
    %150 = vector.load %arg10[%c0_64, %c0_65, %c0_66] : memref<2x32x64xf32, #tpu.memory_space<vmem>>, vector<1x32x64xf32>
    %151 = vector.shape_cast %150 : vector<1x32x64xf32> to vector<32x64xf32>
    %cst_67 = arith.constant dense<0.000000e+00> : vector<16x64xf32>
    %152 = tpu.matmul %149, %151, %cst_67 {dimension_numbers = #tpu.dot_dimension_numbers<[1], [0], [0], [1], [0, 0, 1, 1], [], []>} : vector<16x32xf32>, vector<32x64xf32>, vector<16x64xf32> -> vector<16x64xf32>
    %c0_68 = arith.constant 0 : index
    %c0_69 = arith.constant 0 : index
    %c0_70 = arith.constant 0 : index
    %153 = vector.load %arg11[%c0_68, %c0_69, %c0_70] : memref<2x1x64xf32, #tpu.memory_space<vmem>>, vector<1x1x64xf32>
    %154 = vector.shape_cast %153 : vector<1x1x64xf32> to vector<1x64xf32>
    %155 = vector.broadcast %154 : vector<1x64xf32> to vector<16x64xf32>
    %156 = arith.addf %152, %155 : vector<16x64xf32>
    %cst_71 = arith.constant 5.000000e-01 : f32
    %157 = vector.broadcast %cst_71 : f32 to vector<16x64xf32>
    %158 = arith.mulf %157, %156 : vector<16x64xf32>
    %cst_72 = arith.constant 4.471500e-02 : f32
    %159 = vector.broadcast %cst_72 : f32 to vector<16x64xf32>
    %160 = arith.mulf %159, %156 : vector<16x64xf32>
    %161 = arith.mulf %160, %156 : vector<16x64xf32>
    %162 = arith.mulf %161, %156 : vector<16x64xf32>
    %163 = arith.addf %156, %162 : vector<16x64xf32>
    %cst_73 = arith.constant 0.797884583 : f32
    %164 = vector.broadcast %cst_73 : f32 to vector<16x64xf32>
    %165 = arith.mulf %164, %163 : vector<16x64xf32>
    %166 = math.tanh %165 : vector<16x64xf32>
    %cst_74 = arith.constant 1.000000e+00 : f32
    %167 = vector.broadcast %cst_74 : f32 to vector<16x64xf32>
    %168 = arith.addf %167, %166 : vector<16x64xf32>
    %169 = arith.mulf %158, %168 : vector<16x64xf32>
    %c0_75 = arith.constant 0 : index
    %c0_76 = arith.constant 0 : index
    %c0_77 = arith.constant 0 : index
    %170 = vector.load %arg12[%c0_75, %c0_76, %c0_77] : memref<2x64x32xf32, #tpu.memory_space<vmem>>, vector<1x64x32xf32>
    %171 = vector.shape_cast %170 : vector<1x64x32xf32> to vector<64x32xf32>
    %cst_78 = arith.constant dense<0.000000e+00> : vector<16x32xf32>
    %172 = tpu.matmul %169, %171, %cst_78 {dimension_numbers = #tpu.dot_dimension_numbers<[1], [0], [0], [1], [0, 0, 1, 1], [], []>} : vector<16x64xf32>, vector<64x32xf32>, vector<16x32xf32> -> vector<16x32xf32>
    %c0_79 = arith.constant 0 : index
    %c0_80 = arith.constant 0 : index
    %c0_81 = arith.constant 0 : index
    %173 = vector.load %arg13[%c0_79, %c0_80, %c0_81] : memref<2x1x32xf32, #tpu.memory_space<vmem>>, vector<1x1x32xf32>
    %174 = vector.shape_cast %173 : vector<1x1x32xf32> to vector<1x32xf32>
    %175 = vector.broadcast %174 : vector<1x32xf32> to vector<16x32xf32>
    %176 = arith.addf %172, %175 : vector<16x32xf32>
    %177 = arith.addf %176, %149 : vector<16x32xf32>
    %c0_82 = arith.constant 0 : index
    %c0_83 = arith.constant 0 : index
    %c0_84 = arith.constant 0 : index
    %178 = vector.load %arg14[%c0_82, %c0_83, %c0_84] : memref<2x1x32xf32, #tpu.memory_space<vmem>>, vector<1x1x32xf32>
    %179 = vector.shape_cast %178 : vector<1x1x32xf32> to vector<1x32xf32>
    %c0_85 = arith.constant 0 : index
    %c0_86 = arith.constant 0 : index
    %c0_87 = arith.constant 0 : index
    %180 = vector.load %arg15[%c0_85, %c0_86, %c0_87] : memref<2x1x32xf32, #tpu.memory_space<vmem>>, vector<1x1x32xf32>
    %181 = vector.shape_cast %180 : vector<1x1x32xf32> to vector<1x32xf32>
    %cst_88 = arith.constant dense<0.000000e+00> : vector<16xf32>
    %182 = vector.multi_reduction <add>, %177, %cst_88 [1] : vector<16x32xf32> to vector<16xf32>
    %183 = vector.shape_cast %182 : vector<16xf32> to vector<16x1xf32>
    %cst_89 = arith.constant 3.200000e+01 : f32
    %184 = vector.broadcast %cst_89 : f32 to vector<16x1xf32>
    %185 = arith.divf %183, %184 : vector<16x1xf32>
    %186 = vector.broadcast %185 : vector<16x1xf32> to vector<16x32xf32>
    %187 = arith.subf %177, %186 : vector<16x32xf32>
    %188 = arith.mulf %187, %187 : vector<16x32xf32>
    %cst_90 = arith.constant dense<0.000000e+00> : vector<16xf32>
    %189 = vector.multi_reduction <add>, %188, %cst_90 [1] : vector<16x32xf32> to vector<16xf32>
    %190 = vector.shape_cast %189 : vector<16xf32> to vector<16x1xf32>
    %cst_91 = arith.constant 3.200000e+01 : f32
    %191 = vector.broadcast %cst_91 : f32 to vector<16x1xf32>
    %192 = arith.divf %190, %191 : vector<16x1xf32>
    %193 = vector.broadcast %185 : vector<16x1xf32> to vector<16x32xf32>
    %194 = arith.subf %177, %193 : vector<16x32xf32>
    %cst_92 = arith.constant 9.99999996E-13 : f32
    %195 = vector.broadcast %cst_92 : f32 to vector<16x1xf32>
    %196 = arith.addf %192, %195 : vector<16x1xf32>
    %197 = math.rsqrt %196 : vector<16x1xf32>
    %198 = vector.broadcast %197 : vector<16x1xf32> to vector<16x32xf32>
    %199 = arith.mulf %194, %198 : vector<16x32xf32>
    %200 = vector.broadcast %179 : vector<1x32xf32> to vector<16x32xf32>
    %201 = arith.mulf %199, %200 : vector<16x32xf32>
    %202 = vector.broadcast %181 : vector<1x32xf32> to vector<16x32xf32>
    %203 = arith.addf %201, %202 : vector<16x32xf32>
    %c1 = arith.constant 1 : index
    %c0_93 = arith.constant 0 : index
    %c0_94 = arith.constant 0 : index
    %204 = vector.load %arg4[%c1, %c0_93, %c0_94] : memref<2x32x96xf32, #tpu.memory_space<vmem>>, vector<1x32x96xf32>
    %205 = vector.shape_cast %204 : vector<1x32x96xf32> to vector<32x96xf32>
    %cst_95 = arith.constant dense<0.000000e+00> : vector<16x96xf32>
    %206 = tpu.matmul %203, %205, %cst_95 {dimension_numbers = #tpu.dot_dimension_numbers<[1], [0], [0], [1], [0, 0, 1, 1], [], []>} : vector<16x32xf32>, vector<32x96xf32>, vector<16x96xf32> -> vector<16x96xf32>
    %c1_96 = arith.constant 1 : index
    %c0_97 = arith.constant 0 : index
    %c0_98 = arith.constant 0 : index
    %207 = vector.load %arg5[%c1_96, %c0_97, %c0_98] : memref<2x1x96xf32, #tpu.memory_space<vmem>>, vector<1x1x96xf32>
    %208 = vector.shape_cast %207 : vector<1x1x96xf32> to vector<1x96xf32>
    %209 = vector.broadcast %208 : vector<1x96xf32> to vector<16x96xf32>
    %210 = arith.addf %206, %209 : vector<16x96xf32>
    %211 = vector.extract_strided_slice %25 {offsets = [0, 0], sizes = [1, 8], strides = [1, 1]} : vector<2x8xf32> to vector<1x8xf32>
    %212 = vector.extract_strided_slice %210 {offsets = [0, 0], sizes = [8, 16], strides = [1, 1]} : vector<16x96xf32> to vector<8x16xf32>
    %213 = vector.extract_strided_slice %210 {offsets = [0, 32], sizes = [8, 16], strides = [1, 1]} : vector<16x96xf32> to vector<8x16xf32>
    %214 = vector.extract_strided_slice %210 {offsets = [0, 64], sizes = [8, 16], strides = [1, 1]} : vector<16x96xf32> to vector<8x16xf32>
    %cst_99 = arith.constant dense<0.000000e+00> : vector<8x8xf32>
    %215 = tpu.matmul %212, %213, %cst_99 {dimension_numbers = #tpu.dot_dimension_numbers<[1], [1], [0], [0], [0, 0, 1, 0], [], []>} : vector<8x16xf32>, vector<8x16xf32>, vector<8x8xf32> -> vector<8x8xf32>
    %cst_100 = arith.constant 2.500000e-01 : f32
    %216 = vector.broadcast %cst_100 : f32 to vector<8x8xf32>
    %217 = arith.mulf %215, %216 : vector<8x8xf32>
    %218 = vector.broadcast %211 : vector<1x8xf32> to vector<8x8xf32>
    %219 = arith.addf %217, %218 : vector<8x8xf32>
    %cst_101 = arith.constant dense<0xFF800000> : vector<8xf32>
    %220 = vector.multi_reduction <maximumf>, %219, %cst_101 [1] : vector<8x8xf32> to vector<8xf32>
    %221 = vector.shape_cast %220 : vector<8xf32> to vector<8x1xf32>
    %222 = vector.broadcast %221 : vector<8x1xf32> to vector<8x8xf32>
    %223 = arith.subf %219, %222 : vector<8x8xf32>
    %224 = math.exp %223 : vector<8x8xf32>
    %cst_102 = arith.constant dense<0.000000e+00> : vector<8xf32>
    %225 = vector.multi_reduction <add>, %224, %cst_102 [1] : vector<8x8xf32> to vector<8xf32>
    %226 = vector.shape_cast %225 : vector<8xf32> to vector<8x1xf32>
    %227 = tpu.reciprocal %226 {approx = true} : vector<8x1xf32> -> vector<8x1xf32>
    %228 = vector.broadcast %227 : vector<8x1xf32> to vector<8x8xf32>
    %229 = arith.mulf %224, %228 : vector<8x8xf32>
    %cst_103 = arith.constant dense<0.000000e+00> : vector<8x16xf32>
    %230 = tpu.matmul %229, %214, %cst_103 {dimension_numbers = #tpu.dot_dimension_numbers<[1], [0], [0], [1], [0, 0, 1, 1], [], []>} : vector<8x8xf32>, vector<8x16xf32>, vector<8x16xf32> -> vector<8x16xf32>
    %c0_104 = arith.constant 0 : index
    %c0_105 = arith.constant 0 : index
    %231 = vector.load %arg21[%c0_104, %c0_105] : memref<16x32xf32, #tpu.memory_space<vmem>>, vector<8x16xf32>
    tpu.vector_store %arg21[%c0_104, %c0_105], %230 {strides = array<i32>} : memref<16x32xf32, #tpu.memory_space<vmem>>, vector<8x16xf32>,
    %232 = vector.extract_strided_slice %210 {offsets = [0, 16], sizes = [8, 16], strides = [1, 1]} : vector<16x96xf32> to vector<8x16xf32>
    %233 = vector.extract_strided_slice %210 {offsets = [0, 48], sizes = [8, 16], strides = [1, 1]} : vector<16x96xf32> to vector<8x16xf32>
    %234 = vector.extract_strided_slice %210 {offsets = [0, 80], sizes = [8, 16], strides = [1, 1]} : vector<16x96xf32> to vector<8x16xf32>
    %cst_106 = arith.constant dense<0.000000e+00> : vector<8x8xf32>
    %235 = tpu.matmul %232, %233, %cst_106 {dimension_numbers = #tpu.dot_dimension_numbers<[1], [1], [0], [0], [0, 0, 1, 0], [], []>} : vector<8x16xf32>, vector<8x16xf32>, vector<8x8xf32> -> vector<8x8xf32>
    %cst_107 = arith.constant 2.500000e-01 : f32
    %236 = vector.broadcast %cst_107 : f32 to vector<8x8xf32>
    %237 = arith.mulf %235, %236 : vector<8x8xf32>
    %238 = vector.broadcast %211 : vector<1x8xf32> to vector<8x8xf32>
    %239 = arith.addf %237, %238 : vector<8x8xf32>
    %cst_108 = arith.constant dense<0xFF800000> : vector<8xf32>
    %240 = vector.multi_reduction <maximumf>, %239, %cst_108 [1] : vector<8x8xf32> to vector<8xf32>
    %241 = vector.shape_cast %240 : vector<8xf32> to vector<8x1xf32>
    %242 = vector.broadcast %241 : vector<8x1xf32> to vector<8x8xf32>
    %243 = arith.subf %239, %242 : vector<8x8xf32>
    %244 = math.exp %243 : vector<8x8xf32>
    %cst_109 = arith.constant dense<0.000000e+00> : vector<8xf32>
    %245 = vector.multi_reduction <add>, %244, %cst_109 [1] : vector<8x8xf32> to vector<8xf32>
    %246 = vector.shape_cast %245 : vector<8xf32> to vector<8x1xf32>
    %247 = tpu.reciprocal %246 {approx = true} : vector<8x1xf32> -> vector<8x1xf32>
    %248 = vector.broadcast %247 : vector<8x1xf32> to vector<8x8xf32>
    %249 = arith.mulf %244, %248 : vector<8x8xf32>
    %cst_110 = arith.constant dense<0.000000e+00> : vector<8x16xf32>
    %250 = tpu.matmul %249, %234, %cst_110 {dimension_numbers = #tpu.dot_dimension_numbers<[1], [0], [0], [1], [0, 0, 1, 1], [], []>} : vector<8x8xf32>, vector<8x16xf32>, vector<8x16xf32> -> vector<8x16xf32>
    %c0_111 = arith.constant 0 : index
    %c16_112 = arith.constant 16 : index
    %251 = vector.load %arg21[%c0_111, %c16_112] : memref<16x32xf32, #tpu.memory_space<vmem>>, vector<8x16xf32>
    tpu.vector_store %arg21[%c0_111, %c16_112], %250 {strides = array<i32>} : memref<16x32xf32, #tpu.memory_space<vmem>>, vector<8x16xf32>,
    %252 = vector.extract_strided_slice %25 {offsets = [1, 0], sizes = [1, 8], strides = [1, 1]} : vector<2x8xf32> to vector<1x8xf32>
    %253 = vector.extract_strided_slice %210 {offsets = [8, 0], sizes = [8, 16], strides = [1, 1]} : vector<16x96xf32> to vector<8x16xf32>
    %254 = vector.extract_strided_slice %210 {offsets = [8, 32], sizes = [8, 16], strides = [1, 1]} : vector<16x96xf32> to vector<8x16xf32>
    %255 = vector.extract_strided_slice %210 {offsets = [8, 64], sizes = [8, 16], strides = [1, 1]} : vector<16x96xf32> to vector<8x16xf32>
    %cst_113 = arith.constant dense<0.000000e+00> : vector<8x8xf32>
    %256 = tpu.matmul %253, %254, %cst_113 {dimension_numbers = #tpu.dot_dimension_numbers<[1], [1], [0], [0], [0, 0, 1, 0], [], []>} : vector<8x16xf32>, vector<8x16xf32>, vector<8x8xf32> -> vector<8x8xf32>
    %cst_114 = arith.constant 2.500000e-01 : f32
    %257 = vector.broadcast %cst_114 : f32 to vector<8x8xf32>
    %258 = arith.mulf %256, %257 : vector<8x8xf32>
    %259 = vector.broadcast %252 : vector<1x8xf32> to vector<8x8xf32>
    %260 = arith.addf %258, %259 : vector<8x8xf32>
    %cst_115 = arith.constant dense<0xFF800000> : vector<8xf32>
    %261 = vector.multi_reduction <maximumf>, %260, %cst_115 [1] : vector<8x8xf32> to vector<8xf32>
    %262 = vector.shape_cast %261 : vector<8xf32> to vector<8x1xf32>
    %263 = vector.broadcast %262 : vector<8x1xf32> to vector<8x8xf32>
    %264 = arith.subf %260, %263 : vector<8x8xf32>
    %265 = math.exp %264 : vector<8x8xf32>
    %cst_116 = arith.constant dense<0.000000e+00> : vector<8xf32>
    %266 = vector.multi_reduction <add>, %265, %cst_116 [1] : vector<8x8xf32> to vector<8xf32>
    %267 = vector.shape_cast %266 : vector<8xf32> to vector<8x1xf32>
    %268 = tpu.reciprocal %267 {approx = true} : vector<8x1xf32> -> vector<8x1xf32>
    %269 = vector.broadcast %268 : vector<8x1xf32> to vector<8x8xf32>
    %270 = arith.mulf %265, %269 : vector<8x8xf32>
    %cst_117 = arith.constant dense<0.000000e+00> : vector<8x16xf32>
    %271 = tpu.matmul %270, %255, %cst_117 {dimension_numbers = #tpu.dot_dimension_numbers<[1], [0], [0], [1], [0, 0, 1, 1], [], []>} : vector<8x8xf32>, vector<8x16xf32>, vector<8x16xf32> -> vector<8x16xf32>
    %c8_118 = arith.constant 8 : index
    %c0_119 = arith.constant 0 : index
    %272 = vector.load %arg21[%c8_118, %c0_119] : memref<16x32xf32, #tpu.memory_space<vmem>>, vector<8x16xf32>
    tpu.vector_store %arg21[%c8_118, %c0_119], %271 {strides = array<i32>} : memref<16x32xf32, #tpu.memory_space<vmem>>, vector<8x16xf32>,
    %273 = vector.extract_strided_slice %210 {offsets = [8, 16], sizes = [8, 16], strides = [1, 1]} : vector<16x96xf32> to vector<8x16xf32>
    %274 = vector.extract_strided_slice %210 {offsets = [8, 48], sizes = [8, 16], strides = [1, 1]} : vector<16x96xf32> to vector<8x16xf32>
    %275 = vector.extract_strided_slice %210 {offsets = [8, 80], sizes = [8, 16], strides = [1, 1]} : vector<16x96xf32> to vector<8x16xf32>
    %cst_120 = arith.constant dense<0.000000e+00> : vector<8x8xf32>
    %276 = tpu.matmul %273, %274, %cst_120 {dimension_numbers = #tpu.dot_dimension_numbers<[1], [1], [0], [0], [0, 0, 1, 0], [], []>} : vector<8x16xf32>, vector<8x16xf32>, vector<8x8xf32> -> vector<8x8xf32>
    %cst_121 = arith.constant 2.500000e-01 : f32
    %277 = vector.broadcast %cst_121 : f32 to vector<8x8xf32>
    %278 = arith.mulf %276, %277 : vector<8x8xf32>
    %279 = vector.broadcast %252 : vector<1x8xf32> to vector<8x8xf32>
    %280 = arith.addf %278, %279 : vector<8x8xf32>
    %cst_122 = arith.constant dense<0xFF800000> : vector<8xf32>
    %281 = vector.multi_reduction <maximumf>, %280, %cst_122 [1] : vector<8x8xf32> to vector<8xf32>
    %282 = vector.shape_cast %281 : vector<8xf32> to vector<8x1xf32>
    %283 = vector.broadcast %282 : vector<8x1xf32> to vector<8x8xf32>
    %284 = arith.subf %280, %283 : vector<8x8xf32>
    %285 = math.exp %284 : vector<8x8xf32>
    %cst_123 = arith.constant dense<0.000000e+00> : vector<8xf32>
    %286 = vector.multi_reduction <add>, %285, %cst_123 [1] : vector<8x8xf32> to vector<8xf32>
    %287 = vector.shape_cast %286 : vector<8xf32> to vector<8x1xf32>
    %288 = tpu.reciprocal %287 {approx = true} : vector<8x1xf32> -> vector<8x1xf32>
    %289 = vector.broadcast %288 : vector<8x1xf32> to vector<8x8xf32>
    %290 = arith.mulf %285, %289 : vector<8x8xf32>
    %cst_124 = arith.constant dense<0.000000e+00> : vector<8x16xf32>
    %291 = tpu.matmul %290, %275, %cst_124 {dimension_numbers = #tpu.dot_dimension_numbers<[1], [0], [0], [1], [0, 0, 1, 1], [], []>} : vector<8x8xf32>, vector<8x16xf32>, vector<8x16xf32> -> vector<8x16xf32>
    %c8_125 = arith.constant 8 : index
    %c16_126 = arith.constant 16 : index
    %292 = vector.load %arg21[%c8_125, %c16_126] : memref<16x32xf32, #tpu.memory_space<vmem>>, vector<8x16xf32>
    tpu.vector_store %arg21[%c8_125, %c16_126], %291 {strides = array<i32>} : memref<16x32xf32, #tpu.memory_space<vmem>>, vector<8x16xf32>,
    %c0_127 = arith.constant 0 : index
    %c0_128 = arith.constant 0 : index
    %293 = vector.load %arg21[%c0_127, %c0_128] : memref<16x32xf32, #tpu.memory_space<vmem>>, vector<16x32xf32>
    %c1_129 = arith.constant 1 : index
    %c0_130 = arith.constant 0 : index
    %c0_131 = arith.constant 0 : index
    %294 = vector.load %arg6[%c1_129, %c0_130, %c0_131] : memref<2x32x32xf32, #tpu.memory_space<vmem>>, vector<1x32x32xf32>
    %295 = vector.shape_cast %294 : vector<1x32x32xf32> to vector<32x32xf32>
    %cst_132 = arith.constant dense<0.000000e+00> : vector<16x32xf32>
    %296 = tpu.matmul %293, %295, %cst_132 {dimension_numbers = #tpu.dot_dimension_numbers<[1], [0], [0], [1], [0, 0, 1, 1], [], []>} : vector<16x32xf32>, vector<32x32xf32>, vector<16x32xf32> -> vector<16x32xf32>
    %c1_133 = arith.constant 1 : index
    %c0_134 = arith.constant 0 : index
    %c0_135 = arith.constant 0 : index
    %297 = vector.load %arg7[%c1_133, %c0_134, %c0_135] : memref<2x1x32xf32, #tpu.memory_space<vmem>>, vector<1x1x32xf32>
    %298 = vector.shape_cast %297 : vector<1x1x32xf32> to vector<1x32xf32>
    %299 = vector.broadcast %298 : vector<1x32xf32> to vector<16x32xf32>
    %300 = arith.addf %296, %299 : vector<16x32xf32>
    %301 = arith.addf %300, %203 : vector<16x32xf32>
    %c1_136 = arith.constant 1 : index
    %c0_137 = arith.constant 0 : index
    %c0_138 = arith.constant 0 : index
    %302 = vector.load %arg8[%c1_136, %c0_137, %c0_138] : memref<2x1x32xf32, #tpu.memory_space<vmem>>, vector<1x1x32xf32>
    %303 = vector.shape_cast %302 : vector<1x1x32xf32> to vector<1x32xf32>
    %c1_139 = arith.constant 1 : index
    %c0_140 = arith.constant 0 : index
    %c0_141 = arith.constant 0 : index
    %304 = vector.load %arg9[%c1_139, %c0_140, %c0_141] : memref<2x1x32xf32, #tpu.memory_space<vmem>>, vector<1x1x32xf32>
    %305 = vector.shape_cast %304 : vector<1x1x32xf32> to vector<1x32xf32>
    %cst_142 = arith.constant dense<0.000000e+00> : vector<16xf32>
    %306 = vector.multi_reduction <add>, %301, %cst_142 [1] : vector<16x32xf32> to vector<16xf32>
    %307 = vector.shape_cast %306 : vector<16xf32> to vector<16x1xf32>
    %cst_143 = arith.constant 3.200000e+01 : f32
    %308 = vector.broadcast %cst_143 : f32 to vector<16x1xf32>
    %309 = arith.divf %307, %308 : vector<16x1xf32>
    %310 = vector.broadcast %309 : vector<16x1xf32> to vector<16x32xf32>
    %311 = arith.subf %301, %310 : vector<16x32xf32>
    %312 = arith.mulf %311, %311 : vector<16x32xf32>
    %cst_144 = arith.constant dense<0.000000e+00> : vector<16xf32>
    %313 = vector.multi_reduction <add>, %312, %cst_144 [1] : vector<16x32xf32> to vector<16xf32>
    %314 = vector.shape_cast %313 : vector<16xf32> to vector<16x1xf32>
    %cst_145 = arith.constant 3.200000e+01 : f32
    %315 = vector.broadcast %cst_145 : f32 to vector<16x1xf32>
    %316 = arith.divf %314, %315 : vector<16x1xf32>
    %317 = vector.broadcast %309 : vector<16x1xf32> to vector<16x32xf32>
    %318 = arith.subf %301, %317 : vector<16x32xf32>
    %cst_146 = arith.constant 9.99999996E-13 : f32
    %319 = vector.broadcast %cst_146 : f32 to vector<16x1xf32>
    %320 = arith.addf %316, %319 : vector<16x1xf32>
    %321 = math.rsqrt %320 : vector<16x1xf32>
    %322 = vector.broadcast %321 : vector<16x1xf32> to vector<16x32xf32>
    %323 = arith.mulf %318, %322 : vector<16x32xf32>
    %324 = vector.broadcast %303 : vector<1x32xf32> to vector<16x32xf32>
    %325 = arith.mulf %323, %324 : vector<16x32xf32>
    %326 = vector.broadcast %305 : vector<1x32xf32> to vector<16x32xf32>
    %327 = arith.addf %325, %326 : vector<16x32xf32>
    %c1_147 = arith.constant 1 : index
    %c0_148 = arith.constant 0 : index
    %c0_149 = arith.constant 0 : index
    %328 = vector.load %arg10[%c1_147, %c0_148, %c0_149] : memref<2x32x64xf32, #tpu.memory_space<vmem>>, vector<1x32x64xf32>
    %329 = vector.shape_cast %328 : vector<1x32x64xf32> to vector<32x64xf32>
    %cst_150 = arith.constant dense<0.000000e+00> : vector<16x64xf32>
    %330 = tpu.matmul %327, %329, %cst_150 {dimension_numbers = #tpu.dot_dimension_numbers<[1], [0], [0], [1], [0, 0, 1, 1], [], []>} : vector<16x32xf32>, vector<32x64xf32>, vector<16x64xf32> -> vector<16x64xf32>
    %c1_151 = arith.constant 1 : index
    %c0_152 = arith.constant 0 : index
    %c0_153 = arith.constant 0 : index
    %331 = vector.load %arg11[%c1_151, %c0_152, %c0_153] : memref<2x1x64xf32, #tpu.memory_space<vmem>>, vector<1x1x64xf32>
    %332 = vector.shape_cast %331 : vector<1x1x64xf32> to vector<1x64xf32>
    %333 = vector.broadcast %332 : vector<1x64xf32> to vector<16x64xf32>
    %334 = arith.addf %330, %333 : vector<16x64xf32>
    %cst_154 = arith.constant 5.000000e-01 : f32
    %335 = vector.broadcast %cst_154 : f32 to vector<16x64xf32>
    %336 = arith.mulf %335, %334 : vector<16x64xf32>
    %cst_155 = arith.constant 4.471500e-02 : f32
    %337 = vector.broadcast %cst_155 : f32 to vector<16x64xf32>
    %338 = arith.mulf %337, %334 : vector<16x64xf32>
    %339 = arith.mulf %338, %334 : vector<16x64xf32>
    %340 = arith.mulf %339, %334 : vector<16x64xf32>
    %341 = arith.addf %334, %340 : vector<16x64xf32>
    %cst_156 = arith.constant 0.797884583 : f32
    %342 = vector.broadcast %cst_156 : f32 to vector<16x64xf32>
    %343 = arith.mulf %342, %341 : vector<16x64xf32>
    %344 = math.tanh %343 : vector<16x64xf32>
    %cst_157 = arith.constant 1.000000e+00 : f32
    %345 = vector.broadcast %cst_157 : f32 to vector<16x64xf32>
    %346 = arith.addf %345, %344 : vector<16x64xf32>
    %347 = arith.mulf %336, %346 : vector<16x64xf32>
    %c1_158 = arith.constant 1 : index
    %c0_159 = arith.constant 0 : index
    %c0_160 = arith.constant 0 : index
    %348 = vector.load %arg12[%c1_158, %c0_159, %c0_160] : memref<2x64x32xf32, #tpu.memory_space<vmem>>, vector<1x64x32xf32>
    %349 = vector.shape_cast %348 : vector<1x64x32xf32> to vector<64x32xf32>
    %cst_161 = arith.constant dense<0.000000e+00> : vector<16x32xf32>
    %350 = tpu.matmul %347, %349, %cst_161 {dimension_numbers = #tpu.dot_dimension_numbers<[1], [0], [0], [1], [0, 0, 1, 1], [], []>} : vector<16x64xf32>, vector<64x32xf32>, vector<16x32xf32> -> vector<16x32xf32>
    %c1_162 = arith.constant 1 : index
    %c0_163 = arith.constant 0 : index
    %c0_164 = arith.constant 0 : index
    %351 = vector.load %arg13[%c1_162, %c0_163, %c0_164] : memref<2x1x32xf32, #tpu.memory_space<vmem>>, vector<1x1x32xf32>
    %352 = vector.shape_cast %351 : vector<1x1x32xf32> to vector<1x32xf32>
    %353 = vector.broadcast %352 : vector<1x32xf32> to vector<16x32xf32>
    %354 = arith.addf %350, %353 : vector<16x32xf32>
    %355 = arith.addf %354, %327 : vector<16x32xf32>
    %c1_165 = arith.constant 1 : index
    %c0_166 = arith.constant 0 : index
    %c0_167 = arith.constant 0 : index
    %356 = vector.load %arg14[%c1_165, %c0_166, %c0_167] : memref<2x1x32xf32, #tpu.memory_space<vmem>>, vector<1x1x32xf32>
    %357 = vector.shape_cast %356 : vector<1x1x32xf32> to vector<1x32xf32>
    %c1_168 = arith.constant 1 : index
    %c0_169 = arith.constant 0 : index
    %c0_170 = arith.constant 0 : index
    %358 = vector.load %arg15[%c1_168, %c0_169, %c0_170] : memref<2x1x32xf32, #tpu.memory_space<vmem>>, vector<1x1x32xf32>
    %359 = vector.shape_cast %358 : vector<1x1x32xf32> to vector<1x32xf32>
    %cst_171 = arith.constant dense<0.000000e+00> : vector<16xf32>
    %360 = vector.multi_reduction <add>, %355, %cst_171 [1] : vector<16x32xf32> to vector<16xf32>
    %361 = vector.shape_cast %360 : vector<16xf32> to vector<16x1xf32>
    %cst_172 = arith.constant 3.200000e+01 : f32
    %362 = vector.broadcast %cst_172 : f32 to vector<16x1xf32>
    %363 = arith.divf %361, %362 : vector<16x1xf32>
    %364 = vector.broadcast %363 : vector<16x1xf32> to vector<16x32xf32>
    %365 = arith.subf %355, %364 : vector<16x32xf32>
    %366 = arith.mulf %365, %365 : vector<16x32xf32>
    %cst_173 = arith.constant dense<0.000000e+00> : vector<16xf32>
    %367 = vector.multi_reduction <add>, %366, %cst_173 [1] : vector<16x32xf32> to vector<16xf32>
    %368 = vector.shape_cast %367 : vector<16xf32> to vector<16x1xf32>
    %cst_174 = arith.constant 3.200000e+01 : f32
    %369 = vector.broadcast %cst_174 : f32 to vector<16x1xf32>
    %370 = arith.divf %368, %369 : vector<16x1xf32>
    %371 = vector.broadcast %363 : vector<16x1xf32> to vector<16x32xf32>
    %372 = arith.subf %355, %371 : vector<16x32xf32>
    %cst_175 = arith.constant 9.99999996E-13 : f32
    %373 = vector.broadcast %cst_175 : f32 to vector<16x1xf32>
    %374 = arith.addf %370, %373 : vector<16x1xf32>
    %375 = math.rsqrt %374 : vector<16x1xf32>
    %376 = vector.broadcast %375 : vector<16x1xf32> to vector<16x32xf32>
    %377 = arith.mulf %372, %376 : vector<16x32xf32>
    %378 = vector.broadcast %357 : vector<1x32xf32> to vector<16x32xf32>
    %379 = arith.mulf %377, %378 : vector<16x32xf32>
    %380 = vector.broadcast %359 : vector<1x32xf32> to vector<16x32xf32>
    %381 = arith.addf %379, %380 : vector<16x32xf32>
    %382 = vector.extract_strided_slice %381 {offsets = [0, 0], sizes = [1, 32], strides = [1, 1]} : vector<16x32xf32> to vector<1x32xf32>
    %c0_176 = arith.constant 0 : index
    %c0_177 = arith.constant 0 : index
    %383 = vector.load %arg22[%c0_176, %c0_177] : memref<2x32xf32, #tpu.memory_space<vmem>>, vector<1x32xf32>
    tpu.vector_store %arg22[%c0_176, %c0_177], %382 {strides = array<i32>} : memref<2x32xf32, #tpu.memory_space<vmem>>, vector<1x32xf32>,
    %384 = vector.extract_strided_slice %381 {offsets = [8, 0], sizes = [1, 32], strides = [1, 1]} : vector<16x32xf32> to vector<1x32xf32>
    %c1_178 = arith.constant 1 : index
    %c0_179 = arith.constant 0 : index
    %385 = vector.load %arg22[%c1_178, %c0_179] : memref<2x32xf32, #tpu.memory_space<vmem>>, vector<1x32xf32>
    tpu.vector_store %arg22[%c1_178, %c0_179], %384 {strides = array<i32>} : memref<2x32xf32, #tpu.memory_space<vmem>>, vector<1x32xf32>,
    %c0_180 = arith.constant 0 : index
    %c0_181 = arith.constant 0 : index
    %386 = vector.load %arg22[%c0_180, %c0_181] : memref<2x32xf32, #tpu.memory_space<vmem>>, vector<2x32xf32>
    %c0_182 = arith.constant 0 : index
    %c0_183 = arith.constant 0 : index
    %387 = vector.load %arg16[%c0_182, %c0_183] : memref<32x32xf32, #tpu.memory_space<vmem>>, vector<32x32xf32>
    %cst_184 = arith.constant dense<0.000000e+00> : vector<2x32xf32>
    %388 = tpu.matmul %386, %387, %cst_184 {dimension_numbers = #tpu.dot_dimension_numbers<[1], [0], [0], [1], [0, 0, 1, 1], [], []>} : vector<2x32xf32>, vector<32x32xf32>, vector<2x32xf32> -> vector<2x32xf32>
    %c0_185 = arith.constant 0 : index
    %c0_186 = arith.constant 0 : index
    %389 = vector.load %arg17[%c0_185, %c0_186] : memref<1x32xf32, #tpu.memory_space<vmem>>, vector<1x32xf32>
    %390 = vector.broadcast %389 : vector<1x32xf32> to vector<2x32xf32>
    %391 = arith.addf %388, %390 : vector<2x32xf32>
    %392 = math.tanh %391 : vector<2x32xf32>
    %c0_187 = arith.constant 0 : index
    %c0_188 = arith.constant 0 : index
    %393 = vector.load %arg18[%c0_187, %c0_188] : memref<32x16xf32, #tpu.memory_space<vmem>>, vector<32x16xf32>
    %cst_189 = arith.constant dense<0.000000e+00> : vector<2x16xf32>
    %394 = tpu.matmul %392, %393, %cst_189 {dimension_numbers = #tpu.dot_dimension_numbers<[1], [0], [0], [1], [0, 0, 1, 1], [], []>} : vector<2x32xf32>, vector<32x16xf32>, vector<2x16xf32> -> vector<2x16xf32>
    %c0_190 = arith.constant 0 : index
    %c0_191 = arith.constant 0 : index
    %395 = vector.load %arg19[%c0_190, %c0_191] : memref<1x16xf32, #tpu.memory_space<vmem>>, vector<1x16xf32>
    %396 = vector.broadcast %395 : vector<1x16xf32> to vector<2x16xf32>
    %397 = arith.addf %394, %396 : vector<2x16xf32>
    %cst_192 = arith.constant 0.000000e+00 : f32
    %398 = vector.broadcast %cst_192 : f32 to vector<2x16xf32>
    %399 = arith.maximumf %397, %398 : vector<2x16xf32>
    %c0_193 = arith.constant 0 : index
    %c0_194 = arith.constant 0 : index
    %400 = vector.load %arg20[%c0_193, %c0_194] : memref<2x16xf32, #tpu.memory_space<vmem>>, vector<2x16xf32>
    tpu.vector_store %arg20[%c0_193, %c0_194], %399 {strides = array<i32>} : memref<2x16xf32, #tpu.memory_space<vmem>>, vector<2x16xf32>,
    return
  }
}

</mosaic_0001>

<llo_original>
// kernel: tpu_custom_call.1
$region0: #{tpu_custom_call.1}
  #allocation0 [shape = 'u32[]', space=smem, size = 0x4, offset = 0x4, fixed_abs, tag = 'smem constant byte address 0x4 - core index']
  #allocation1 [shape = 'u32[144,128]{1,0:T(1,128)}', space=vmem, size = 0x12000, scoped, tag = 'internal scratch']
  #allocation2 [shape = 'f32[16,32]{1,0:T(8,128)}', space=vmem, size = 0x2000, scoped, tag = 'scratch operand']
  #allocation3 [shape = 'f32[2,32]{1,0:T(2,128)}', space=vmem, size = 0x400, scoped, tag = 'scratch operand']
  %s0 = inlined_call_operand.hbm [shape: f32[16,32], index: 0, kind: input, shape index: {}]
  %s1 = inlined_call_operand.hbm [shape: f32[2,8], index: 1, kind: input, shape index: {}]
  %s2 = inlined_call_operand.hbm [shape: f32[1,32], index: 2, kind: input, shape index: {}]
  %s3 = inlined_call_operand.hbm [shape: f32[1,32], index: 3, kind: input, shape index: {}]
  %s4 = inlined_call_operand.vmem [shape: f32[2,32,96], index: 4, kind: input, shape index: {}]
  %s5 = inlined_call_operand.hbm [shape: f32[2,1,96], index: 5, kind: input, shape index: {}]
  %s6 = inlined_call_operand.vmem [shape: f32[2,32,32], index: 6, kind: input, shape index: {}]
  %s7 = inlined_call_operand.hbm [shape: f32[2,1,32], index: 7, kind: input, shape index: {}]
  %s8 = inlined_call_operand.hbm [shape: f32[2,1,32], index: 8, kind: input, shape index: {}]
  %s9 = inlined_call_operand.hbm [shape: f32[2,1,32], index: 9, kind: input, shape index: {}]
  %s10 = inlined_call_operand.vmem [shape: f32[2,32,64], index: 10, kind: input, shape index: {}]
  %s11 = inlined_call_operand.hbm [shape: f32[2,1,64], index: 11, kind: input, shape index: {}]
  %s12 = inlined_call_operand.vmem [shape: f32[2,64,32], index: 12, kind: input, shape index: {}]
  %s13 = inlined_call_operand.hbm [shape: f32[2,1,32], index: 13, kind: input, shape index: {}]
  %s14 = inlined_call_operand.hbm [shape: f32[2,1,32], index: 14, kind: input, shape index: {}]
  %s15 = inlined_call_operand.hbm [shape: f32[2,1,32], index: 15, kind: input, shape index: {}]
  %s16 = inlined_call_operand.vmem [shape: f32[32,32], index: 16, kind: input, shape index: {}]
  %s17 = inlined_call_operand.hbm [shape: f32[1,32], index: 17, kind: input, shape index: {}]
  %s18 = inlined_call_operand.vmem [shape: f32[32,16], index: 18, kind: input, shape index: {}]
  %s19 = inlined_call_operand.vmem [shape: f32[1,16], index: 19, kind: input, shape index: {}]
  %s20 = inlined_call_operand.hbm [shape: f32[2,16], index: 20, kind: output, shape index: {}]
  %s21 = sld [smem:[#allocation0]]
  $region142: #{tpu_custom_call.1} parent=0
    _
  %s23 = ssub.s32 1, %s21
  %s24 = scalar_select 0, %s23, %s21
  $region1: #{tpu_custom_call.1} parent=0
    #allocation4 [shape = 'u8[8192]{0}', space=vmem, size = 0x2000, scoped, tag = 'input window, operand 0, single buffered']
    #allocation5 [shape = 's32[1]{0}', space=sflag, size = 0x4, scoped, tag = 'scoped memory for tpu_custom_call.1']
    #allocation6 [shape = 's32[1]{0}', space=sflag, size = 0x4, scoped, tag = 'scoped memory for tpu_custom_call.1']
    #allocation7 [shape = 'u8[1024]{0}', space=vmem, size = 0x400, scoped, tag = 'input window, operand 1, single buffered']
    #allocation8 [shape = 's32[1]{0}', space=sflag, size = 0x4, scoped, tag = 'scoped memory for tpu_custom_call.1']
    #allocation9 [shape = 'u8[512]{0}', space=vmem, size = 0x400, scoped, tag = 'input window, operand 2, single buffered']
    #allocation10 [shape = 'u8[512]{0}', space=vmem, size = 0x400, scoped, tag = 'input window, operand 3, single buffered']
    #allocation11 [shape = 's32[1]{0}', space=sflag, size = 0x4, scoped, tag = 'scoped memory for tpu_custom_call.1']
    #allocation12 [shape = 'u8[1024]{0}', space=vmem, size = 0x400, scoped, tag = 'input window, operand 5, single buffered']
    #allocation13 [shape = 'u8[1024]{0}', space=vmem, size = 0x400, scoped, tag = 'input window, operand 7, single buffered']
    #allocation14 [shape = 's32[1]{0}', space=sflag, size = 0x4, scoped, tag = 'scoped memory for tpu_custom_call.1']
    #allocation15 [shape = 'u8[1024]{0}', space=vmem, size = 0x400, scoped, tag = 'input window, operand 8, single buffered']
    #allocation16 [shape = 'u8[1024]{0}', space=vmem, size = 0x400, scoped, tag = 'input window, operand 9, single buffered']
    #allocation17 [shape = 's32[1]{0}', space=sflag, size = 0x4, scoped, tag = 'scoped memory for tpu_custom_call.1']
    #allocation18 [shape = 'u8[1024]{0}', space=vmem, size = 0x400, scoped, tag = 'input window, operand 11, single buffered']
    #allocation19 [shape = 'u8[1024]{0}', space=vmem, size = 0x400, scoped, tag = 'input window, operand 13, single buffered']
    #allocation20 [shape = 's32[1]{0}', space=sflag, size = 0x4, scoped, tag = 'scoped memory for tpu_custom_call.1']
    #allocation21 [shape = 'u8[1024]{0}', space=vmem, size = 0x400, scoped, tag = 'input window, operand 14, single buffered']
    #allocation22 [shape = 'u8[1024]{0}', space=vmem, size = 0x400, scoped, tag = 'input window, operand 15, single buffered']
    #allocation23 [shape = 's32[1]{0}', space=sflag, size = 0x4, scoped, tag = 'scoped memory for tpu_custom_call.1']
    #allocation24 [shape = 'u8[512]{0}', space=vmem, size = 0x400, scoped, tag = 'input window, operand 17, single buffered']
    #allocation25 [shape = 'u8[1024]{0}', space=vmem, size = 0x400, scoped, tag = 'output window, operand 0, single buffered']
    %25 = vsyncpa [#allocation5], 0
    %26 = vsyncpa [#allocation8], 0
    %27 = vsyncpa [#allocation11], 0
    %28 = vsyncpa [#allocation14], 0
    %29 = vsyncpa [#allocation17], 0
    %30 = vsyncpa [#allocation20], 0
    %31 = vsyncpa [#allocation23], 0
    %32 = vsyncpa [#allocation6], 0
    // Predicated region
    $region2: #{tpu_custom_call.1} parent=1 // pred_check
      _
    $region3: #{tpu_custom_call.1} parent=1 // pred_check_branch
      %34 = sbr.rel (0) target = $region5
    $region4: #{tpu_custom_call.1} parent=1 // pred_region
      %s36 = ssub.s32 256, 256
      %37 = vsyncadd [#allocation5], %s36
      %s38 = sshll.u32 [#allocation4], 4
      %s39 = int_to_ptr.vmem [resolvable:$true] %s38
      %44 = dma.hbm_to_vmem [thread:$0]  %s0, 256, %s39, [#allocation5], 128, 128, 8
    $region5: #{tpu_custom_call.1} parent=1 // pred_fallthru
      _
    // Predicated region
    $region6: #{tpu_custom_call.1} parent=1 // pred_check
      _
    $region7: #{tpu_custom_call.1} parent=1 // pred_check_branch
      %46 = sbr.rel (0) target = $region9
    $region8: #{tpu_custom_call.1} parent=1 // pred_region
      %s48 = ssub.s32 32, 32
      %49 = vsyncadd [#allocation8], %s48
      %s51 = sshll.u32 [#allocation7], 4
      %s52 = int_to_ptr.vmem [resolvable:$true] %s51
      %54 = dma.hbm_to_vmem [thread:$0]  %s1, 32, %s52, [#allocation8]
    $region9: #{tpu_custom_call.1} parent=1 // pred_fallthru
      _
    // Predicated region
    $region10: #{tpu_custom_call.1} parent=1 // pred_check
      _
    $region11: #{tpu_custom_call.1} parent=1 // pred_check_branch
      %56 = sbr.rel (0) target = $region13
    $region12: #{tpu_custom_call.1} parent=1 // pred_region
      %s58 = ssub.s32 16, 16
      %59 = vsyncadd [#allocation8], %s58
      %s61 = sshll.u32 [#allocation9], 4
      %s62 = int_to_ptr.vmem [resolvable:$true] %s61
      %64 = dma.hbm_to_vmem [thread:$0]  %s2, 16, %s62, [#allocation8]
    $region13: #{tpu_custom_call.1} parent=1 // pred_fallthru
      _
    // Predicated region
    $region14: #{tpu_custom_call.1} parent=1 // pred_check
      _
    $region15: #{tpu_custom_call.1} parent=1 // pred_check_branch
      %66 = sbr.rel (0) target = $region17
    $region16: #{tpu_custom_call.1} parent=1 // pred_region
      %s68 = ssub.s32 16, 16
      %69 = vsyncadd [#allocation11], %s68
      %s71 = sshll.u32 [#allocation10], 4
      %s72 = int_to_ptr.vmem [resolvable:$true] %s71
      %74 = dma.hbm_to_vmem [thread:$0]  %s3, 16, %s72, [#allocation11]
    $region17: #{tpu_custom_call.1} parent=1 // pred_fallthru
      _
    // Predicated region
    $region18: #{tpu_custom_call.1} parent=1 // pred_check
      _
    $region19: #{tpu_custom_call.1} parent=1 // pred_check_branch
      %76 = sbr.rel (0) target = $region21
    $region20: #{tpu_custom_call.1} parent=1 // pred_region
      _
    $region21: #{tpu_custom_call.1} parent=1 // pred_fallthru
      _
    // Predicated region
    $region22: #{tpu_custom_call.1} parent=1 // pred_check
      _
    $region23: #{tpu_custom_call.1} parent=1 // pred_check_branch
      %78 = sbr.rel (0) target = $region25
    $region24: #{tpu_custom_call.1} parent=1 // pred_region
      %s80 = ssub.s32 32, 32
      %81 = vsyncadd [#allocation11], %s80
      %s82 = sshll.u32 [#allocation12], 4
      %s83 = int_to_ptr.vmem [resolvable:$true] %s82
      %88 = dma.hbm_to_vmem [thread:$0]  %s5, 32, %s83, [#allocation11], 16, 16, 1
    $region25: #{tpu_custom_call.1} parent=1 // pred_fallthru
      _
    // Predicated region
    $region26: #{tpu_custom_call.1} parent=1 // pred_check
      _
    $region27: #{tpu_custom_call.1} parent=1 // pred_check_branch
      %90 = sbr.rel (0) target = $region29
    $region28: #{tpu_custom_call.1} parent=1 // pred_region
      _
    $region29: #{tpu_custom_call.1} parent=1 // pred_fallthru
      _
    // Predicated region
    $region30: #{tpu_custom_call.1} parent=1 // pred_check
      _
    $region31: #{tpu_custom_call.1} parent=1 // pred_check_branch
      %92 = sbr.rel (0) target = $region33
    $region32: #{tpu_custom_call.1} parent=1 // pred_region
      %s94 = ssub.s32 32, 32
      %95 = vsyncadd [#allocation14], %s94
      %s96 = sshll.u32 [#allocation13], 4
      %s97 = int_to_ptr.vmem [resolvable:$true] %s96
      %102 = dma.hbm_to_vmem [thread:$0]  %s7, 32, %s97, [#allocation14], 16, 16, 1
    $region33: #{tpu_custom_call.1} parent=1 // pred_fallthru
      _
    // Predicated region
    $region34: #{tpu_custom_call.1} parent=1 // pred_check
      _
    $region35: #{tpu_custom_call.1} parent=1 // pred_check_branch
      %104 = sbr.rel (0) target = $region37
    $region36: #{tpu_custom_call.1} parent=1 // pred_region
      %s106 = ssub.s32 32, 32
      %107 = vsyncadd [#allocation14], %s106
      %s108 = sshll.u32 [#allocation15], 4
      %s109 = int_to_ptr.vmem [resolvable:$true] %s108
      %114 = dma.hbm_to_vmem [thread:$0]  %s8, 32, %s109, [#allocation14], 16, 16, 1
    $region37: #{tpu_custom_call.1} parent=1 // pred_fallthru
      _
    // Predicated region
    $region38: #{tpu_custom_call.1} parent=1 // pred_check
      _
    $region39: #{tpu_custom_call.1} parent=1 // pred_check_branch
      %116 = sbr.rel (0) target = $region41
    $region40: #{tpu_custom_call.1} parent=1 // pred_region
      %s118 = ssub.s32 32, 32
      %119 = vsyncadd [#allocation17], %s118
      %s120 = sshll.u32 [#allocation16], 4
      %s121 = int_to_ptr.vmem [resolvable:$true] %s120
      %126 = dma.hbm_to_vmem [thread:$0]  %s9, 32, %s121, [#allocation17], 16, 16, 1
    $region41: #{tpu_custom_call.1} parent=1 // pred_fallthru
      _
    // Predicated region
    $region42: #{tpu_custom_call.1} parent=1 // pred_check
      _
    $region43: #{tpu_custom_call.1} parent=1 // pred_check_branch
      %128 = sbr.rel (0) target = $region45
    $region44: #{tpu_custom_call.1} parent=1 // pred_region
      _
    $region45: #{tpu_custom_call.1} parent=1 // pred_fallthru
      _
    // Predicated region
    $region46: #{tpu_custom_call.1} parent=1 // pred_check
      _
    $region47: #{tpu_custom_call.1} parent=1 // pred_check_branch
      %130 = sbr.rel (0) target = $region49
    $region48: #{tpu_custom_call.1} parent=1 // pred_region
      %s132 = ssub.s32 32, 32
      %133 = vsyncadd [#allocation17], %s132
      %s134 = sshll.u32 [#allocation18], 4
      %s135 = int_to_ptr.vmem [resolvable:$true] %s134
      %140 = dma.hbm_to_vmem [thread:$0]  %s11, 32, %s135, [#allocation17], 16, 16, 1
    $region49: #{tpu_custom_call.1} parent=1 // pred_fallthru
      _
    // Predicated region
    $region50: #{tpu_custom_call.1} parent=1 // pred_check
      _
    $region51: #{tpu_custom_call.1} parent=1 // pred_check_branch
      %142 = sbr.rel (0) target = $region53
    $region52: #{tpu_custom_call.1} parent=1 // pred_region
      _
    $region53: #{tpu_custom_call.1} parent=1 // pred_fallthru
      _
    // Predicated region
    $region54: #{tpu_custom_call.1} parent=1 // pred_check
      _
    $region55: #{tpu_custom_call.1} parent=1 // pred_check_branch
      %144 = sbr.rel (0) target = $region57
    $region56: #{tpu_custom_call.1} parent=1 // pred_region
      %s146 = ssub.s32 32, 32
      %147 = vsyncadd [#allocation20], %s146
      %s148 = sshll.u32 [#allocation19], 4
      %s149 = int_to_ptr.vmem [resolvable:$true] %s148
      %154 = dma.hbm_to_vmem [thread:$0]  %s13, 32, %s149, [#allocation20], 16, 16, 1
    $region57: #{tpu_custom_call.1} parent=1 // pred_fallthru
      _
    // Predicated region
    $region58: #{tpu_custom_call.1} parent=1 // pred_check
      _
    $region59: #{tpu_custom_call.1} parent=1 // pred_check_branch
      %156 = sbr.rel (0) target = $region61
    $region60: #{tpu_custom_call.1} parent=1 // pred_region
      %s158 = ssub.s32 32, 32
      %159 = vsyncadd [#allocation20], %s158
      %s160 = sshll.u32 [#allocation21], 4
      %s161 = int_to_ptr.vmem [resolvable:$true] %s160
      %166 = dma.hbm_to_vmem [thread:$0]  %s14, 32, %s161, [#allocation20], 16, 16, 1
    $region61: #{tpu_custom_call.1} parent=1 // pred_fallthru
      _
    // Predicated region
    $region62: #{tpu_custom_call.1} parent=1 // pred_check
      _
    $region63: #{tpu_custom_call.1} parent=1 // pred_check_branch
      %168 = sbr.rel (0) target = $region65
    $region64: #{tpu_custom_call.1} parent=1 // pred_region
      %s170 = ssub.s32 32, 32
      %171 = vsyncadd [#allocation23], %s170
      %s172 = sshll.u32 [#allocation22], 4
      %s173 = int_to_ptr.vmem [resolvable:$true] %s172
      %178 = dma.hbm_to_vmem [thread:$0]  %s15, 32, %s173, [#allocation23], 16, 16, 1
    $region65: #{tpu_custom_call.1} parent=1 // pred_fallthru
      _
    // Predicated region
    $region66: #{tpu_custom_call.1} parent=1 // pred_check
      _
    $region67: #{tpu_custom_call.1} parent=1 // pred_check_branch
      %180 = sbr.rel (0) target = $region69
    $region68: #{tpu_custom_call.1} parent=1 // pred_region
      _
    $region69: #{tpu_custom_call.1} parent=1 // pred_fallthru
      _
    // Predicated region
    $region70: #{tpu_custom_call.1} parent=1 // pred_check
      _
    $region71: #{tpu_custom_call.1} parent=1 // pred_check_branch
      %182 = sbr.rel (0) target = $region73
    $region72: #{tpu_custom_call.1} parent=1 // pred_region
      %s184 = ssub.s32 16, 16
      %185 = vsyncadd [#allocation23], %s184
      %s187 = sshll.u32 [#allocation24], 4
      %s188 = int_to_ptr.vmem [resolvable:$true] %s187
      %190 = dma.hbm_to_vmem [thread:$0]  %s17, 16, %s188, [#allocation23]
    $region73: #{tpu_custom_call.1} parent=1 // pred_fallthru
      _
    // Predicated region
    $region74: #{tpu_custom_call.1} parent=1 // pred_check
      _
    $region75: #{tpu_custom_call.1} parent=1 // pred_check_branch
      %192 = sbr.rel (0) target = $region77
    $region76: #{tpu_custom_call.1} parent=1 // pred_region
      _
    $region77: #{tpu_custom_call.1} parent=1 // pred_fallthru
      _
    // Predicated region
    $region78: #{tpu_custom_call.1} parent=1 // pred_check
      _
    $region79: #{tpu_custom_call.1} parent=1 // pred_check_branch
      %194 = sbr.rel (0) target = $region81
    $region80: #{tpu_custom_call.1} parent=1 // pred_region
      _
    $region81: #{tpu_custom_call.1} parent=1 // pred_fallthru
      _
    // Predicated region
    $region82: #{tpu_custom_call.1} parent=1 // pred_check
      _
    $region83: #{tpu_custom_call.1} parent=1 // pred_check_branch
      %196 = sbr.rel (0) target = $region85
    $region84: #{tpu_custom_call.1} parent=1 // pred_region
      %197 = dma.done [#allocation5], 256
    $region85: #{tpu_custom_call.1} parent=1 // pred_fallthru
      _
    // Predicated region
    $region86: #{tpu_custom_call.1} parent=1 // pred_check
      _
    $region87: #{tpu_custom_call.1} parent=1 // pred_check_branch
      %199 = sbr.rel (0) target = $region89
    $region88: #{tpu_custom_call.1} parent=1 // pred_region
      %200 = dma.done [#allocation8], 32
    $region89: #{tpu_custom_call.1} parent=1 // pred_fallthru
      _
    // Predicated region
    $region90: #{tpu_custom_call.1} parent=1 // pred_check
      _
    $region91: #{tpu_custom_call.1} parent=1 // pred_check_branch
      %202 = sbr.rel (0) target = $region93
    $region92: #{tpu_custom_call.1} parent=1 // pred_region
      %203 = dma.done [#allocation8], 16
    $region93: #{tpu_custom_call.1} parent=1 // pred_fallthru
      _
    // Predicated region
    $region94: #{tpu_custom_call.1} parent=1 // pred_check
      _
    $region95: #{tpu_custom_call.1} parent=1 // pred_check_branch
      %205 = sbr.rel (0) target = $region97
    $region96: #{tpu_custom_call.1} parent=1 // pred_region
      %206 = dma.done [#allocation11], 16
    $region97: #{tpu_custom_call.1} parent=1 // pred_fallthru
      _
    // Predicated region
    $region98: #{tpu_custom_call.1} parent=1 // pred_check
      _
    $region99: #{tpu_custom_call.1} parent=1 // pred_check_branch
      %208 = sbr.rel (0) target = $region101
    $region100: #{tpu_custom_call.1} parent=1 // pred_region
      %209 = dma.done [#allocation11], 32
    $region101: #{tpu_custom_call.1} parent=1 // pred_fallthru
      _
    // Predicated region
    $region102: #{tpu_custom_call.1} parent=1 // pred_check
      _
    $region103: #{tpu_custom_call.1} parent=1 // pred_check_branch
      %211 = sbr.rel (0) target = $region105
    $region104: #{tpu_custom_call.1} parent=1 // pred_region
      %212 = dma.done [#allocation14], 32
    $region105: #{tpu_custom_call.1} parent=1 // pred_fallthru
      _
    // Predicated region
    $region106: #{tpu_custom_call.1} parent=1 // pred_check
      _
    $region107: #{tpu_custom_call.1} parent=1 // pred_check_branch
      %214 = sbr.rel (0) target = $region109
    $region108: #{tpu_custom_call.1} parent=1 // pred_region
      %215 = dma.done [#allocation14], 32
    $region109: #{tpu_custom_call.1} parent=1 // pred_fallthru
      _
    // Predicated region
    $region110: #{tpu_custom_call.1} parent=1 // pred_check
      _
    $region111: #{tpu_custom_call.1} parent=1 // pred_check_branch
      %217 = sbr.rel (0) target = $region113
    $region112: #{tpu_custom_call.1} parent=1 // pred_region
      %218 = dma.done [#allocation17], 32
    $region113: #{tpu_custom_call.1} parent=1 // pred_fallthru
      _
    // Predicated region
    $region114: #{tpu_custom_call.1} parent=1 // pred_check
      _
    $region115: #{tpu_custom_call.1} parent=1 // pred_check_branch
      %220 = sbr.rel (0) target = $region117
    $region116: #{tpu_custom_call.1} parent=1 // pred_region
      %221 = dma.done [#allocation17], 32
    $region117: #{tpu_custom_call.1} parent=1 // pred_fallthru
      _
    // Predicated region
    $region118: #{tpu_custom_call.1} parent=1 // pred_check
      _
    $region119: #{tpu_custom_call.1} parent=1 // pred_check_branch
      %223 = sbr.rel (0) target = $region121
    $region120: #{tpu_custom_call.1} parent=1 // pred_region
      %224 = dma.done [#allocation20], 32
    $region121: #{tpu_custom_call.1} parent=1 // pred_fallthru
      _
    // Predicated region
    $region122: #{tpu_custom_call.1} parent=1 // pred_check
      _
    $region123: #{tpu_custom_call.1} parent=1 // pred_check_branch
      %226 = sbr.rel (0) target = $region125
    $region124: #{tpu_custom_call.1} parent=1 // pred_region
      %227 = dma.done [#allocation20], 32
    $region125: #{tpu_custom_call.1} parent=1 // pred_fallthru
      _
    // Predicated region
    $region126: #{tpu_custom_call.1} parent=1 // pred_check
      _
    $region127: #{tpu_custom_call.1} parent=1 // pred_check_branch
      %229 = sbr.rel (0) target = $region129
    $region128: #{tpu_custom_call.1} parent=1 // pred_region
      %230 = dma.done [#allocation23], 32
    $region129: #{tpu_custom_call.1} parent=1 // pred_fallthru
      _
    // Predicated region
    $region130: #{tpu_custom_call.1} parent=1 // pred_check
      _
    $region131: #{tpu_custom_call.1} parent=1 // pred_check_branch
      %232 = sbr.rel (0) target = $region133
    $region132: #{tpu_custom_call.1} parent=1 // pred_region
      %233 = dma.done [#allocation23], 16
    $region133: #{tpu_custom_call.1} parent=1 // pred_fallthru
      _
    %v234 = vld [vmem:[#allocation4] sm:$0xff]
    %v235 = vld [vmem:[#allocation4 + $0x8] sm:$0xff]
    %v236 = vld [vmem:[#allocation9] sm:$0x1]
    %v237 = vld [vmem:[#allocation10] sm:$0x1]
    %vm238 = vcmask 261120
    %v239 = vsel %vm238, %v234, 0.0
    %240 = vadd.xlane.f32.xlu0 %v239
    %v241 = vpop.xlane.xlu0 %240
    %v242 = vsel %vm238, %v235, 0.0
    %243 = vadd.xlane.f32.xlu0 %v242
    %v244 = vpop.xlane.xlu0 %243
    %v245 = vrcp.pop 32.0
    %v246 = vmul.f32 %v241, %v245
    %v247 = vmul.f32 %v244, %v245
    %v248 = vsub.f32 %v234, %v246
    %v249 = vsub.f32 %v235, %v247
    %v250 = vmul.f32 %v248, %v248
    %v251 = vmul.f32 %v249, %v249
    %v252 = vsel %vm238, %v250, 0.0
    %253 = vadd.xlane.f32.xlu0 %v252
    %v254 = vpop.xlane.xlu0 %253
    %v255 = vsel %vm238, %v251, 0.0
    %256 = vadd.xlane.f32.xlu0 %v255
    %v257 = vpop.xlane.xlu0 %256
    %v258 = vmul.f32 %v254, %v245
    %v259 = vmul.f32 %v257, %v245
    %v260 = vadd.f32 %v258, 1e-12
    %v261 = vadd.f32 %v259, 1e-12
    %v262 = vrsqrt.pop %v260
    %v263 = vrsqrt.pop %v261
    %v264 = vmul.f32 %v248, %v262
    %v265 = vmul.f32 %v249, %v263
    %v267 = vlaneseq
    %v268 = vshrl.u32 %v267, 7
    %v269 = vsub.s32 0, %v268
    %v270 = vrot.slane %v236, %v269
    %v272 = vmul.f32 %v264, %v270
    %v273 = vmul.f32 %v265, %v270
    %v275 = vlaneseq
    %v276 = vshrl.u32 %v275, 7
    %v277 = vsub.s32 0, %v276
    %v278 = vrot.slane %v237, %v277
    %v280 = vadd.f32 %v272, %v278
    %v281 = vadd.f32 %v273, %v278
    %v282 = vld [vmem:[#allocation7] sm:$0x3]
    %v283 = vld [vmem:[%s4] sm:$0xff]
    %v284 = vld [vmem:[%s4 + $0x8] sm:$0xff]
    %v285 = vld [vmem:[%s4 + $0x10] sm:$0xff]
    %v286 = vld [vmem:[%s4 + $0x18] sm:$0xff]
    %v287 = vld [vmem:[#allocation12] sm:$0x1]
    %v289 = vlaneseq
    %v290 = vshrl.u32 %v289, 7
    %v291 = vsub.s32 0, %v290
    %v292 = vrot.slane %v287, %v291
    %v295 = vsel %vm238, %v280, 0
    %v298 = vsel %vm238, %v281, 0
    %300 = vmatprep.subr.mxu0 0.0
    %301 = vmatpush1.msra.mxu0 %v283
    %302 = vmatprep.subr.mxu0 0.0
    %303 = vmatpush1.msra.mxu0 %v284
    %304 = vmatprep.subr.mxu0 0.0
    %305 = vmatpush1.msra.mxu0 %v285
    %306 = vmatprep.subr.mxu0 0.0
    %307 = vmatpush1.msra.mxu0 %v286
    %308 = vmatprep.subr.mxu0 0.0
    %309 = vmatpush1.msra.mxu0 0.0
    %310 = vmatprep.subr.mxu0 0.0
    %311 = vmatpush1.msra.mxu0 0.0
    %312 = vmatprep.subr.mxu0 0.0
    %313 = vmatpush1.msra.mxu0 0.0
    %314 = vmatprep.subr.mxu0 0.0
    %315 = vmatpush1.msra.mxu0 0.0
    %316 = vmatprep.subr.mxu0 0.0
    %317 = vmatpush1.msra.mxu0 0.0
    %318 = vmatprep.subr.mxu0 0.0
    %319 = vmatpush1.msra.mxu0 0.0
    %320 = vmatprep.subr.mxu0 0.0
    %321 = vmatpush1.msra.mxu0 0.0
    %322 = vmatprep.subr.mxu0 0.0
    %323 = vmatpush1.msra.mxu0 0.0
    %324 = vmatprep.subr.mxu0 0.0
    %325 = vmatpush1.msra.mxu0 0.0
    %326 = vmatprep.subr.mxu0 0.0
    %327 = vmatpush1.msra.mxu0 0.0
    %328 = vmatprep.subr.mxu0 0.0
    %329 = vmatpush1.msra.mxu0 0.0
    %330 = vmatprep.subr.mxu0 0.0
    %331 = vmatpush1.msra.mxu0 0.0
    %332 = vmatprep.subr.mxu0 0.0
    %333 = vmatpush1.msra.mxu0 0.0
    %334 = vmatprep.subr.mxu0 0.0
    %335 = vmatpush1.msra.mxu0 0.0
    %336 = vmatprep.subr.mxu0 0.0
    %337 = vmatpush1.msra.mxu0 0.0
    %338 = vmatprep.subr.mxu0 0.0
    %339 = vmatpush1.msra.mxu0 0.0
    %340 = vmatprep.subr.mxu0 0.0
    %341 = vmatpush1.msra.mxu0 0.0
    %342 = vmatprep.subr.mxu0 0.0
    %343 = vmatpush1.msra.mxu0 0.0
    %344 = vmatprep.subr.mxu0 0.0
    %345 = vmatpush1.msra.mxu0 0.0
    %346 = vmatprep.subr.mxu0 0.0
    %347 = vmatpush1.msra.mxu0 0.0
    %348 = vmatprep.subr.mxu0 0.0
    %349 = vmatpush1.msra.mxu0 0.0
    %350 = vmatprep.subr.mxu0 0.0
    %351 = vmatpush1.msra.mxu0 0.0
    %352 = vmatprep.subr.mxu0 0.0
    %353 = vmatpush1.msra.mxu0 0.0
    %354 = vmatprep.subr.mxu0 0.0
    %355 = vmatpush1.msra.mxu0 0.0
    %356 = vmatprep.subr.mxu0 0.0
    %357 = vmatpush1.msra.mxu0 0.0
    %358 = vmatprep.subr.mxu0 0.0
    %359 = vmatpush1.msra.mxu0 0.0
    %360 = vmatprep.subr.mxu0 0.0
    %361 = vmatpush1.msra.mxu0 0.0
    %362 = vmatprep.subr.mxu0 0.0
    %363 = vmatpush1.msra.mxu0 0.0
    %364 = vmatprep.mubr.f32.mxu0 0.0
    %365 = vmatmul.mubr.f32.gmra.mrb[0].mxu0 %v295
    %v366 = vpop.f32.mrb[0].mxu0
    %v367 = vadd.f32 %v292, %v366
    %v368 = vpop.f32.mrb[0].mxu0
    %369 = vmatprep.mubr.f32.mxu0 0.0
    %370 = vmatmul.mubr.f32.gmra.mrb[0].mxu0 %v298
    %v371 = vpop.f32.mrb[0].mxu0
    %v372 = vadd.f32 %v292, %v371
    %v373 = vpop.f32.mrb[0].mxu0
    %374 = vdwg.mxu0
    %376 = vrot.lane.b32.xlu0 %v367, 96
    %v377 = vpop.permute.xlu0 %376
    %vm378 = vcmask 130048
    %v379 = vsel %vm378, %v367, 0
    %v381 = vsel %vm378, %v377, 0
    %383 = vmatprep.subr.mxu0 0.0
    %384 = vmatpush1.xpose.msra.mxu0 %v381
    %385 = vmatprep.subr.mxu0 0.0
    %386 = vmatpush1.xpose.msra.mxu0 0.0
    %387 = vmatprep.subr.mxu0 0.0
    %388 = vmatpush1.xpose.msra.mxu0 0.0
    %389 = vmatprep.subr.mxu0 0.0
    %390 = vmatpush1.xpose.msra.mxu0 0.0
    %391 = vmatprep.subr.mxu0 0.0
    %392 = vmatpush1.xpose.msra.mxu0 0.0
    %393 = vmatprep.subr.mxu0 0.0
    %394 = vmatpush1.xpose.msra.mxu0 0.0
    %395 = vmatprep.subr.mxu0 0.0
    %396 = vmatpush1.xpose.msra.mxu0 0.0
    %397 = vmatprep.subr.mxu0 0.0
    %398 = vmatpush1.xpose.msra.mxu0 0.0
    %399 = vmatprep.subr.mxu0 0.0
    %400 = vmatpush1.xpose.msra.mxu0 0.0
    %401 = vmatprep.subr.mxu0 0.0
    %402 = vmatpush1.xpose.msra.mxu0 0.0
    %403 = vmatprep.subr.mxu0 0.0
    %404 = vmatpush1.xpose.msra.mxu0 0.0
    %405 = vmatprep.subr.mxu0 0.0
    %406 = vmatpush1.xpose.msra.mxu0 0.0
    %407 = vmatprep.subr.mxu0 0.0
    %408 = vmatpush1.xpose.msra.mxu0 0.0
    %409 = vmatprep.subr.mxu0 0.0
    %410 = vmatpush1.xpose.msra.mxu0 0.0
    %411 = vmatprep.subr.mxu0 0.0
    %412 = vmatpush1.xpose.msra.mxu0 0.0
    %413 = vmatprep.subr.mxu0 0.0
    %414 = vmatpush1.xpose.msra.mxu0 0.0
    %415 = vmatprep.subr.mxu0 0.0
    %416 = vmatpush1.xpose.msra.mxu0 0.0
    %417 = vmatprep.subr.mxu0 0.0
    %418 = vmatpush1.xpose.msra.mxu0 0.0
    %419 = vmatprep.subr.mxu0 0.0
    %420 = vmatpush1.xpose.msra.mxu0 0.0
    %421 = vmatprep.subr.mxu0 0.0
    %422 = vmatpush1.xpose.msra.mxu0 0.0
    %423 = vmatprep.subr.mxu0 0.0
    %424 = vmatpush1.xpose.msra.mxu0 0.0
    %425 = vmatprep.subr.mxu0 0.0
    %426 = vmatpush1.xpose.msra.mxu0 0.0
    %427 = vmatprep.subr.mxu0 0.0
    %428 = vmatpush1.xpose.msra.mxu0 0.0
    %429 = vmatprep.subr.mxu0 0.0
    %430 = vmatpush1.xpose.msra.mxu0 0.0
    %431 = vmatprep.subr.mxu0 0.0
    %432 = vmatpush1.xpose.msra.mxu0 0.0
    %433 = vmatprep.subr.mxu0 0.0
    %434 = vmatpush1.xpose.msra.mxu0 0.0
    %435 = vmatprep.subr.mxu0 0.0
    %436 = vmatpush1.xpose.msra.mxu0 0.0
    %437 = vmatprep.subr.mxu0 0.0
    %438 = vmatpush1.xpose.msra.mxu0 0.0
    %439 = vmatprep.subr.mxu0 0.0
    %440 = vmatpush1.xpose.msra.mxu0 0.0
    %441 = vmatprep.subr.mxu0 0.0
    %442 = vmatpush1.xpose.msra.mxu0 0.0
    %443 = vmatprep.subr.mxu0 0.0
    %444 = vmatpush1.xpose.msra.mxu0 0.0
    %445 = vmatprep.subr.mxu0 0.0
    %446 = vmatpush1.xpose.msra.mxu0 0.0
    %447 = vmatprep.mubr.f32.mxu0 0.0
    %448 = vmatmul.mubr.f32.gmra.mrb[0].mxu0 %v379
    %v449 = vpop.f32.mrb[0].mxu0
    %v450 = vadd.f32 0.0, %v449
    %v451 = vpop.f32.mrb[0].mxu0
    %452 = vdwg.mxu0
    %v453 = vmul.f32 %v450, 0.25
    %v454 = vlaneseq
    %v455 = vshrl.u32 %v454, 7
    %v456 = vsub.s32 0, %v455
    %v457 = vrot.slane %v282, %v456
    %v458 = vadd.f32 %v453, %v457
    %vm459 = vcmask 64512
    %v460 = vsel %vm459, %v458, -inf
    %461 = vmax.xlane.f32.xlu0 %v460
    %v462 = vpop.xlane.xlu0 %461
    %v463 = vsub.f32 %v458, %v462
    %v464 = vmul.f32 %v463, 1.442695
    %v465 = vpow.pop %v464
    %v466 = vsel %vm459, %v465, 0.0
    %467 = vadd.xlane.f32.xlu0 %v466
    %v468 = vpop.xlane.xlu0 %467
    %v469 = vrcp.pop %v468
    %v470 = vmul.f32 %v465, %v469
    %471 = vrot.lane.b32.xlu0 %v367, 64
    %v472 = vpop.permute.xlu0 %471
    %v475 = vsel %vm459, %v470, 0
    %477 = vmatprep.subr.mxu0 0.0
    %478 = vmatpush1.msra.mxu0 %v472
    %479 = vmatprep.subr.mxu0 0.0
    %480 = vmatpush1.msra.mxu0 0.0
    %481 = vmatprep.subr.mxu0 0.0
    %482 = vmatpush1.msra.mxu0 0.0
    %483 = vmatprep.subr.mxu0 0.0
    %484 = vmatpush1.msra.mxu0 0.0
    %485 = vmatprep.subr.mxu0 0.0
    %486 = vmatpush1.msra.mxu0 0.0
    %487 = vmatprep.subr.mxu0 0.0
    %488 = vmatpush1.msra.mxu0 0.0
    %489 = vmatprep.subr.mxu0 0.0
    %490 = vmatpush1.msra.mxu0 0.0
    %491 = vmatprep.subr.mxu0 0.0
    %492 = vmatpush1.msra.mxu0 0.0
    %493 = vmatprep.subr.mxu0 0.0
    %494 = vmatpush1.msra.mxu0 0.0
    %495 = vmatprep.subr.mxu0 0.0
    %496 = vmatpush1.msra.mxu0 0.0
    %497 = vmatprep.subr.mxu0 0.0
    %498 = vmatpush1.msra.mxu0 0.0
    %499 = vmatprep.subr.mxu0 0.0
    %500 = vmatpush1.msra.mxu0 0.0
    %501 = vmatprep.subr.mxu0 0.0
    %502 = vmatpush1.msra.mxu0 0.0
    %503 = vmatprep.subr.mxu0 0.0
    %504 = vmatpush1.msra.mxu0 0.0
    %505 = vmatprep.subr.mxu0 0.0
    %506 = vmatpush1.msra.mxu0 0.0
    %507 = vmatprep.subr.mxu0 0.0
    %508 = vmatpush1.msra.mxu0 0.0
    %509 = vmatprep.subr.mxu0 0.0
    %510 = vmatpush1.msra.mxu0 0.0
    %511 = vmatprep.subr.mxu0 0.0
    %512 = vmatpush1.msra.mxu0 0.0
    %513 = vmatprep.subr.mxu0 0.0
    %514 = vmatpush1.msra.mxu0 0.0
    %515 = vmatprep.subr.mxu0 0.0
    %516 = vmatpush1.msra.mxu0 0.0
    %517 = vmatprep.subr.mxu0 0.0
    %518 = vmatpush1.msra.mxu0 0.0
    %519 = vmatprep.subr.mxu0 0.0
    %520 = vmatpush1.msra.mxu0 0.0
    %521 = vmatprep.subr.mxu0 0.0
    %522 = vmatpush1.msra.mxu0 0.0
    %523 = vmatprep.subr.mxu0 0.0
    %524 = vmatpush1.msra.mxu0 0.0
    %525 = vmatprep.subr.mxu0 0.0
    %526 = vmatpush1.msra.mxu0 0.0
    %527 = vmatprep.subr.mxu0 0.0
    %528 = vmatpush1.msra.mxu0 0.0
    %529 = vmatprep.subr.mxu0 0.0
    %530 = vmatpush1.msra.mxu0 0.0
    %531 = vmatprep.subr.mxu0 0.0
    %532 = vmatpush1.msra.mxu0 0.0
    %533 = vmatprep.subr.mxu0 0.0
    %534 = vmatpush1.msra.mxu0 0.0
    %535 = vmatprep.subr.mxu0 0.0
    %536 = vmatpush1.msra.mxu0 0.0
    %537 = vmatprep.subr.mxu0 0.0
    %538 = vmatpush1.msra.mxu0 0.0
    %539 = vmatprep.subr.mxu0 0.0
    %540 = vmatpush1.msra.mxu0 0.0
    %541 = vmatprep.mubr.f32.mxu0 0.0
    %542 = vmatmul.mubr.f32.gmra.mrb[0].mxu0 %v475
    %v543 = vpop.f32.mrb[0].mxu0
    %v544 = vadd.f32 0.0, %v543
    %v545 = vpop.f32.mrb[0].mxu0
    %546 = vdwg.mxu0
    %547 = vst.msk [vmem:[#allocation2] sm:$0xff] %vm378, %v544
    %548 = vrot.lane.b32.xlu0 %v367, 112
    %v549 = vpop.permute.xlu0 %548
    %550 = vrot.lane.b32.xlu0 %v367, 80
    %v551 = vpop.permute.xlu0 %550
    %v552 = vsel %vm378, %v549, 0
    %v554 = vsel %vm378, %v551, 0
    %556 = vmatprep.subr.mxu0 0.0
    %557 = vmatpush1.xpose.msra.mxu0 %v554
    %558 = vmatprep.subr.mxu0 0.0
    %559 = vmatpush1.xpose.msra.mxu0 0.0
    %560 = vmatprep.subr.mxu0 0.0
    %561 = vmatpush1.xpose.msra.mxu0 0.0
    %562 = vmatprep.subr.mxu0 0.0
    %563 = vmatpush1.xpose.msra.mxu0 0.0
    %564 = vmatprep.subr.mxu0 0.0
    %565 = vmatpush1.xpose.msra.mxu0 0.0
    %566 = vmatprep.subr.mxu0 0.0
    %567 = vmatpush1.xpose.msra.mxu0 0.0
    %568 = vmatprep.subr.mxu0 0.0
    %569 = vmatpush1.xpose.msra.mxu0 0.0
    %570 = vmatprep.subr.mxu0 0.0
    %571 = vmatpush1.xpose.msra.mxu0 0.0
    %572 = vmatprep.subr.mxu0 0.0
    %573 = vmatpush1.xpose.msra.mxu0 0.0
    %574 = vmatprep.subr.mxu0 0.0
    %575 = vmatpush1.xpose.msra.mxu0 0.0
    %576 = vmatprep.subr.mxu0 0.0
    %577 = vmatpush1.xpose.msra.mxu0 0.0
    %578 = vmatprep.subr.mxu0 0.0
    %579 = vmatpush1.xpose.msra.mxu0 0.0
    %580 = vmatprep.subr.mxu0 0.0
    %581 = vmatpush1.xpose.msra.mxu0 0.0
    %582 = vmatprep.subr.mxu0 0.0
    %583 = vmatpush1.xpose.msra.mxu0 0.0
    %584 = vmatprep.subr.mxu0 0.0
    %585 = vmatpush1.xpose.msra.mxu0 0.0
    %586 = vmatprep.subr.mxu0 0.0
    %587 = vmatpush1.xpose.msra.mxu0 0.0
    %588 = vmatprep.subr.mxu0 0.0
    %589 = vmatpush1.xpose.msra.mxu0 0.0
    %590 = vmatprep.subr.mxu0 0.0
    %591 = vmatpush1.xpose.msra.mxu0 0.0
    %592 = vmatprep.subr.mxu0 0.0
    %593 = vmatpush1.xpose.msra.mxu0 0.0
    %594 = vmatprep.subr.mxu0 0.0
    %595 = vmatpush1.xpose.msra.mxu0 0.0
    %596 = vmatprep.subr.mxu0 0.0
    %597 = vmatpush1.xpose.msra.mxu0 0.0
    %598 = vmatprep.subr.mxu0 0.0
    %599 = vmatpush1.xpose.msra.mxu0 0.0
    %600 = vmatprep.subr.mxu0 0.0
    %601 = vmatpush1.xpose.msra.mxu0 0.0
    %602 = vmatprep.subr.mxu0 0.0
    %603 = vmatpush1.xpose.msra.mxu0 0.0
    %604 = vmatprep.subr.mxu0 0.0
    %605 = vmatpush1.xpose.msra.mxu0 0.0
    %606 = vmatprep.subr.mxu0 0.0
    %607 = vmatpush1.xpose.msra.mxu0 0.0
    %608 = vmatprep.subr.mxu0 0.0
    %609 = vmatpush1.xpose.msra.mxu0 0.0
    %610 = vmatprep.subr.mxu0 0.0
    %611 = vmatpush1.xpose.msra.mxu0 0.0
    %612 = vmatprep.subr.mxu0 0.0
    %613 = vmatpush1.xpose.msra.mxu0 0.0
    %614 = vmatprep.subr.mxu0 0.0
    %615 = vmatpush1.xpose.msra.mxu0 0.0
    %616 = vmatprep.subr.mxu0 0.0
    %617 = vmatpush1.xpose.msra.mxu0 0.0
    %618 = vmatprep.subr.mxu0 0.0
    %619 = vmatpush1.xpose.msra.mxu0 0.0
    %620 = vmatprep.mubr.f32.mxu0 0.0
    %621 = vmatmul.mubr.f32.gmra.mrb[0].mxu0 %v552
    %v622 = vpop.f32.mrb[0].mxu0
    %v623 = vadd.f32 0.0, %v622
    %v624 = vpop.f32.mrb[0].mxu0
    %625 = vdwg.mxu0
    %v626 = vmul.f32 %v623, 0.25
    %v627 = vadd.f32 %v626, %v457
    %v628 = vsel %vm459, %v627, -inf
    %629 = vmax.xlane.f32.xlu0 %v628
    %v630 = vpop.xlane.xlu0 %629
    %v631 = vsub.f32 %v627, %v630
    %v632 = vmul.f32 %v631, 1.442695
    %v633 = vpow.pop %v632
    %v634 = vsel %vm459, %v633, 0.0
    %635 = vadd.xlane.f32.xlu0 %v634
    %v636 = vpop.xlane.xlu0 %635
    %v637 = vrcp.pop %v636
    %v638 = vmul.f32 %v633, %v637
    %639 = vrot.lane.b32.xlu0 %v367, 48
    %v640 = vpop.permute.xlu0 %639
    %v643 = vsel %vm459, %v638, 0
    %645 = vmatprep.subr.mxu0 0.0
    %646 = vmatpush1.msra.mxu0 %v640
    %647 = vmatprep.subr.mxu0 0.0
    %648 = vmatpush1.msra.mxu0 0.0
    %649 = vmatprep.subr.mxu0 0.0
    %650 = vmatpush1.msra.mxu0 0.0
    %651 = vmatprep.subr.mxu0 0.0
    %652 = vmatpush1.msra.mxu0 0.0
    %653 = vmatprep.subr.mxu0 0.0
    %654 = vmatpush1.msra.mxu0 0.0
    %655 = vmatprep.subr.mxu0 0.0
    %656 = vmatpush1.msra.mxu0 0.0
    %657 = vmatprep.subr.mxu0 0.0
    %658 = vmatpush1.msra.mxu0 0.0
    %659 = vmatprep.subr.mxu0 0.0
    %660 = vmatpush1.msra.mxu0 0.0
    %661 = vmatprep.subr.mxu0 0.0
    %662 = vmatpush1.msra.mxu0 0.0
    %663 = vmatprep.subr.mxu0 0.0
    %664 = vmatpush1.msra.mxu0 0.0
    %665 = vmatprep.subr.mxu0 0.0
    %666 = vmatpush1.msra.mxu0 0.0
    %667 = vmatprep.subr.mxu0 0.0
    %668 = vmatpush1.msra.mxu0 0.0
    %669 = vmatprep.subr.mxu0 0.0
    %670 = vmatpush1.msra.mxu0 0.0
    %671 = vmatprep.subr.mxu0 0.0
    %672 = vmatpush1.msra.mxu0 0.0
    %673 = vmatprep.subr.mxu0 0.0
    %674 = vmatpush1.msra.mxu0 0.0
    %675 = vmatprep.subr.mxu0 0.0
    %676 = vmatpush1.msra.mxu0 0.0
    %677 = vmatprep.subr.mxu0 0.0
    %678 = vmatpush1.msra.mxu0 0.0
    %679 = vmatprep.subr.mxu0 0.0
    %680 = vmatpush1.msra.mxu0 0.0
    %681 = vmatprep.subr.mxu0 0.0
    %682 = vmatpush1.msra.mxu0 0.0
    %683 = vmatprep.subr.mxu0 0.0
    %684 = vmatpush1.msra.mxu0 0.0
    %685 = vmatprep.subr.mxu0 0.0
    %686 = vmatpush1.msra.mxu0 0.0
    %687 = vmatprep.subr.mxu0 0.0
    %688 = vmatpush1.msra.mxu0 0.0
    %689 = vmatprep.subr.mxu0 0.0
    %690 = vmatpush1.msra.mxu0 0.0
    %691 = vmatprep.subr.mxu0 0.0
    %692 = vmatpush1.msra.mxu0 0.0
    %693 = vmatprep.subr.mxu0 0.0
    %694 = vmatpush1.msra.mxu0 0.0
    %695 = vmatprep.subr.mxu0 0.0
    %696 = vmatpush1.msra.mxu0 0.0
    %697 = vmatprep.subr.mxu0 0.0
    %698 = vmatpush1.msra.mxu0 0.0
    %699 = vmatprep.subr.mxu0 0.0
    %700 = vmatpush1.msra.mxu0 0.0
    %701 = vmatprep.subr.mxu0 0.0
    %702 = vmatpush1.msra.mxu0 0.0
    %703 = vmatprep.subr.mxu0 0.0
    %704 = vmatpush1.msra.mxu0 0.0
    %705 = vmatprep.subr.mxu0 0.0
    %706 = vmatpush1.msra.mxu0 0.0
    %707 = vmatprep.subr.mxu0 0.0
    %708 = vmatpush1.msra.mxu0 0.0
    %709 = vmatprep.mubr.f32.mxu0 0.0
    %710 = vmatmul.mubr.f32.gmra.mrb[0].mxu0 %v643
    %v711 = vpop.f32.mrb[0].mxu0
    %v712 = vadd.f32 0.0, %v711
    %v713 = vpop.f32.mrb[0].mxu0
    %714 = vdwg.mxu0
    %716 = vrot.lane.b32.xlu0 %v712, 16
    %v717 = vpop.permute.xlu0 %716
    %vm719 = vcmask 261248
    %720 = vst.msk [vmem:[#allocation2] sm:$0xff] %vm719, %v717
    %722 = vrot.lane.b32.xlu0 %v372, 96
    %v723 = vpop.permute.xlu0 %722
    %v724 = vsel %vm378, %v372, 0
    %v726 = vsel %vm378, %v723, 0
    %728 = vmatprep.subr.mxu0 0.0
    %729 = vmatpush1.xpose.msra.mxu0 %v726
    %730 = vmatprep.subr.mxu0 0.0
    %731 = vmatpush1.xpose.msra.mxu0 0.0
    %732 = vmatprep.subr.mxu0 0.0
    %733 = vmatpush1.xpose.msra.mxu0 0.0
    %734 = vmatprep.subr.mxu0 0.0
    %735 = vmatpush1.xpose.msra.mxu0 0.0
    %736 = vmatprep.subr.mxu0 0.0
    %737 = vmatpush1.xpose.msra.mxu0 0.0
    %738 = vmatprep.subr.mxu0 0.0
    %739 = vmatpush1.xpose.msra.mxu0 0.0
    %740 = vmatprep.subr.mxu0 0.0
    %741 = vmatpush1.xpose.msra.mxu0 0.0
    %742 = vmatprep.subr.mxu0 0.0
    %743 = vmatpush1.xpose.msra.mxu0 0.0
    %744 = vmatprep.subr.mxu0 0.0
    %745 = vmatpush1.xpose.msra.mxu0 0.0
    %746 = vmatprep.subr.mxu0 0.0
    %747 = vmatpush1.xpose.msra.mxu0 0.0
    %748 = vmatprep.subr.mxu0 0.0
    %749 = vmatpush1.xpose.msra.mxu0 0.0
    %750 = vmatprep.subr.mxu0 0.0
    %751 = vmatpush1.xpose.msra.mxu0 0.0
    %752 = vmatprep.subr.mxu0 0.0
    %753 = vmatpush1.xpose.msra.mxu0 0.0
    %754 = vmatprep.subr.mxu0 0.0
    %755 = vmatpush1.xpose.msra.mxu0 0.0
    %756 = vmatprep.subr.mxu0 0.0
    %757 = vmatpush1.xpose.msra.mxu0 0.0
    %758 = vmatprep.subr.mxu0 0.0
    %759 = vmatpush1.xpose.msra.mxu0 0.0
    %760 = vmatprep.subr.mxu0 0.0
    %761 = vmatpush1.xpose.msra.mxu0 0.0
    %762 = vmatprep.subr.mxu0 0.0
    %763 = vmatpush1.xpose.msra.mxu0 0.0
    %764 = vmatprep.subr.mxu0 0.0
    %765 = vmatpush1.xpose.msra.mxu0 0.0
    %766 = vmatprep.subr.mxu0 0.0
    %767 = vmatpush1.xpose.msra.mxu0 0.0
    %768 = vmatprep.subr.mxu0 0.0
    %769 = vmatpush1.xpose.msra.mxu0 0.0
    %770 = vmatprep.subr.mxu0 0.0
    %771 = vmatpush1.xpose.msra.mxu0 0.0
    %772 = vmatprep.subr.mxu0 0.0
    %773 = vmatpush1.xpose.msra.mxu0 0.0
    %774 = vmatprep.subr.mxu0 0.0
    %775 = vmatpush1.xpose.msra.mxu0 0.0
    %776 = vmatprep.subr.mxu0 0.0
    %777 = vmatpush1.xpose.msra.mxu0 0.0
    %778 = vmatprep.subr.mxu0 0.0
    %779 = vmatpush1.xpose.msra.mxu0 0.0
    %780 = vmatprep.subr.mxu0 0.0
    %781 = vmatpush1.xpose.msra.mxu0 0.0
    %782 = vmatprep.subr.mxu0 0.0
    %783 = vmatpush1.xpose.msra.mxu0 0.0
    %784 = vmatprep.subr.mxu0 0.0
    %785 = vmatpush1.xpose.msra.mxu0 0.0
    %786 = vmatprep.subr.mxu0 0.0
    %787 = vmatpush1.xpose.msra.mxu0 0.0
    %788 = vmatprep.subr.mxu0 0.0
    %789 = vmatpush1.xpose.msra.mxu0 0.0
    %790 = vmatprep.subr.mxu0 0.0
    %791 = vmatpush1.xpose.msra.mxu0 0.0
    %792 = vmatprep.mubr.f32.mxu0 0.0
    %793 = vmatmul.mubr.f32.gmra.mrb[0].mxu0 %v724
    %v794 = vpop.f32.mrb[0].mxu0
    %v795 = vadd.f32 0.0, %v794
    %v796 = vpop.f32.mrb[0].mxu0
    %797 = vdwg.mxu0
    %v798 = vmul.f32 %v795, 0.25
    %v799 = vlaneseq
    %v800 = vshrl.u32 %v799, 7
    %v801 = vsub.s32 1, %v800
    %v802 = vrot.slane %v282, %v801
    %v803 = vadd.f32 %v798, %v802
    %v804 = vsel %vm459, %v803, -inf
    %805 = vmax.xlane.f32.xlu0 %v804
    %v806 = vpop.xlane.xlu0 %805
    %v807 = vsub.f32 %v803, %v806
    %v808 = vmul.f32 %v807, 1.442695
    %v809 = vpow.pop %v808
    %v810 = vsel %vm459, %v809, 0.0
    %811 = vadd.xlane.f32.xlu0 %v810
    %v812 = vpop.xlane.xlu0 %811
    %v813 = vrcp.pop %v812
    %v814 = vmul.f32 %v809, %v813
    %815 = vrot.lane.b32.xlu0 %v372, 64
    %v816 = vpop.permute.xlu0 %815
    %v819 = vsel %vm459, %v814, 0
    %821 = vmatprep.subr.mxu0 0.0
    %822 = vmatpush1.msra.mxu0 %v816
    %823 = vmatprep.subr.mxu0 0.0
    %824 = vmatpush1.msra.mxu0 0.0
    %825 = vmatprep.subr.mxu0 0.0
    %826 = vmatpush1.msra.mxu0 0.0
    %827 = vmatprep.subr.mxu0 0.0
    %828 = vmatpush1.msra.mxu0 0.0
    %829 = vmatprep.subr.mxu0 0.0
    %830 = vmatpush1.msra.mxu0 0.0
    %831 = vmatprep.subr.mxu0 0.0
    %832 = vmatpush1.msra.mxu0 0.0
    %833 = vmatprep.subr.mxu0 0.0
    %834 = vmatpush1.msra.mxu0 0.0
    %835 = vmatprep.subr.mxu0 0.0
    %836 = vmatpush1.msra.mxu0 0.0
    %837 = vmatprep.subr.mxu0 0.0
    %838 = vmatpush1.msra.mxu0 0.0
    %839 = vmatprep.subr.mxu0 0.0
    %840 = vmatpush1.msra.mxu0 0.0
    %841 = vmatprep.subr.mxu0 0.0
    %842 = vmatpush1.msra.mxu0 0.0
    %843 = vmatprep.subr.mxu0 0.0
    %844 = vmatpush1.msra.mxu0 0.0
    %845 = vmatprep.subr.mxu0 0.0
    %846 = vmatpush1.msra.mxu0 0.0
    %847 = vmatprep.subr.mxu0 0.0
    %848 = vmatpush1.msra.mxu0 0.0
    %849 = vmatprep.subr.mxu0 0.0
    %850 = vmatpush1.msra.mxu0 0.0
    %851 = vmatprep.subr.mxu0 0.0
    %852 = vmatpush1.msra.mxu0 0.0
    %853 = vmatprep.subr.mxu0 0.0
    %854 = vmatpush1.msra.mxu0 0.0
    %855 = vmatprep.subr.mxu0 0.0
    %856 = vmatpush1.msra.mxu0 0.0
    %857 = vmatprep.subr.mxu0 0.0
    %858 = vmatpush1.msra.mxu0 0.0
    %859 = vmatprep.subr.mxu0 0.0
    %860 = vmatpush1.msra.mxu0 0.0
    %861 = vmatprep.subr.mxu0 0.0
    %862 = vmatpush1.msra.mxu0 0.0
    %863 = vmatprep.subr.mxu0 0.0
    %864 = vmatpush1.msra.mxu0 0.0
    %865 = vmatprep.subr.mxu0 0.0
    %866 = vmatpush1.msra.mxu0 0.0
    %867 = vmatprep.subr.mxu0 0.0
    %868 = vmatpush1.msra.mxu0 0.0
    %869 = vmatprep.subr.mxu0 0.0
    %870 = vmatpush1.msra.mxu0 0.0
    %871 = vmatprep.subr.mxu0 0.0
    %872 = vmatpush1.msra.mxu0 0.0
    %873 = vmatprep.subr.mxu0 0.0
    %874 = vmatpush1.msra.mxu0 0.0
    %875 = vmatprep.subr.mxu0 0.0
    %876 = vmatpush1.msra.mxu0 0.0
    %877 = vmatprep.subr.mxu0 0.0
    %878 = vmatpush1.msra.mxu0 0.0
    %879 = vmatprep.subr.mxu0 0.0
    %880 = vmatpush1.msra.mxu0 0.0
    %881 = vmatprep.subr.mxu0 0.0
    %882 = vmatpush1.msra.mxu0 0.0
    %883 = vmatprep.subr.mxu0 0.0
    %884 = vmatpush1.msra.mxu0 0.0
    %885 = vmatprep.mubr.f32.mxu0 0.0
    %886 = vmatmul.mubr.f32.gmra.mrb[0].mxu0 %v819
    %v887 = vpop.f32.mrb[0].mxu0
    %v888 = vadd.f32 0.0, %v887
    %v889 = vpop.f32.mrb[0].mxu0
    %890 = vdwg.mxu0
    %891 = vst.msk [vmem:[#allocation2 + $0x8] sm:$0xff] %vm378, %v888
    %892 = vrot.lane.b32.xlu0 %v372, 112
    %v893 = vpop.permute.xlu0 %892
    %894 = vrot.lane.b32.xlu0 %v372, 80
    %v895 = vpop.permute.xlu0 %894
    %v896 = vsel %vm378, %v893, 0
    %v898 = vsel %vm378, %v895, 0
    %900 = vmatprep.subr.mxu0 0.0
    %901 = vmatpush1.xpose.msra.mxu0 %v898
    %902 = vmatprep.subr.mxu0 0.0
    %903 = vmatpush1.xpose.msra.mxu0 0.0
    %904 = vmatprep.subr.mxu0 0.0
    %905 = vmatpush1.xpose.msra.mxu0 0.0
    %906 = vmatprep.subr.mxu0 0.0
    %907 = vmatpush1.xpose.msra.mxu0 0.0
    %908 = vmatprep.subr.mxu0 0.0
    %909 = vmatpush1.xpose.msra.mxu0 0.0
    %910 = vmatprep.subr.mxu0 0.0
    %911 = vmatpush1.xpose.msra.mxu0 0.0
    %912 = vmatprep.subr.mxu0 0.0
    %913 = vmatpush1.xpose.msra.mxu0 0.0
    %914 = vmatprep.subr.mxu0 0.0
    %915 = vmatpush1.xpose.msra.mxu0 0.0
    %916 = vmatprep.subr.mxu0 0.0
    %917 = vmatpush1.xpose.msra.mxu0 0.0
    %918 = vmatprep.subr.mxu0 0.0
    %919 = vmatpush1.xpose.msra.mxu0 0.0
    %920 = vmatprep.subr.mxu0 0.0
    %921 = vmatpush1.xpose.msra.mxu0 0.0
    %922 = vmatprep.subr.mxu0 0.0
    %923 = vmatpush1.xpose.msra.mxu0 0.0
    %924 = vmatprep.subr.mxu0 0.0
    %925 = vmatpush1.xpose.msra.mxu0 0.0
    %926 = vmatprep.subr.mxu0 0.0
    %927 = vmatpush1.xpose.msra.mxu0 0.0
    %928 = vmatprep.subr.mxu0 0.0
    %929 = vmatpush1.xpose.msra.mxu0 0.0
    %930 = vmatprep.subr.mxu0 0.0
    %931 = vmatpush1.xpose.msra.mxu0 0.0
    %932 = vmatprep.subr.mxu0 0.0
    %933 = vmatpush1.xpose.msra.mxu0 0.0
    %934 = vmatprep.subr.mxu0 0.0
    %935 = vmatpush1.xpose.msra.mxu0 0.0
    %936 = vmatprep.subr.mxu0 0.0
    %937 = vmatpush1.xpose.msra.mxu0 0.0
    %938 = vmatprep.subr.mxu0 0.0
    %939 = vmatpush1.xpose.msra.mxu0 0.0
    %940 = vmatprep.subr.mxu0 0.0
    %941 = vmatpush1.xpose.msra.mxu0 0.0
    %942 = vmatprep.subr.mxu0 0.0
    %943 = vmatpush1.xpose.msra.mxu0 0.0
    %944 = vmatprep.subr.mxu0 0.0
    %945 = vmatpush1.xpose.msra.mxu0 0.0
    %946 = vmatprep.subr.mxu0 0.0
    %947 = vmatpush1.xpose.msra.mxu0 0.0
    %948 = vmatprep.subr.mxu0 0.0
    %949 = vmatpush1.xpose.msra.mxu0 0.0
    %950 = vmatprep.subr.mxu0 0.0
    %951 = vmatpush1.xpose.msra.mxu0 0.0
    %952 = vmatprep.subr.mxu0 0.0
    %953 = vmatpush1.xpose.msra.mxu0 0.0
    %954 = vmatprep.subr.mxu0 0.0
    %955 = vmatpush1.xpose.msra.mxu0 0.0
    %956 = vmatprep.subr.mxu0 0.0
    %957 = vmatpush1.xpose.msra.mxu0 0.0
    %958 = vmatprep.subr.mxu0 0.0
    %959 = vmatpush1.xpose.msra.mxu0 0.0
    %960 = vmatprep.subr.mxu0 0.0
    %961 = vmatpush1.xpose.msra.mxu0 0.0
    %962 = vmatprep.subr.mxu0 0.0
    %963 = vmatpush1.xpose.msra.mxu0 0.0
    %964 = vmatprep.mubr.f32.mxu0 0.0
    %965 = vmatmul.mubr.f32.gmra.mrb[0].mxu0 %v896
    %v966 = vpop.f32.mrb[0].mxu0
    %v967 = vadd.f32 0.0, %v966
    %v968 = vpop.f32.mrb[0].mxu0
    %969 = vdwg.mxu0
    %v970 = vmul.f32 %v967, 0.25
    %v971 = vadd.f32 %v970, %v802
    %v972 = vsel %vm459, %v971, -inf
    %973 = vmax.xlane.f32.xlu0 %v972
    %v974 = vpop.xlane.xlu0 %973
    %v975 = vsub.f32 %v971, %v974
    %v976 = vmul.f32 %v975, 1.442695
    %v977 = vpow.pop %v976
    %v978 = vsel %vm459, %v977, 0.0
    %979 = vadd.xlane.f32.xlu0 %v978
    %v980 = vpop.xlane.xlu0 %979
    %v981 = vrcp.pop %v980
    %v982 = vmul.f32 %v977, %v981
    %983 = vrot.lane.b32.xlu0 %v372, 48
    %v984 = vpop.permute.xlu0 %983
    %v987 = vsel %vm459, %v982, 0
    %989 = vmatprep.subr.mxu0 0.0
    %990 = vmatpush1.msra.mxu0 %v984
    %991 = vmatprep.subr.mxu0 0.0
    %992 = vmatpush1.msra.mxu0 0.0
    %993 = vmatprep.subr.mxu0 0.0
    %994 = vmatpush1.msra.mxu0 0.0
    %995 = vmatprep.subr.mxu0 0.0
    %996 = vmatpush1.msra.mxu0 0.0
    %997 = vmatprep.subr.mxu0 0.0
    %998 = vmatpush1.msra.mxu0 0.0
    %999 = vmatprep.subr.mxu0 0.0
    %1000 = vmatpush1.msra.mxu0 0.0
    %1001 = vmatprep.subr.mxu0 0.0
    %1002 = vmatpush1.msra.mxu0 0.0
    %1003 = vmatprep.subr.mxu0 0.0
    %1004 = vmatpush1.msra.mxu0 0.0
    %1005 = vmatprep.subr.mxu0 0.0
    %1006 = vmatpush1.msra.mxu0 0.0
    %1007 = vmatprep.subr.mxu0 0.0
    %1008 = vmatpush1.msra.mxu0 0.0
    %1009 = vmatprep.subr.mxu0 0.0
    %1010 = vmatpush1.msra.mxu0 0.0
    %1011 = vmatprep.subr.mxu0 0.0
    %1012 = vmatpush1.msra.mxu0 0.0
    %1013 = vmatprep.subr.mxu0 0.0
    %1014 = vmatpush1.msra.mxu0 0.0
    %1015 = vmatprep.subr.mxu0 0.0
    %1016 = vmatpush1.msra.mxu0 0.0
    %1017 = vmatprep.subr.mxu0 0.0
    %1018 = vmatpush1.msra.mxu0 0.0
    %1019 = vmatprep.subr.mxu0 0.0
    %1020 = vmatpush1.msra.mxu0 0.0
    %1021 = vmatprep.subr.mxu0 0.0
    %1022 = vmatpush1.msra.mxu0 0.0
    %1023 = vmatprep.subr.mxu0 0.0
    %1024 = vmatpush1.msra.mxu0 0.0
    %1025 = vmatprep.subr.mxu0 0.0
    %1026 = vmatpush1.msra.mxu0 0.0
    %1027 = vmatprep.subr.mxu0 0.0
    %1028 = vmatpush1.msra.mxu0 0.0
    %1029 = vmatprep.subr.mxu0 0.0
    %1030 = vmatpush1.msra.mxu0 0.0
    %1031 = vmatprep.subr.mxu0 0.0
    %1032 = vmatpush1.msra.mxu0 0.0
    %1033 = vmatprep.subr.mxu0 0.0
    %1034 = vmatpush1.msra.mxu0 0.0
    %1035 = vmatprep.subr.mxu0 0.0
    %1036 = vmatpush1.msra.mxu0 0.0
    %1037 = vmatprep.subr.mxu0 0.0
    %1038 = vmatpush1.msra.mxu0 0.0
    %1039 = vmatprep.subr.mxu0 0.0
    %1040 = vmatpush1.msra.mxu0 0.0
    %1041 = vmatprep.subr.mxu0 0.0
    %1042 = vmatpush1.msra.mxu0 0.0
    %1043 = vmatprep.subr.mxu0 0.0
    %1044 = vmatpush1.msra.mxu0 0.0
    %1045 = vmatprep.subr.mxu0 0.0
    %1046 = vmatpush1.msra.mxu0 0.0
    %1047 = vmatprep.subr.mxu0 0.0
    %1048 = vmatpush1.msra.mxu0 0.0
    %1049 = vmatprep.subr.mxu0 0.0
    %1050 = vmatpush1.msra.mxu0 0.0
    %1051 = vmatprep.subr.mxu0 0.0
    %1052 = vmatpush1.msra.mxu0 0.0
    %1053 = vmatprep.mubr.f32.mxu0 0.0
    %1054 = vmatmul.mubr.f32.gmra.mrb[0].mxu0 %v987
    %v1055 = vpop.f32.mrb[0].mxu0
    %v1056 = vadd.f32 0.0, %v1055
    %v1057 = vpop.f32.mrb[0].mxu0
    %1058 = vdwg.mxu0
    %1060 = vrot.lane.b32.xlu0 %v1056, 16
    %v1061 = vpop.permute.xlu0 %1060
    %1063 = vst.msk [vmem:[#allocation2 + $0x8] sm:$0xff] %vm719, %v1061
    %v1064 = vld [vmem:[#allocation2] sm:$0xff]
    %v1065 = vld [vmem:[#allocation2 + $0x8] sm:$0xff]
    %v1066 = vld [vmem:[%s6] sm:$0xff]
    %v1067 = vld [vmem:[%s6 + $0x8] sm:$0xff]
    %v1068 = vld [vmem:[%s6 + $0x10] sm:$0xff]
    %v1069 = vld [vmem:[%s6 + $0x18] sm:$0xff]
    %v1070 = vld [vmem:[#allocation13] sm:$0x1]
    %v1072 = vlaneseq
    %v1073 = vshrl.u32 %v1072, 7
    %v1074 = vsub.s32 0, %v1073
    %v1075 = vrot.slane %v1070, %v1074
    %v1078 = vsel %vm238, %v1064, 0
    %v1081 = vsel %vm238, %v1065, 0
    %1083 = vmatprep.subr.mxu0 0.0
    %1084 = vmatpush1.msra.mxu0 %v1066
    %1085 = vmatprep.subr.mxu0 0.0
    %1086 = vmatpush1.msra.mxu0 %v1067
    %1087 = vmatprep.subr.mxu0 0.0
    %1088 = vmatpush1.msra.mxu0 %v1068
    %1089 = vmatprep.subr.mxu0 0.0
    %1090 = vmatpush1.msra.mxu0 %v1069
    %1091 = vmatprep.subr.mxu0 0.0
    %1092 = vmatpush1.msra.mxu0 0.0
    %1093 = vmatprep.subr.mxu0 0.0
    %1094 = vmatpush1.msra.mxu0 0.0
    %1095 = vmatprep.subr.mxu0 0.0
    %1096 = vmatpush1.msra.mxu0 0.0
    %1097 = vmatprep.subr.mxu0 0.0
    %1098 = vmatpush1.msra.mxu0 0.0
    %1099 = vmatprep.subr.mxu0 0.0
    %1100 = vmatpush1.msra.mxu0 0.0
    %1101 = vmatprep.subr.mxu0 0.0
    %1102 = vmatpush1.msra.mxu0 0.0
    %1103 = vmatprep.subr.mxu0 0.0
    %1104 = vmatpush1.msra.mxu0 0.0
    %1105 = vmatprep.subr.mxu0 0.0
    %1106 = vmatpush1.msra.mxu0 0.0
    %1107 = vmatprep.subr.mxu0 0.0
    %1108 = vmatpush1.msra.mxu0 0.0
    %1109 = vmatprep.subr.mxu0 0.0
    %1110 = vmatpush1.msra.mxu0 0.0
    %1111 = vmatprep.subr.mxu0 0.0
    %1112 = vmatpush1.msra.mxu0 0.0
    %1113 = vmatprep.subr.mxu0 0.0
    %1114 = vmatpush1.msra.mxu0 0.0
    %1115 = vmatprep.subr.mxu0 0.0
    %1116 = vmatpush1.msra.mxu0 0.0
    %1117 = vmatprep.subr.mxu0 0.0
    %1118 = vmatpush1.msra.mxu0 0.0
    %1119 = vmatprep.subr.mxu0 0.0
    %1120 = vmatpush1.msra.mxu0 0.0
    %1121 = vmatprep.subr.mxu0 0.0
    %1122 = vmatpush1.msra.mxu0 0.0
    %1123 = vmatprep.subr.mxu0 0.0
    %1124 = vmatpush1.msra.mxu0 0.0
    %1125 = vmatprep.subr.mxu0 0.0
    %1126 = vmatpush1.msra.mxu0 0.0
    %1127 = vmatprep.subr.mxu0 0.0
    %1128 = vmatpush1.msra.mxu0 0.0
    %1129 = vmatprep.subr.mxu0 0.0
    %1130 = vmatpush1.msra.mxu0 0.0
    %1131 = vmatprep.subr.mxu0 0.0
    %1132 = vmatpush1.msra.mxu0 0.0
    %1133 = vmatprep.subr.mxu0 0.0
    %1134 = vmatpush1.msra.mxu0 0.0
    %1135 = vmatprep.subr.mxu0 0.0
    %1136 = vmatpush1.msra.mxu0 0.0
    %1137 = vmatprep.subr.mxu0 0.0
    %1138 = vmatpush1.msra.mxu0 0.0
    %1139 = vmatprep.subr.mxu0 0.0
    %1140 = vmatpush1.msra.mxu0 0.0
    %1141 = vmatprep.subr.mxu0 0.0
    %1142 = vmatpush1.msra.mxu0 0.0
    %1143 = vmatprep.subr.mxu0 0.0
    %1144 = vmatpush1.msra.mxu0 0.0
    %1145 = vmatprep.subr.mxu0 0.0
    %1146 = vmatpush1.msra.mxu0 0.0
    %1147 = vmatprep.mubr.f32.mxu0 0.0
    %1148 = vmatmul.mubr.f32.gmra.mrb[0].mxu0 %v1078
    %v1149 = vpop.f32.mrb[0].mxu0
    %v1150 = vadd.f32 %v1075, %v1149
    %v1151 = vpop.f32.mrb[0].mxu0
    %1152 = vmatprep.mubr.f32.mxu0 0.0
    %1153 = vmatmul.mubr.f32.gmra.mrb[0].mxu0 %v1081
    %v1154 = vpop.f32.mrb[0].mxu0
    %v1155 = vadd.f32 %v1075, %v1154
    %v1156 = vpop.f32.mrb[0].mxu0
    %1157 = vdwg.mxu0
    %v1158 = vadd.f32 %v1150, %v280
    %v1159 = vadd.f32 %v1155, %v281
    %v1160 = vld [vmem:[#allocation15] sm:$0x1]
    %v1161 = vld [vmem:[#allocation16] sm:$0x1]
    %v1162 = vsel %vm238, %v1158, 0.0
    %1163 = vadd.xlane.f32.xlu0 %v1162
    %v1164 = vpop.xlane.xlu0 %1163
    %v1165 = vsel %vm238, %v1159, 0.0
    %1166 = vadd.xlane.f32.xlu0 %v1165
    %v1167 = vpop.xlane.xlu0 %1166
    %v1168 = vmul.f32 %v1164, %v245
    %v1169 = vmul.f32 %v1167, %v245
    %v1170 = vsub.f32 %v1158, %v1168
    %v1171 = vsub.f32 %v1159, %v1169
    %v1172 = vmul.f32 %v1170, %v1170
    %v1173 = vmul.f32 %v1171, %v1171
    %v1174 = vsel %vm238, %v1172, 0.0
    %1175 = vadd.xlane.f32.xlu0 %v1174
    %v1176 = vpop.xlane.xlu0 %1175
    %v1177 = vsel %vm238, %v1173, 0.0
    %1178 = vadd.xlane.f32.xlu0 %v1177
    %v1179 = vpop.xlane.xlu0 %1178
    %v1180 = vmul.f32 %v1176, %v245
    %v1181 = vmul.f32 %v1179, %v245
    %v1182 = vadd.f32 %v1180, 1e-12
    %v1183 = vadd.f32 %v1181, 1e-12
    %v1184 = vrsqrt.pop %v1182
    %v1185 = vrsqrt.pop %v1183
    %v1186 = vmul.f32 %v1170, %v1184
    %v1187 = vmul.f32 %v1171, %v1185
    %v1189 = vlaneseq
    %v1190 = vshrl.u32 %v1189, 7
    %v1191 = vsub.s32 0, %v1190
    %v1192 = vrot.slane %v1160, %v1191
    %v1194 = vmul.f32 %v1186, %v1192
    %v1195 = vmul.f32 %v1187, %v1192
    %v1197 = vlaneseq
    %v1198 = vshrl.u32 %v1197, 7
    %v1199 = vsub.s32 0, %v1198
    %v1200 = vrot.slane %v1161, %v1199
    %v1202 = vadd.f32 %v1194, %v1200
    %v1203 = vadd.f32 %v1195, %v1200
    %v1204 = vld [vmem:[%s10] sm:$0xff]
    %v1205 = vld [vmem:[%s10 + $0x8] sm:$0xff]
    %v1206 = vld [vmem:[%s10 + $0x10] sm:$0xff]
    %v1207 = vld [vmem:[%s10 + $0x18] sm:$0xff]
    %v1208 = vld [vmem:[#allocation18] sm:$0x1]
    %v1210 = vlaneseq
    %v1211 = vshrl.u32 %v1210, 7
    %v1212 = vsub.s32 0, %v1211
    %v1213 = vrot.slane %v1208, %v1212
    %v1216 = vsel %vm238, %v1202, 0
    %v1219 = vsel %vm238, %v1203, 0
    %1221 = vmatprep.subr.mxu0 0.0
    %1222 = vmatpush1.msra.mxu0 %v1204
    %1223 = vmatprep.subr.mxu0 0.0
    %1224 = vmatpush1.msra.mxu0 %v1205
    %1225 = vmatprep.subr.mxu0 0.0
    %1226 = vmatpush1.msra.mxu0 %v1206
    %1227 = vmatprep.subr.mxu0 0.0
    %1228 = vmatpush1.msra.mxu0 %v1207
    %1229 = vmatprep.subr.mxu0 0.0
    %1230 = vmatpush1.msra.mxu0 0.0
    %1231 = vmatprep.subr.mxu0 0.0
    %1232 = vmatpush1.msra.mxu0 0.0
    %1233 = vmatprep.subr.mxu0 0.0
    %1234 = vmatpush1.msra.mxu0 0.0
    %1235 = vmatprep.subr.mxu0 0.0
    %1236 = vmatpush1.msra.mxu0 0.0
    %1237 = vmatprep.subr.mxu0 0.0
    %1238 = vmatpush1.msra.mxu0 0.0
    %1239 = vmatprep.subr.mxu0 0.0
    %1240 = vmatpush1.msra.mxu0 0.0
    %1241 = vmatprep.subr.mxu0 0.0
    %1242 = vmatpush1.msra.mxu0 0.0
    %1243 = vmatprep.subr.mxu0 0.0
    %1244 = vmatpush1.msra.mxu0 0.0
    %1245 = vmatprep.subr.mxu0 0.0
    %1246 = vmatpush1.msra.mxu0 0.0
    %1247 = vmatprep.subr.mxu0 0.0
    %1248 = vmatpush1.msra.mxu0 0.0
    %1249 = vmatprep.subr.mxu0 0.0
    %1250 = vmatpush1.msra.mxu0 0.0
    %1251 = vmatprep.subr.mxu0 0.0
    %1252 = vmatpush1.msra.mxu0 0.0
    %1253 = vmatprep.subr.mxu0 0.0
    %1254 = vmatpush1.msra.mxu0 0.0
    %1255 = vmatprep.subr.mxu0 0.0
    %1256 = vmatpush1.msra.mxu0 0.0
    %1257 = vmatprep.subr.mxu0 0.0
    %1258 = vmatpush1.msra.mxu0 0.0
    %1259 = vmatprep.subr.mxu0 0.0
    %1260 = vmatpush1.msra.mxu0 0.0
    %1261 = vmatprep.subr.mxu0 0.0
    %1262 = vmatpush1.msra.mxu0 0.0
    %1263 = vmatprep.subr.mxu0 0.0
    %1264 = vmatpush1.msra.mxu0 0.0
    %1265 = vmatprep.subr.mxu0 0.0
    %1266 = vmatpush1.msra.mxu0 0.0
    %1267 = vmatprep.subr.mxu0 0.0
    %1268 = vmatpush1.msra.mxu0 0.0
    %1269 = vmatprep.subr.mxu0 0.0
    %1270 = vmatpush1.msra.mxu0 0.0
    %1271 = vmatprep.subr.mxu0 0.0
    %1272 = vmatpush1.msra.mxu0 0.0
    %1273 = vmatprep.subr.mxu0 0.0
    %1274 = vmatpush1.msra.mxu0 0.0
    %1275 = vmatprep.subr.mxu0 0.0
    %1276 = vmatpush1.msra.mxu0 0.0
    %1277 = vmatprep.subr.mxu0 0.0
    %1278 = vmatpush1.msra.mxu0 0.0
    %1279 = vmatprep.subr.mxu0 0.0
    %1280 = vmatpush1.msra.mxu0 0.0
    %1281 = vmatprep.subr.mxu0 0.0
    %1282 = vmatpush1.msra.mxu0 0.0
    %1283 = vmatprep.subr.mxu0 0.0
    %1284 = vmatpush1.msra.mxu0 0.0
    %1285 = vmatprep.mubr.f32.mxu0 0.0
    %1286 = vmatmul.mubr.f32.gmra.mrb[0].mxu0 %v1216
    %v1287 = vpop.f32.mrb[0].mxu0
    %v1288 = vadd.f32 %v1213, %v1287
    %v1289 = vpop.f32.mrb[0].mxu0
    %1290 = vmatprep.mubr.f32.mxu0 0.0
    %1291 = vmatmul.mubr.f32.gmra.mrb[0].mxu0 %v1219
    %v1292 = vpop.f32.mrb[0].mxu0
    %v1293 = vadd.f32 %v1213, %v1292
    %v1294 = vpop.f32.mrb[0].mxu0
    %1295 = vdwg.mxu0
    %v1296 = vmul.f32 %v1288, 0.5
    %v1297 = vmul.f32 %v1293, 0.5
    %v1298 = vmul.f32 %v1288, 0.044715
    %v1299 = vmul.f32 %v1293, 0.044715
    %v1300 = vmul.f32 %v1298, %v1288
    %v1301 = vmul.f32 %v1299, %v1293
    %v1302 = vmul.f32 %v1300, %v1288
    %v1303 = vmul.f32 %v1301, %v1293
    %v1304 = vadd.f32 %v1288, %v1302
    %v1305 = vadd.f32 %v1293, %v1303
    %v1306 = vmul.f32 %v1304, 0.7978846
    %v1307 = vmul.f32 %v1305, 0.7978846
    %v1308 = vtanh.pop %v1306
    %v1309 = vtanh.pop %v1307
    %v1310 = vadd.f32 %v1308, 1.0
    %v1311 = vadd.f32 %v1309, 1.0
    %v1312 = vmul.f32 %v1296, %v1310
    %v1313 = vmul.f32 %v1297, %v1311
    %v1314 = vld [vmem:[%s12] sm:$0xff]
    %v1315 = vld [vmem:[%s12 + $0x8] sm:$0xff]
    %v1316 = vld [vmem:[%s12 + $0x10] sm:$0xff]
    %v1317 = vld [vmem:[%s12 + $0x18] sm:$0xff]
    %v1318 = vld [vmem:[%s12 + $0x20] sm:$0xff]
    %v1319 = vld [vmem:[%s12 + $0x28] sm:$0xff]
    %v1320 = vld [vmem:[%s12 + $0x30] sm:$0xff]
    %v1321 = vld [vmem:[%s12 + $0x38] sm:$0xff]
    %v1322 = vld [vmem:[#allocation19] sm:$0x1]
    %v1324 = vlaneseq
    %v1325 = vshrl.u32 %v1324, 7
    %v1326 = vsub.s32 0, %v1325
    %v1327 = vrot.slane %v1322, %v1326
    %vm1329 = vcmask 523264
    %v1331 = vsel %vm1329, %v1312, 0
    %v1334 = vsel %vm1329, %v1313, 0
    %1336 = vmatprep.subr.mxu0 0.0
    %1337 = vmatpush1.msra.mxu0 %v1314
    %1338 = vmatprep.subr.mxu0 0.0
    %1339 = vmatpush1.msra.mxu0 %v1315
    %1340 = vmatprep.subr.mxu0 0.0
    %1341 = vmatpush1.msra.mxu0 %v1316
    %1342 = vmatprep.subr.mxu0 0.0
    %1343 = vmatpush1.msra.mxu0 %v1317
    %1344 = vmatprep.subr.mxu0 0.0
    %1345 = vmatpush1.msra.mxu0 %v1318
    %1346 = vmatprep.subr.mxu0 0.0
    %1347 = vmatpush1.msra.mxu0 %v1319
    %1348 = vmatprep.subr.mxu0 0.0
    %1349 = vmatpush1.msra.mxu0 %v1320
    %1350 = vmatprep.subr.mxu0 0.0
    %1351 = vmatpush1.msra.mxu0 %v1321
    %1352 = vmatprep.subr.mxu0 0.0
    %1353 = vmatpush1.msra.mxu0 0.0
    %1354 = vmatprep.subr.mxu0 0.0
    %1355 = vmatpush1.msra.mxu0 0.0
    %1356 = vmatprep.subr.mxu0 0.0
    %1357 = vmatpush1.msra.mxu0 0.0
    %1358 = vmatprep.subr.mxu0 0.0
    %1359 = vmatpush1.msra.mxu0 0.0
    %1360 = vmatprep.subr.mxu0 0.0
    %1361 = vmatpush1.msra.mxu0 0.0
    %1362 = vmatprep.subr.mxu0 0.0
    %1363 = vmatpush1.msra.mxu0 0.0
    %1364 = vmatprep.subr.mxu0 0.0
    %1365 = vmatpush1.msra.mxu0 0.0
    %1366 = vmatprep.subr.mxu0 0.0
    %1367 = vmatpush1.msra.mxu0 0.0
    %1368 = vmatprep.subr.mxu0 0.0
    %1369 = vmatpush1.msra.mxu0 0.0
    %1370 = vmatprep.subr.mxu0 0.0
    %1371 = vmatpush1.msra.mxu0 0.0
    %1372 = vmatprep.subr.mxu0 0.0
    %1373 = vmatpush1.msra.mxu0 0.0
    %1374 = vmatprep.subr.mxu0 0.0
    %1375 = vmatpush1.msra.mxu0 0.0
    %1376 = vmatprep.subr.mxu0 0.0
    %1377 = vmatpush1.msra.mxu0 0.0
    %1378 = vmatprep.subr.mxu0 0.0
    %1379 = vmatpush1.msra.mxu0 0.0
    %1380 = vmatprep.subr.mxu0 0.0
    %1381 = vmatpush1.msra.mxu0 0.0
    %1382 = vmatprep.subr.mxu0 0.0
    %1383 = vmatpush1.msra.mxu0 0.0
    %1384 = vmatprep.subr.mxu0 0.0
    %1385 = vmatpush1.msra.mxu0 0.0
    %1386 = vmatprep.subr.mxu0 0.0
    %1387 = vmatpush1.msra.mxu0 0.0
    %1388 = vmatprep.subr.mxu0 0.0
    %1389 = vmatpush1.msra.mxu0 0.0
    %1390 = vmatprep.subr.mxu0 0.0
    %1391 = vmatpush1.msra.mxu0 0.0
    %1392 = vmatprep.subr.mxu0 0.0
    %1393 = vmatpush1.msra.mxu0 0.0
    %1394 = vmatprep.subr.mxu0 0.0
    %1395 = vmatpush1.msra.mxu0 0.0
    %1396 = vmatprep.subr.mxu0 0.0
    %1397 = vmatpush1.msra.mxu0 0.0
    %1398 = vmatprep.subr.mxu0 0.0
    %1399 = vmatpush1.msra.mxu0 0.0
    %1400 = vmatprep.mubr.f32.mxu0 0.0
    %1401 = vmatmul.mubr.f32.gmra.mrb[0].mxu0 %v1331
    %v1402 = vpop.f32.mrb[0].mxu0
    %v1403 = vadd.f32 %v1327, %v1402
    %v1404 = vpop.f32.mrb[0].mxu0
    %1405 = vmatprep.mubr.f32.mxu0 0.0
    %1406 = vmatmul.mubr.f32.gmra.mrb[0].mxu0 %v1334
    %v1407 = vpop.f32.mrb[0].mxu0
    %v1408 = vadd.f32 %v1327, %v1407
    %v1409 = vpop.f32.mrb[0].mxu0
    %1410 = vdwg.mxu0
    %v1411 = vadd.f32 %v1403, %v1202
    %v1412 = vadd.f32 %v1408, %v1203
    %v1413 = vld [vmem:[#allocation21] sm:$0x1]
    %v1414 = vld [vmem:[#allocation22] sm:$0x1]
    %v1415 = vsel %vm238, %v1411, 0.0
    %1416 = vadd.xlane.f32.xlu0 %v1415
    %v1417 = vpop.xlane.xlu0 %1416
    %v1418 = vsel %vm238, %v1412, 0.0
    %1419 = vadd.xlane.f32.xlu0 %v1418
    %v1420 = vpop.xlane.xlu0 %1419
    %v1421 = vmul.f32 %v1417, %v245
    %v1422 = vmul.f32 %v1420, %v245
    %v1423 = vsub.f32 %v1411, %v1421
    %v1424 = vsub.f32 %v1412, %v1422
    %v1425 = vmul.f32 %v1423, %v1423
    %v1426 = vmul.f32 %v1424, %v1424
    %v1427 = vsel %vm238, %v1425, 0.0
    %1428 = vadd.xlane.f32.xlu0 %v1427
    %v1429 = vpop.xlane.xlu0 %1428
    %v1430 = vsel %vm238, %v1426, 0.0
    %1431 = vadd.xlane.f32.xlu0 %v1430
    %v1432 = vpop.xlane.xlu0 %1431
    %v1433 = vmul.f32 %v1429, %v245
    %v1434 = vmul.f32 %v1432, %v245
    %v1435 = vadd.f32 %v1433, 1e-12
    %v1436 = vadd.f32 %v1434, 1e-12
    %v1437 = vrsqrt.pop %v1435
    %v1438 = vrsqrt.pop %v1436
    %v1439 = vmul.f32 %v1423, %v1437
    %v1440 = vmul.f32 %v1424, %v1438
    %v1442 = vlaneseq
    %v1443 = vshrl.u32 %v1442, 7
    %v1444 = vsub.s32 0, %v1443
    %v1445 = vrot.slane %v1413, %v1444
    %v1447 = vmul.f32 %v1439, %v1445
    %v1448 = vmul.f32 %v1440, %v1445
    %v1450 = vlaneseq
    %v1451 = vshrl.u32 %v1450, 7
    %v1452 = vsub.s32 0, %v1451
    %v1453 = vrot.slane %v1414, %v1452
    %v1455 = vadd.f32 %v1447, %v1453
    %v1456 = vadd.f32 %v1448, %v1453
    %s1457 = scalar_lea.vmem %s4, 32
    %v1458 = vld [vmem:[%s1457] sm:$0xff]
    %v1459 = vld [vmem:[%s1457 + $0x8] sm:$0xff]
    %v1460 = vld [vmem:[%s1457 + $0x10] sm:$0xff]
    %v1461 = vld [vmem:[%s1457 + $0x18] sm:$0xff]
    %s1462 = scalar_lea.vmem [#allocation12], 1
    %v1463 = vld [vmem:[%s1462] sm:$0x1]
    %v1465 = vlaneseq
    %v1466 = vshrl.u32 %v1465, 7
    %v1467 = vsub.s32 0, %v1466
    %v1468 = vrot.slane %v1463, %v1467
    %v1471 = vsel %vm238, %v1455, 0
    %v1474 = vsel %vm238, %v1456, 0
    %1476 = vmatprep.subr.mxu0 0.0
    %1477 = vmatpush1.msra.mxu0 %v1458
    %1478 = vmatprep.subr.mxu0 0.0
    %1479 = vmatpush1.msra.mxu0 %v1459
    %1480 = vmatprep.subr.mxu0 0.0
    %1481 = vmatpush1.msra.mxu0 %v1460
    %1482 = vmatprep.subr.mxu0 0.0
    %1483 = vmatpush1.msra.mxu0 %v1461
    %1484 = vmatprep.subr.mxu0 0.0
    %1485 = vmatpush1.msra.mxu0 0.0
    %1486 = vmatprep.subr.mxu0 0.0
    %1487 = vmatpush1.msra.mxu0 0.0
    %1488 = vmatprep.subr.mxu0 0.0
    %1489 = vmatpush1.msra.mxu0 0.0
    %1490 = vmatprep.subr.mxu0 0.0
    %1491 = vmatpush1.msra.mxu0 0.0
    %1492 = vmatprep.subr.mxu0 0.0
    %1493 = vmatpush1.msra.mxu0 0.0
    %1494 = vmatprep.subr.mxu0 0.0
    %1495 = vmatpush1.msra.mxu0 0.0
    %1496 = vmatprep.subr.mxu0 0.0
    %1497 = vmatpush1.msra.mxu0 0.0
    %1498 = vmatprep.subr.mxu0 0.0
    %1499 = vmatpush1.msra.mxu0 0.0
    %1500 = vmatprep.subr.mxu0 0.0
    %1501 = vmatpush1.msra.mxu0 0.0
    %1502 = vmatprep.subr.mxu0 0.0
    %1503 = vmatpush1.msra.mxu0 0.0
    %1504 = vmatprep.subr.mxu0 0.0
    %1505 = vmatpush1.msra.mxu0 0.0
    %1506 = vmatprep.subr.mxu0 0.0
    %1507 = vmatpush1.msra.mxu0 0.0
    %1508 = vmatprep.subr.mxu0 0.0
    %1509 = vmatpush1.msra.mxu0 0.0
    %1510 = vmatprep.subr.mxu0 0.0
    %1511 = vmatpush1.msra.mxu0 0.0
    %1512 = vmatprep.subr.mxu0 0.0
    %1513 = vmatpush1.msra.mxu0 0.0
    %1514 = vmatprep.subr.mxu0 0.0
    %1515 = vmatpush1.msra.mxu0 0.0
    %1516 = vmatprep.subr.mxu0 0.0
    %1517 = vmatpush1.msra.mxu0 0.0
    %1518 = vmatprep.subr.mxu0 0.0
    %1519 = vmatpush1.msra.mxu0 0.0
    %1520 = vmatprep.subr.mxu0 0.0
    %1521 = vmatpush1.msra.mxu0 0.0
    %1522 = vmatprep.subr.mxu0 0.0
    %1523 = vmatpush1.msra.mxu0 0.0
    %1524 = vmatprep.subr.mxu0 0.0
    %1525 = vmatpush1.msra.mxu0 0.0
    %1526 = vmatprep.subr.mxu0 0.0
    %1527 = vmatpush1.msra.mxu0 0.0
    %1528 = vmatprep.subr.mxu0 0.0
    %1529 = vmatpush1.msra.mxu0 0.0
    %1530 = vmatprep.subr.mxu0 0.0
    %1531 = vmatpush1.msra.mxu0 0.0
    %1532 = vmatprep.subr.mxu0 0.0
    %1533 = vmatpush1.msra.mxu0 0.0
    %1534 = vmatprep.subr.mxu0 0.0
    %1535 = vmatpush1.msra.mxu0 0.0
    %1536 = vmatprep.subr.mxu0 0.0
    %1537 = vmatpush1.msra.mxu0 0.0
    %1538 = vmatprep.subr.mxu0 0.0
    %1539 = vmatpush1.msra.mxu0 0.0
    %1540 = vmatprep.mubr.f32.mxu0 0.0
    %1541 = vmatmul.mubr.f32.gmra.mrb[0].mxu0 %v1471
    %v1542 = vpop.f32.mrb[0].mxu0
    %v1543 = vadd.f32 %v1468, %v1542
    %v1544 = vpop.f32.mrb[0].mxu0
    %1545 = vmatprep.mubr.f32.mxu0 0.0
    %1546 = vmatmul.mubr.f32.gmra.mrb[0].mxu0 %v1474
    %v1547 = vpop.f32.mrb[0].mxu0
    %v1548 = vadd.f32 %v1468, %v1547
    %v1549 = vpop.f32.mrb[0].mxu0
    %1550 = vdwg.mxu0
    %1552 = vrot.lane.b32.xlu0 %v1543, 96
    %v1553 = vpop.permute.xlu0 %1552
    %v1554 = vsel %vm378, %v1543, 0
    %v1556 = vsel %vm378, %v1553, 0
    %1558 = vmatprep.subr.mxu0 0.0
    %1559 = vmatpush1.xpose.msra.mxu0 %v1556
    %1560 = vmatprep.subr.mxu0 0.0
    %1561 = vmatpush1.xpose.msra.mxu0 0.0
    %1562 = vmatprep.subr.mxu0 0.0
    %1563 = vmatpush1.xpose.msra.mxu0 0.0
    %1564 = vmatprep.subr.mxu0 0.0
    %1565 = vmatpush1.xpose.msra.mxu0 0.0
    %1566 = vmatprep.subr.mxu0 0.0
    %1567 = vmatpush1.xpose.msra.mxu0 0.0
    %1568 = vmatprep.subr.mxu0 0.0
    %1569 = vmatpush1.xpose.msra.mxu0 0.0
    %1570 = vmatprep.subr.mxu0 0.0
    %1571 = vmatpush1.xpose.msra.mxu0 0.0
    %1572 = vmatprep.subr.mxu0 0.0
    %1573 = vmatpush1.xpose.msra.mxu0 0.0
    %1574 = vmatprep.subr.mxu0 0.0
    %1575 = vmatpush1.xpose.msra.mxu0 0.0
    %1576 = vmatprep.subr.mxu0 0.0
    %1577 = vmatpush1.xpose.msra.mxu0 0.0
    %1578 = vmatprep.subr.mxu0 0.0
    %1579 = vmatpush1.xpose.msra.mxu0 0.0
    %1580 = vmatprep.subr.mxu0 0.0
    %1581 = vmatpush1.xpose.msra.mxu0 0.0
    %1582 = vmatprep.subr.mxu0 0.0
    %1583 = vmatpush1.xpose.msra.mxu0 0.0
    %1584 = vmatprep.subr.mxu0 0.0
    %1585 = vmatpush1.xpose.msra.mxu0 0.0
    %1586 = vmatprep.subr.mxu0 0.0
    %1587 = vmatpush1.xpose.msra.mxu0 0.0
    %1588 = vmatprep.subr.mxu0 0.0
    %1589 = vmatpush1.xpose.msra.mxu0 0.0
    %1590 = vmatprep.subr.mxu0 0.0
    %1591 = vmatpush1.xpose.msra.mxu0 0.0
    %1592 = vmatprep.subr.mxu0 0.0
    %1593 = vmatpush1.xpose.msra.mxu0 0.0
    %1594 = vmatprep.subr.mxu0 0.0
    %1595 = vmatpush1.xpose.msra.mxu0 0.0
    %1596 = vmatprep.subr.mxu0 0.0
    %1597 = vmatpush1.xpose.msra.mxu0 0.0
    %1598 = vmatprep.subr.mxu0 0.0
    %1599 = vmatpush1.xpose.msra.mxu0 0.0
    %1600 = vmatprep.subr.mxu0 0.0
    %1601 = vmatpush1.xpose.msra.mxu0 0.0
    %1602 = vmatprep.subr.mxu0 0.0
    %1603 = vmatpush1.xpose.msra.mxu0 0.0
    %1604 = vmatprep.subr.mxu0 0.0
    %1605 = vmatpush1.xpose.msra.mxu0 0.0
    %1606 = vmatprep.subr.mxu0 0.0
    %1607 = vmatpush1.xpose.msra.mxu0 0.0
    %1608 = vmatprep.subr.mxu0 0.0
    %1609 = vmatpush1.xpose.msra.mxu0 0.0
    %1610 = vmatprep.subr.mxu0 0.0
    %1611 = vmatpush1.xpose.msra.mxu0 0.0
    %1612 = vmatprep.subr.mxu0 0.0
    %1613 = vmatpush1.xpose.msra.mxu0 0.0
    %1614 = vmatprep.subr.mxu0 0.0
    %1615 = vmatpush1.xpose.msra.mxu0 0.0
    %1616 = vmatprep.subr.mxu0 0.0
    %1617 = vmatpush1.xpose.msra.mxu0 0.0
    %1618 = vmatprep.subr.mxu0 0.0
    %1619 = vmatpush1.xpose.msra.mxu0 0.0
    %1620 = vmatprep.subr.mxu0 0.0
    %1621 = vmatpush1.xpose.msra.mxu0 0.0
    %1622 = vmatprep.mubr.f32.mxu0 0.0
    %1623 = vmatmul.mubr.f32.gmra.mrb[0].mxu0 %v1554
    %v1624 = vpop.f32.mrb[0].mxu0
    %v1625 = vadd.f32 0.0, %v1624
    %v1626 = vpop.f32.mrb[0].mxu0
    %1627 = vdwg.mxu0
    %v1628 = vmul.f32 %v1625, 0.25
    %v1629 = vadd.f32 %v1628, %v457
    %v1630 = vsel %vm459, %v1629, -inf
    %1631 = vmax.xlane.f32.xlu0 %v1630
    %v1632 = vpop.xlane.xlu0 %1631
    %v1633 = vsub.f32 %v1629, %v1632
    %v1634 = vmul.f32 %v1633, 1.442695
    %v1635 = vpow.pop %v1634
    %v1636 = vsel %vm459, %v1635, 0.0
    %1637 = vadd.xlane.f32.xlu0 %v1636
    %v1638 = vpop.xlane.xlu0 %1637
    %v1639 = vrcp.pop %v1638
    %v1640 = vmul.f32 %v1635, %v1639
    %1641 = vrot.lane.b32.xlu0 %v1543, 64
    %v1642 = vpop.permute.xlu0 %1641
    %v1645 = vsel %vm459, %v1640, 0
    %1647 = vmatprep.subr.mxu0 0.0
    %1648 = vmatpush1.msra.mxu0 %v1642
    %1649 = vmatprep.subr.mxu0 0.0
    %1650 = vmatpush1.msra.mxu0 0.0
    %1651 = vmatprep.subr.mxu0 0.0
    %1652 = vmatpush1.msra.mxu0 0.0
    %1653 = vmatprep.subr.mxu0 0.0
    %1654 = vmatpush1.msra.mxu0 0.0
    %1655 = vmatprep.subr.mxu0 0.0
    %1656 = vmatpush1.msra.mxu0 0.0
    %1657 = vmatprep.subr.mxu0 0.0
    %1658 = vmatpush1.msra.mxu0 0.0
    %1659 = vmatprep.subr.mxu0 0.0
    %1660 = vmatpush1.msra.mxu0 0.0
    %1661 = vmatprep.subr.mxu0 0.0
    %1662 = vmatpush1.msra.mxu0 0.0
    %1663 = vmatprep.subr.mxu0 0.0
    %1664 = vmatpush1.msra.mxu0 0.0
    %1665 = vmatprep.subr.mxu0 0.0
    %1666 = vmatpush1.msra.mxu0 0.0
    %1667 = vmatprep.subr.mxu0 0.0
    %1668 = vmatpush1.msra.mxu0 0.0
    %1669 = vmatprep.subr.mxu0 0.0
    %1670 = vmatpush1.msra.mxu0 0.0
    %1671 = vmatprep.subr.mxu0 0.0
    %1672 = vmatpush1.msra.mxu0 0.0
    %1673 = vmatprep.subr.mxu0 0.0
    %1674 = vmatpush1.msra.mxu0 0.0
    %1675 = vmatprep.subr.mxu0 0.0
    %1676 = vmatpush1.msra.mxu0 0.0
    %1677 = vmatprep.subr.mxu0 0.0
    %1678 = vmatpush1.msra.mxu0 0.0
    %1679 = vmatprep.subr.mxu0 0.0
    %1680 = vmatpush1.msra.mxu0 0.0
    %1681 = vmatprep.subr.mxu0 0.0
    %1682 = vmatpush1.msra.mxu0 0.0
    %1683 = vmatprep.subr.mxu0 0.0
    %1684 = vmatpush1.msra.mxu0 0.0
    %1685 = vmatprep.subr.mxu0 0.0
    %1686 = vmatpush1.msra.mxu0 0.0
    %1687 = vmatprep.subr.mxu0 0.0
    %1688 = vmatpush1.msra.mxu0 0.0
    %1689 = vmatprep.subr.mxu0 0.0
    %1690 = vmatpush1.msra.mxu0 0.0
    %1691 = vmatprep.subr.mxu0 0.0
    %1692 = vmatpush1.msra.mxu0 0.0
    %1693 = vmatprep.subr.mxu0 0.0
    %1694 = vmatpush1.msra.mxu0 0.0
    %1695 = vmatprep.subr.mxu0 0.0
    %1696 = vmatpush1.msra.mxu0 0.0
    %1697 = vmatprep.subr.mxu0 0.0
    %1698 = vmatpush1.msra.mxu0 0.0
    %1699 = vmatprep.subr.mxu0 0.0
    %1700 = vmatpush1.msra.mxu0 0.0
    %1701 = vmatprep.subr.mxu0 0.0
    %1702 = vmatpush1.msra.mxu0 0.0
    %1703 = vmatprep.subr.mxu0 0.0
    %1704 = vmatpush1.msra.mxu0 0.0
    %1705 = vmatprep.subr.mxu0 0.0
    %1706 = vmatpush1.msra.mxu0 0.0
    %1707 = vmatprep.subr.mxu0 0.0
    %1708 = vmatpush1.msra.mxu0 0.0
    %1709 = vmatprep.subr.mxu0 0.0
    %1710 = vmatpush1.msra.mxu0 0.0
    %1711 = vmatprep.mubr.f32.mxu0 0.0
    %1712 = vmatmul.mubr.f32.gmra.mrb[0].mxu0 %v1645
    %v1713 = vpop.f32.mrb[0].mxu0
    %v1714 = vadd.f32 0.0, %v1713
    %v1715 = vpop.f32.mrb[0].mxu0
    %1716 = vdwg.mxu0
    %1717 = vst.msk [vmem:[#allocation2] sm:$0xff] %vm378, %v1714
    %1718 = vrot.lane.b32.xlu0 %v1543, 112
    %v1719 = vpop.permute.xlu0 %1718
    %1720 = vrot.lane.b32.xlu0 %v1543, 80
    %v1721 = vpop.permute.xlu0 %1720
    %v1722 = vsel %vm378, %v1719, 0
    %v1724 = vsel %vm378, %v1721, 0
    %1726 = vmatprep.subr.mxu0 0.0
    %1727 = vmatpush1.xpose.msra.mxu0 %v1724
    %1728 = vmatprep.subr.mxu0 0.0
    %1729 = vmatpush1.xpose.msra.mxu0 0.0
    %1730 = vmatprep.subr.mxu0 0.0
    %1731 = vmatpush1.xpose.msra.mxu0 0.0
    %1732 = vmatprep.subr.mxu0 0.0
    %1733 = vmatpush1.xpose.msra.mxu0 0.0
    %1734 = vmatprep.subr.mxu0 0.0
    %1735 = vmatpush1.xpose.msra.mxu0 0.0
    %1736 = vmatprep.subr.mxu0 0.0
    %1737 = vmatpush1.xpose.msra.mxu0 0.0
    %1738 = vmatprep.subr.mxu0 0.0
    %1739 = vmatpush1.xpose.msra.mxu0 0.0
    %1740 = vmatprep.subr.mxu0 0.0
    %1741 = vmatpush1.xpose.msra.mxu0 0.0
    %1742 = vmatprep.subr.mxu0 0.0
    %1743 = vmatpush1.xpose.msra.mxu0 0.0
    %1744 = vmatprep.subr.mxu0 0.0
    %1745 = vmatpush1.xpose.msra.mxu0 0.0
    %1746 = vmatprep.subr.mxu0 0.0
    %1747 = vmatpush1.xpose.msra.mxu0 0.0
    %1748 = vmatprep.subr.mxu0 0.0
    %1749 = vmatpush1.xpose.msra.mxu0 0.0
    %1750 = vmatprep.subr.mxu0 0.0
    %1751 = vmatpush1.xpose.msra.mxu0 0.0
    %1752 = vmatprep.subr.mxu0 0.0
    %1753 = vmatpush1.xpose.msra.mxu0 0.0
    %1754 = vmatprep.subr.mxu0 0.0
    %1755 = vmatpush1.xpose.msra.mxu0 0.0
    %1756 = vmatprep.subr.mxu0 0.0
    %1757 = vmatpush1.xpose.msra.mxu0 0.0
    %1758 = vmatprep.subr.mxu0 0.0
    %1759 = vmatpush1.xpose.msra.mxu0 0.0
    %1760 = vmatprep.subr.mxu0 0.0
    %1761 = vmatpush1.xpose.msra.mxu0 0.0
    %1762 = vmatprep.subr.mxu0 0.0
    %1763 = vmatpush1.xpose.msra.mxu0 0.0
    %1764 = vmatprep.subr.mxu0 0.0
    %1765 = vmatpush1.xpose.msra.mxu0 0.0
    %1766 = vmatprep.subr.mxu0 0.0
    %1767 = vmatpush1.xpose.msra.mxu0 0.0
    %1768 = vmatprep.subr.mxu0 0.0
    %1769 = vmatpush1.xpose.msra.mxu0 0.0
    %1770 = vmatprep.subr.mxu0 0.0
    %1771 = vmatpush1.xpose.msra.mxu0 0.0
    %1772 = vmatprep.subr.mxu0 0.0
    %1773 = vmatpush1.xpose.msra.mxu0 0.0
    %1774 = vmatprep.subr.mxu0 0.0
    %1775 = vmatpush1.xpose.msra.mxu0 0.0
    %1776 = vmatprep.subr.mxu0 0.0
    %1777 = vmatpush1.xpose.msra.mxu0 0.0
    %1778 = vmatprep.subr.mxu0 0.0
    %1779 = vmatpush1.xpose.msra.mxu0 0.0
    %1780 = vmatprep.subr.mxu0 0.0
    %1781 = vmatpush1.xpose.msra.mxu0 0.0
    %1782 = vmatprep.subr.mxu0 0.0
    %1783 = vmatpush1.xpose.msra.mxu0 0.0
    %1784 = vmatprep.subr.mxu0 0.0
    %1785 = vmatpush1.xpose.msra.mxu0 0.0
    %1786 = vmatprep.subr.mxu0 0.0
    %1787 = vmatpush1.xpose.msra.mxu0 0.0
    %1788 = vmatprep.subr.mxu0 0.0
    %1789 = vmatpush1.xpose.msra.mxu0 0.0
    %1790 = vmatprep.mubr.f32.mxu0 0.0
    %1791 = vmatmul.mubr.f32.gmra.mrb[0].mxu0 %v1722
    %v1792 = vpop.f32.mrb[0].mxu0
    %v1793 = vadd.f32 0.0, %v1792
    %v1794 = vpop.f32.mrb[0].mxu0
    %1795 = vdwg.mxu0
    %v1796 = vmul.f32 %v1793, 0.25
    %v1797 = vadd.f32 %v1796, %v457
    %v1798 = vsel %vm459, %v1797, -inf
    %1799 = vmax.xlane.f32.xlu0 %v1798
    %v1800 = vpop.xlane.xlu0 %1799
    %v1801 = vsub.f32 %v1797, %v1800
    %v1802 = vmul.f32 %v1801, 1.442695
    %v1803 = vpow.pop %v1802
    %v1804 = vsel %vm459, %v1803, 0.0
    %1805 = vadd.xlane.f32.xlu0 %v1804
    %v1806 = vpop.xlane.xlu0 %1805
    %v1807 = vrcp.pop %v1806
    %v1808 = vmul.f32 %v1803, %v1807
    %1809 = vrot.lane.b32.xlu0 %v1543, 48
    %v1810 = vpop.permute.xlu0 %1809
    %v1813 = vsel %vm459, %v1808, 0
    %1815 = vmatprep.subr.mxu0 0.0
    %1816 = vmatpush1.msra.mxu0 %v1810
    %1817 = vmatprep.subr.mxu0 0.0
    %1818 = vmatpush1.msra.mxu0 0.0
    %1819 = vmatprep.subr.mxu0 0.0
    %1820 = vmatpush1.msra.mxu0 0.0
    %1821 = vmatprep.subr.mxu0 0.0
    %1822 = vmatpush1.msra.mxu0 0.0
    %1823 = vmatprep.subr.mxu0 0.0
    %1824 = vmatpush1.msra.mxu0 0.0
    %1825 = vmatprep.subr.mxu0 0.0
    %1826 = vmatpush1.msra.mxu0 0.0
    %1827 = vmatprep.subr.mxu0 0.0
    %1828 = vmatpush1.msra.mxu0 0.0
    %1829 = vmatprep.subr.mxu0 0.0
    %1830 = vmatpush1.msra.mxu0 0.0
    %1831 = vmatprep.subr.mxu0 0.0
    %1832 = vmatpush1.msra.mxu0 0.0
    %1833 = vmatprep.subr.mxu0 0.0
    %1834 = vmatpush1.msra.mxu0 0.0
    %1835 = vmatprep.subr.mxu0 0.0
    %1836 = vmatpush1.msra.mxu0 0.0
    %1837 = vmatprep.subr.mxu0 0.0
    %1838 = vmatpush1.msra.mxu0 0.0
    %1839 = vmatprep.subr.mxu0 0.0
    %1840 = vmatpush1.msra.mxu0 0.0
    %1841 = vmatprep.subr.mxu0 0.0
    %1842 = vmatpush1.msra.mxu0 0.0
    %1843 = vmatprep.subr.mxu0 0.0
    %1844 = vmatpush1.msra.mxu0 0.0
    %1845 = vmatprep.subr.mxu0 0.0
    %1846 = vmatpush1.msra.mxu0 0.0
    %1847 = vmatprep.subr.mxu0 0.0
    %1848 = vmatpush1.msra.mxu0 0.0
    %1849 = vmatprep.subr.mxu0 0.0
    %1850 = vmatpush1.msra.mxu0 0.0
    %1851 = vmatprep.subr.mxu0 0.0
    %1852 = vmatpush1.msra.mxu0 0.0
    %1853 = vmatprep.subr.mxu0 0.0
    %1854 = vmatpush1.msra.mxu0 0.0
    %1855 = vmatprep.subr.mxu0 0.0
    %1856 = vmatpush1.msra.mxu0 0.0
    %1857 = vmatprep.subr.mxu0 0.0
    %1858 = vmatpush1.msra.mxu0 0.0
    %1859 = vmatprep.subr.mxu0 0.0
    %1860 = vmatpush1.msra.mxu0 0.0
    %1861 = vmatprep.subr.mxu0 0.0
    %1862 = vmatpush1.msra.mxu0 0.0
    %1863 = vmatprep.subr.mxu0 0.0
    %1864 = vmatpush1.msra.mxu0 0.0
    %1865 = vmatprep.subr.mxu0 0.0
    %1866 = vmatpush1.msra.mxu0 0.0
    %1867 = vmatprep.subr.mxu0 0.0
    %1868 = vmatpush1.msra.mxu0 0.0
    %1869 = vmatprep.subr.mxu0 0.0
    %1870 = vmatpush1.msra.mxu0 0.0
    %1871 = vmatprep.subr.mxu0 0.0
    %1872 = vmatpush1.msra.mxu0 0.0
    %1873 = vmatprep.subr.mxu0 0.0
    %1874 = vmatpush1.msra.mxu0 0.0
    %1875 = vmatprep.subr.mxu0 0.0
    %1876 = vmatpush1.msra.mxu0 0.0
    %1877 = vmatprep.subr.mxu0 0.0
    %1878 = vmatpush1.msra.mxu0 0.0
    %1879 = vmatprep.mubr.f32.mxu0 0.0
    %1880 = vmatmul.mubr.f32.gmra.mrb[0].mxu0 %v1813
    %v1881 = vpop.f32.mrb[0].mxu0
    %v1882 = vadd.f32 0.0, %v1881
    %v1883 = vpop.f32.mrb[0].mxu0
    %1884 = vdwg.mxu0
    %1886 = vrot.lane.b32.xlu0 %v1882, 16
    %v1887 = vpop.permute.xlu0 %1886
    %1889 = vst.msk [vmem:[#allocation2] sm:$0xff] %vm719, %v1887
    %1891 = vrot.lane.b32.xlu0 %v1548, 96
    %v1892 = vpop.permute.xlu0 %1891
    %v1893 = vsel %vm378, %v1548, 0
    %v1895 = vsel %vm378, %v1892, 0
    %1897 = vmatprep.subr.mxu0 0.0
    %1898 = vmatpush1.xpose.msra.mxu0 %v1895
    %1899 = vmatprep.subr.mxu0 0.0
    %1900 = vmatpush1.xpose.msra.mxu0 0.0
    %1901 = vmatprep.subr.mxu0 0.0
    %1902 = vmatpush1.xpose.msra.mxu0 0.0
    %1903 = vmatprep.subr.mxu0 0.0
    %1904 = vmatpush1.xpose.msra.mxu0 0.0
    %1905 = vmatprep.subr.mxu0 0.0
    %1906 = vmatpush1.xpose.msra.mxu0 0.0
    %1907 = vmatprep.subr.mxu0 0.0
    %1908 = vmatpush1.xpose.msra.mxu0 0.0
    %1909 = vmatprep.subr.mxu0 0.0
    %1910 = vmatpush1.xpose.msra.mxu0 0.0
    %1911 = vmatprep.subr.mxu0 0.0
    %1912 = vmatpush1.xpose.msra.mxu0 0.0
    %1913 = vmatprep.subr.mxu0 0.0
    %1914 = vmatpush1.xpose.msra.mxu0 0.0
    %1915 = vmatprep.subr.mxu0 0.0
    %1916 = vmatpush1.xpose.msra.mxu0 0.0
    %1917 = vmatprep.subr.mxu0 0.0
    %1918 = vmatpush1.xpose.msra.mxu0 0.0
    %1919 = vmatprep.subr.mxu0 0.0
    %1920 = vmatpush1.xpose.msra.mxu0 0.0
    %1921 = vmatprep.subr.mxu0 0.0
    %1922 = vmatpush1.xpose.msra.mxu0 0.0
    %1923 = vmatprep.subr.mxu0 0.0
    %1924 = vmatpush1.xpose.msra.mxu0 0.0
    %1925 = vmatprep.subr.mxu0 0.0
    %1926 = vmatpush1.xpose.msra.mxu0 0.0
    %1927 = vmatprep.subr.mxu0 0.0
    %1928 = vmatpush1.xpose.msra.mxu0 0.0
    %1929 = vmatprep.subr.mxu0 0.0
    %1930 = vmatpush1.xpose.msra.mxu0 0.0
    %1931 = vmatprep.subr.mxu0 0.0
    %1932 = vmatpush1.xpose.msra.mxu0 0.0
    %1933 = vmatprep.subr.mxu0 0.0
    %1934 = vmatpush1.xpose.msra.mxu0 0.0
    %1935 = vmatprep.subr.mxu0 0.0
    %1936 = vmatpush1.xpose.msra.mxu0 0.0
    %1937 = vmatprep.subr.mxu0 0.0
    %1938 = vmatpush1.xpose.msra.mxu0 0.0
    %1939 = vmatprep.subr.mxu0 0.0
    %1940 = vmatpush1.xpose.msra.mxu0 0.0
    %1941 = vmatprep.subr.mxu0 0.0
    %1942 = vmatpush1.xpose.msra.mxu0 0.0
    %1943 = vmatprep.subr.mxu0 0.0
    %1944 = vmatpush1.xpose.msra.mxu0 0.0
    %1945 = vmatprep.subr.mxu0 0.0
    %1946 = vmatpush1.xpose.msra.mxu0 0.0
    %1947 = vmatprep.subr.mxu0 0.0
    %1948 = vmatpush1.xpose.msra.mxu0 0.0
    %1949 = vmatprep.subr.mxu0 0.0
    %1950 = vmatpush1.xpose.msra.mxu0 0.0
    %1951 = vmatprep.subr.mxu0 0.0
    %1952 = vmatpush1.xpose.msra.mxu0 0.0
    %1953 = vmatprep.subr.mxu0 0.0
    %1954 = vmatpush1.xpose.msra.mxu0 0.0
    %1955 = vmatprep.subr.mxu0 0.0
    %1956 = vmatpush1.xpose.msra.mxu0 0.0
    %1957 = vmatprep.subr.mxu0 0.0
    %1958 = vmatpush1.xpose.msra.mxu0 0.0
    %1959 = vmatprep.subr.mxu0 0.0
    %1960 = vmatpush1.xpose.msra.mxu0 0.0
    %1961 = vmatprep.mubr.f32.mxu0 0.0
    %1962 = vmatmul.mubr.f32.gmra.mrb[0].mxu0 %v1893
    %v1963 = vpop.f32.mrb[0].mxu0
    %v1964 = vadd.f32 0.0, %v1963
    %v1965 = vpop.f32.mrb[0].mxu0
    %1966 = vdwg.mxu0
    %v1967 = vmul.f32 %v1964, 0.25
    %v1968 = vadd.f32 %v1967, %v802
    %v1969 = vsel %vm459, %v1968, -inf
    %1970 = vmax.xlane.f32.xlu0 %v1969
    %v1971 = vpop.xlane.xlu0 %1970
    %v1972 = vsub.f32 %v1968, %v1971
    %v1973 = vmul.f32 %v1972, 1.442695
    %v1974 = vpow.pop %v1973
    %v1975 = vsel %vm459, %v1974, 0.0
    %1976 = vadd.xlane.f32.xlu0 %v1975
    %v1977 = vpop.xlane.xlu0 %1976
    %v1978 = vrcp.pop %v1977
    %v1979 = vmul.f32 %v1974, %v1978
    %1980 = vrot.lane.b32.xlu0 %v1548, 64
    %v1981 = vpop.permute.xlu0 %1980
    %v1984 = vsel %vm459, %v1979, 0
    %1986 = vmatprep.subr.mxu0 0.0
    %1987 = vmatpush1.msra.mxu0 %v1981
    %1988 = vmatprep.subr.mxu0 0.0
    %1989 = vmatpush1.msra.mxu0 0.0
    %1990 = vmatprep.subr.mxu0 0.0
    %1991 = vmatpush1.msra.mxu0 0.0
    %1992 = vmatprep.subr.mxu0 0.0
    %1993 = vmatpush1.msra.mxu0 0.0
    %1994 = vmatprep.subr.mxu0 0.0
    %1995 = vmatpush1.msra.mxu0 0.0
    %1996 = vmatprep.subr.mxu0 0.0
    %1997 = vmatpush1.msra.mxu0 0.0
    %1998 = vmatprep.subr.mxu0 0.0
    %1999 = vmatpush1.msra.mxu0 0.0
    %2000 = vmatprep.subr.mxu0 0.0
    %2001 = vmatpush1.msra.mxu0 0.0
    %2002 = vmatprep.subr.mxu0 0.0
    %2003 = vmatpush1.msra.mxu0 0.0
    %2004 = vmatprep.subr.mxu0 0.0
    %2005 = vmatpush1.msra.mxu0 0.0
    %2006 = vmatprep.subr.mxu0 0.0
    %2007 = vmatpush1.msra.mxu0 0.0
    %2008 = vmatprep.subr.mxu0 0.0
    %2009 = vmatpush1.msra.mxu0 0.0
    %2010 = vmatprep.subr.mxu0 0.0
    %2011 = vmatpush1.msra.mxu0 0.0
    %2012 = vmatprep.subr.mxu0 0.0
    %2013 = vmatpush1.msra.mxu0 0.0
    %2014 = vmatprep.subr.mxu0 0.0
    %2015 = vmatpush1.msra.mxu0 0.0
    %2016 = vmatprep.subr.mxu0 0.0
    %2017 = vmatpush1.msra.mxu0 0.0
    %2018 = vmatprep.subr.mxu0 0.0
    %2019 = vmatpush1.msra.mxu0 0.0
    %2020 = vmatprep.subr.mxu0 0.0
    %2021 = vmatpush1.msra.mxu0 0.0
    %2022 = vmatprep.subr.mxu0 0.0
    %2023 = vmatpush1.msra.mxu0 0.0
    %2024 = vmatprep.subr.mxu0 0.0
    %2025 = vmatpush1.msra.mxu0 0.0
    %2026 = vmatprep.subr.mxu0 0.0
    %2027 = vmatpush1.msra.mxu0 0.0
    %2028 = vmatprep.subr.mxu0 0.0
    %2029 = vmatpush1.msra.mxu0 0.0
    %2030 = vmatprep.subr.mxu0 0.0
    %2031 = vmatpush1.msra.mxu0 0.0
    %2032 = vmatprep.subr.mxu0 0.0
    %2033 = vmatpush1.msra.mxu0 0.0
    %2034 = vmatprep.subr.mxu0 0.0
    %2035 = vmatpush1.msra.mxu0 0.0
    %2036 = vmatprep.subr.mxu0 0.0
    %2037 = vmatpush1.msra.mxu0 0.0
    %2038 = vmatprep.subr.mxu0 0.0
    %2039 = vmatpush1.msra.mxu0 0.0
    %2040 = vmatprep.subr.mxu0 0.0
    %2041 = vmatpush1.msra.mxu0 0.0
    %2042 = vmatprep.subr.mxu0 0.0
    %2043 = vmatpush1.msra.mxu0 0.0
    %2044 = vmatprep.subr.mxu0 0.0
    %2045 = vmatpush1.msra.mxu0 0.0
    %2046 = vmatprep.subr.mxu0 0.0
    %2047 = vmatpush1.msra.mxu0 0.0
    %2048 = vmatprep.subr.mxu0 0.0
    %2049 = vmatpush1.msra.mxu0 0.0
    %2050 = vmatprep.mubr.f32.mxu0 0.0
    %2051 = vmatmul.mubr.f32.gmra.mrb[0].mxu0 %v1984
    %v2052 = vpop.f32.mrb[0].mxu0
    %v2053 = vadd.f32 0.0, %v2052
    %v2054 = vpop.f32.mrb[0].mxu0
    %2055 = vdwg.mxu0
    %2056 = vst.msk [vmem:[#allocation2 + $0x8] sm:$0xff] %vm378, %v2053
    %2057 = vrot.lane.b32.xlu0 %v1548, 112
    %v2058 = vpop.permute.xlu0 %2057
    %2059 = vrot.lane.b32.xlu0 %v1548, 80
    %v2060 = vpop.permute.xlu0 %2059
    %v2061 = vsel %vm378, %v2058, 0
    %v2063 = vsel %vm378, %v2060, 0
    %2065 = vmatprep.subr.mxu0 0.0
    %2066 = vmatpush1.xpose.msra.mxu0 %v2063
    %2067 = vmatprep.subr.mxu0 0.0
    %2068 = vmatpush1.xpose.msra.mxu0 0.0
    %2069 = vmatprep.subr.mxu0 0.0
    %2070 = vmatpush1.xpose.msra.mxu0 0.0
    %2071 = vmatprep.subr.mxu0 0.0
    %2072 = vmatpush1.xpose.msra.mxu0 0.0
    %2073 = vmatprep.subr.mxu0 0.0
    %2074 = vmatpush1.xpose.msra.mxu0 0.0
    %2075 = vmatprep.subr.mxu0 0.0
    %2076 = vmatpush1.xpose.msra.mxu0 0.0
    %2077 = vmatprep.subr.mxu0 0.0
    %2078 = vmatpush1.xpose.msra.mxu0 0.0
    %2079 = vmatprep.subr.mxu0 0.0
    %2080 = vmatpush1.xpose.msra.mxu0 0.0
    %2081 = vmatprep.subr.mxu0 0.0
    %2082 = vmatpush1.xpose.msra.mxu0 0.0
    %2083 = vmatprep.subr.mxu0 0.0
    %2084 = vmatpush1.xpose.msra.mxu0 0.0
    %2085 = vmatprep.subr.mxu0 0.0
    %2086 = vmatpush1.xpose.msra.mxu0 0.0
    %2087 = vmatprep.subr.mxu0 0.0
    %2088 = vmatpush1.xpose.msra.mxu0 0.0
    %2089 = vmatprep.subr.mxu0 0.0
    %2090 = vmatpush1.xpose.msra.mxu0 0.0
    %2091 = vmatprep.subr.mxu0 0.0
    %2092 = vmatpush1.xpose.msra.mxu0 0.0
    %2093 = vmatprep.subr.mxu0 0.0
    %2094 = vmatpush1.xpose.msra.mxu0 0.0
    %2095 = vmatprep.subr.mxu0 0.0
    %2096 = vmatpush1.xpose.msra.mxu0 0.0
    %2097 = vmatprep.subr.mxu0 0.0
    %2098 = vmatpush1.xpose.msra.mxu0 0.0
    %2099 = vmatprep.subr.mxu0 0.0
    %2100 = vmatpush1.xpose.msra.mxu0 0.0
    %2101 = vmatprep.subr.mxu0 0.0
    %2102 = vmatpush1.xpose.msra.mxu0 0.0
    %2103 = vmatprep.subr.mxu0 0.0
    %2104 = vmatpush1.xpose.msra.mxu0 0.0
    %2105 = vmatprep.subr.mxu0 0.0
    %2106 = vmatpush1.xpose.msra.mxu0 0.0
    %2107 = vmatprep.subr.mxu0 0.0
    %2108 = vmatpush1.xpose.msra.mxu0 0.0
    %2109 = vmatprep.subr.mxu0 0.0
    %2110 = vmatpush1.xpose.msra.mxu0 0.0
    %2111 = vmatprep.subr.mxu0 0.0
    %2112 = vmatpush1.xpose.msra.mxu0 0.0
    %2113 = vmatprep.subr.mxu0 0.0
    %2114 = vmatpush1.xpose.msra.mxu0 0.0
    %2115 = vmatprep.subr.mxu0 0.0
    %2116 = vmatpush1.xpose.msra.mxu0 0.0
    %2117 = vmatprep.subr.mxu0 0.0
    %2118 = vmatpush1.xpose.msra.mxu0 0.0
    %2119 = vmatprep.subr.mxu0 0.0
    %2120 = vmatpush1.xpose.msra.mxu0 0.0
    %2121 = vmatprep.subr.mxu0 0.0
    %2122 = vmatpush1.xpose.msra.mxu0 0.0
    %2123 = vmatprep.subr.mxu0 0.0
    %2124 = vmatpush1.xpose.msra.mxu0 0.0
    %2125 = vmatprep.subr.mxu0 0.0
    %2126 = vmatpush1.xpose.msra.mxu0 0.0
    %2127 = vmatprep.subr.mxu0 0.0
    %2128 = vmatpush1.xpose.msra.mxu0 0.0
    %2129 = vmatprep.mubr.f32.mxu0 0.0
    %2130 = vmatmul.mubr.f32.gmra.mrb[0].mxu0 %v2061
    %v2131 = vpop.f32.mrb[0].mxu0
    %v2132 = vadd.f32 0.0, %v2131
    %v2133 = vpop.f32.mrb[0].mxu0
    %2134 = vdwg.mxu0
    %v2135 = vmul.f32 %v2132, 0.25
    %v2136 = vadd.f32 %v2135, %v802
    %v2137 = vsel %vm459, %v2136, -inf
    %2138 = vmax.xlane.f32.xlu0 %v2137
    %v2139 = vpop.xlane.xlu0 %2138
    %v2140 = vsub.f32 %v2136, %v2139
    %v2141 = vmul.f32 %v2140, 1.442695
    %v2142 = vpow.pop %v2141
    %v2143 = vsel %vm459, %v2142, 0.0
    %2144 = vadd.xlane.f32.xlu0 %v2143
    %v2145 = vpop.xlane.xlu0 %2144
    %v2146 = vrcp.pop %v2145
    %v2147 = vmul.f32 %v2142, %v2146
    %2148 = vrot.lane.b32.xlu0 %v1548, 48
    %v2149 = vpop.permute.xlu0 %2148
    %v2152 = vsel %vm459, %v2147, 0
    %2154 = vmatprep.subr.mxu0 0.0
    %2155 = vmatpush1.msra.mxu0 %v2149
    %2156 = vmatprep.subr.mxu0 0.0
    %2157 = vmatpush1.msra.mxu0 0.0
    %2158 = vmatprep.subr.mxu0 0.0
    %2159 = vmatpush1.msra.mxu0 0.0
    %2160 = vmatprep.subr.mxu0 0.0
    %2161 = vmatpush1.msra.mxu0 0.0
    %2162 = vmatprep.subr.mxu0 0.0
    %2163 = vmatpush1.msra.mxu0 0.0
    %2164 = vmatprep.subr.mxu0 0.0
    %2165 = vmatpush1.msra.mxu0 0.0
    %2166 = vmatprep.subr.mxu0 0.0
    %2167 = vmatpush1.msra.mxu0 0.0
    %2168 = vmatprep.subr.mxu0 0.0
    %2169 = vmatpush1.msra.mxu0 0.0
    %2170 = vmatprep.subr.mxu0 0.0
    %2171 = vmatpush1.msra.mxu0 0.0
    %2172 = vmatprep.subr.mxu0 0.0
    %2173 = vmatpush1.msra.mxu0 0.0
    %2174 = vmatprep.subr.mxu0 0.0
    %2175 = vmatpush1.msra.mxu0 0.0
    %2176 = vmatprep.subr.mxu0 0.0
    %2177 = vmatpush1.msra.mxu0 0.0
    %2178 = vmatprep.subr.mxu0 0.0
    %2179 = vmatpush1.msra.mxu0 0.0
    %2180 = vmatprep.subr.mxu0 0.0
    %2181 = vmatpush1.msra.mxu0 0.0
    %2182 = vmatprep.subr.mxu0 0.0
    %2183 = vmatpush1.msra.mxu0 0.0
    %2184 = vmatprep.subr.mxu0 0.0
    %2185 = vmatpush1.msra.mxu0 0.0
    %2186 = vmatprep.subr.mxu0 0.0
    %2187 = vmatpush1.msra.mxu0 0.0
    %2188 = vmatprep.subr.mxu0 0.0
    %2189 = vmatpush1.msra.mxu0 0.0
    %2190 = vmatprep.subr.mxu0 0.0
    %2191 = vmatpush1.msra.mxu0 0.0
    %2192 = vmatprep.subr.mxu0 0.0
    %2193 = vmatpush1.msra.mxu0 0.0
    %2194 = vmatprep.subr.mxu0 0.0
    %2195 = vmatpush1.msra.mxu0 0.0
    %2196 = vmatprep.subr.mxu0 0.0
    %2197 = vmatpush1.msra.mxu0 0.0
    %2198 = vmatprep.subr.mxu0 0.0
    %2199 = vmatpush1.msra.mxu0 0.0
    %2200 = vmatprep.subr.mxu0 0.0
    %2201 = vmatpush1.msra.mxu0 0.0
    %2202 = vmatprep.subr.mxu0 0.0
    %2203 = vmatpush1.msra.mxu0 0.0
    %2204 = vmatprep.subr.mxu0 0.0
    %2205 = vmatpush1.msra.mxu0 0.0
    %2206 = vmatprep.subr.mxu0 0.0
    %2207 = vmatpush1.msra.mxu0 0.0
    %2208 = vmatprep.subr.mxu0 0.0
    %2209 = vmatpush1.msra.mxu0 0.0
    %2210 = vmatprep.subr.mxu0 0.0
    %2211 = vmatpush1.msra.mxu0 0.0
    %2212 = vmatprep.subr.mxu0 0.0
    %2213 = vmatpush1.msra.mxu0 0.0
    %2214 = vmatprep.subr.mxu0 0.0
    %2215 = vmatpush1.msra.mxu0 0.0
    %2216 = vmatprep.subr.mxu0 0.0
    %2217 = vmatpush1.msra.mxu0 0.0
    %2218 = vmatprep.mubr.f32.mxu0 0.0
    %2219 = vmatmul.mubr.f32.gmra.mrb[0].mxu0 %v2152
    %v2220 = vpop.f32.mrb[0].mxu0
    %v2221 = vadd.f32 0.0, %v2220
    %v2222 = vpop.f32.mrb[0].mxu0
    %2223 = vdwg.mxu0
    %2225 = vrot.lane.b32.xlu0 %v2221, 16
    %v2226 = vpop.permute.xlu0 %2225
    %2228 = vst.msk [vmem:[#allocation2 + $0x8] sm:$0xff] %vm719, %v2226
    %v2229 = vld [vmem:[#allocation2] sm:$0xff]
    %v2230 = vld [vmem:[#allocation2 + $0x8] sm:$0xff]
    %s2231 = scalar_lea.vmem %s6, 32
    %v2232 = vld [vmem:[%s2231] sm:$0xff]
    %v2233 = vld [vmem:[%s2231 + $0x8] sm:$0xff]
    %v2234 = vld [vmem:[%s2231 + $0x10] sm:$0xff]
    %v2235 = vld [vmem:[%s2231 + $0x18] sm:$0xff]
    %s2236 = scalar_lea.vmem [#allocation13], 1
    %v2237 = vld [vmem:[%s2236] sm:$0x1]
    %v2239 = vlaneseq
    %v2240 = vshrl.u32 %v2239, 7
    %v2241 = vsub.s32 0, %v2240
    %v2242 = vrot.slane %v2237, %v2241
    %v2245 = vsel %vm238, %v2229, 0
    %v2248 = vsel %vm238, %v2230, 0
    %2250 = vmatprep.subr.mxu0 0.0
    %2251 = vmatpush1.msra.mxu0 %v2232
    %2252 = vmatprep.subr.mxu0 0.0
    %2253 = vmatpush1.msra.mxu0 %v2233
    %2254 = vmatprep.subr.mxu0 0.0
    %2255 = vmatpush1.msra.mxu0 %v2234
    %2256 = vmatprep.subr.mxu0 0.0
    %2257 = vmatpush1.msra.mxu0 %v2235
    %2258 = vmatprep.subr.mxu0 0.0
    %2259 = vmatpush1.msra.mxu0 0.0
    %2260 = vmatprep.subr.mxu0 0.0
    %2261 = vmatpush1.msra.mxu0 0.0
    %2262 = vmatprep.subr.mxu0 0.0
    %2263 = vmatpush1.msra.mxu0 0.0
    %2264 = vmatprep.subr.mxu0 0.0
    %2265 = vmatpush1.msra.mxu0 0.0
    %2266 = vmatprep.subr.mxu0 0.0
    %2267 = vmatpush1.msra.mxu0 0.0
    %2268 = vmatprep.subr.mxu0 0.0
    %2269 = vmatpush1.msra.mxu0 0.0
    %2270 = vmatprep.subr.mxu0 0.0
    %2271 = vmatpush1.msra.mxu0 0.0
    %2272 = vmatprep.subr.mxu0 0.0
    %2273 = vmatpush1.msra.mxu0 0.0
    %2274 = vmatprep.subr.mxu0 0.0
    %2275 = vmatpush1.msra.mxu0 0.0
    %2276 = vmatprep.subr.mxu0 0.0
    %2277 = vmatpush1.msra.mxu0 0.0
    %2278 = vmatprep.subr.mxu0 0.0
    %2279 = vmatpush1.msra.mxu0 0.0
    %2280 = vmatprep.subr.mxu0 0.0
    %2281 = vmatpush1.msra.mxu0 0.0
    %2282 = vmatprep.subr.mxu0 0.0
    %2283 = vmatpush1.msra.mxu0 0.0
    %2284 = vmatprep.subr.mxu0 0.0
    %2285 = vmatpush1.msra.mxu0 0.0
    %2286 = vmatprep.subr.mxu0 0.0
    %2287 = vmatpush1.msra.mxu0 0.0
    %2288 = vmatprep.subr.mxu0 0.0
    %2289 = vmatpush1.msra.mxu0 0.0
    %2290 = vmatprep.subr.mxu0 0.0
    %2291 = vmatpush1.msra.mxu0 0.0
    %2292 = vmatprep.subr.mxu0 0.0
    %2293 = vmatpush1.msra.mxu0 0.0
    %2294 = vmatprep.subr.mxu0 0.0
    %2295 = vmatpush1.msra.mxu0 0.0
    %2296 = vmatprep.subr.mxu0 0.0
    %2297 = vmatpush1.msra.mxu0 0.0
    %2298 = vmatprep.subr.mxu0 0.0
    %2299 = vmatpush1.msra.mxu0 0.0
    %2300 = vmatprep.subr.mxu0 0.0
    %2301 = vmatpush1.msra.mxu0 0.0
    %2302 = vmatprep.subr.mxu0 0.0
    %2303 = vmatpush1.msra.mxu0 0.0
    %2304 = vmatprep.subr.mxu0 0.0
    %2305 = vmatpush1.msra.mxu0 0.0
    %2306 = vmatprep.subr.mxu0 0.0
    %2307 = vmatpush1.msra.mxu0 0.0
    %2308 = vmatprep.subr.mxu0 0.0
    %2309 = vmatpush1.msra.mxu0 0.0
    %2310 = vmatprep.subr.mxu0 0.0
    %2311 = vmatpush1.msra.mxu0 0.0
    %2312 = vmatprep.subr.mxu0 0.0
    %2313 = vmatpush1.msra.mxu0 0.0
    %2314 = vmatprep.mubr.f32.mxu0 0.0
    %2315 = vmatmul.mubr.f32.gmra.mrb[0].mxu0 %v2245
    %v2316 = vpop.f32.mrb[0].mxu0
    %v2317 = vadd.f32 %v2242, %v2316
    %v2318 = vpop.f32.mrb[0].mxu0
    %2319 = vmatprep.mubr.f32.mxu0 0.0
    %2320 = vmatmul.mubr.f32.gmra.mrb[0].mxu0 %v2248
    %v2321 = vpop.f32.mrb[0].mxu0
    %v2322 = vadd.f32 %v2242, %v2321
    %v2323 = vpop.f32.mrb[0].mxu0
    %2324 = vdwg.mxu0
    %v2325 = vadd.f32 %v2317, %v1455
    %v2326 = vadd.f32 %v2322, %v1456
    %s2327 = scalar_lea.vmem [#allocation15], 1
    %v2328 = vld [vmem:[%s2327] sm:$0x1]
    %s2329 = scalar_lea.vmem [#allocation16], 1
    %v2330 = vld [vmem:[%s2329] sm:$0x1]
    %v2331 = vsel %vm238, %v2325, 0.0
    %2332 = vadd.xlane.f32.xlu0 %v2331
    %v2333 = vpop.xlane.xlu0 %2332
    %v2334 = vsel %vm238, %v2326, 0.0
    %2335 = vadd.xlane.f32.xlu0 %v2334
    %v2336 = vpop.xlane.xlu0 %2335
    %v2337 = vmul.f32 %v2333, %v245
    %v2338 = vmul.f32 %v2336, %v245
    %v2339 = vsub.f32 %v2325, %v2337
    %v2340 = vsub.f32 %v2326, %v2338
    %v2341 = vmul.f32 %v2339, %v2339
    %v2342 = vmul.f32 %v2340, %v2340
    %v2343 = vsel %vm238, %v2341, 0.0
    %2344 = vadd.xlane.f32.xlu0 %v2343
    %v2345 = vpop.xlane.xlu0 %2344
    %v2346 = vsel %vm238, %v2342, 0.0
    %2347 = vadd.xlane.f32.xlu0 %v2346
    %v2348 = vpop.xlane.xlu0 %2347
    %v2349 = vmul.f32 %v2345, %v245
    %v2350 = vmul.f32 %v2348, %v245
    %v2351 = vadd.f32 %v2349, 1e-12
    %v2352 = vadd.f32 %v2350, 1e-12
    %v2353 = vrsqrt.pop %v2351
    %v2354 = vrsqrt.pop %v2352
    %v2355 = vmul.f32 %v2339, %v2353
    %v2356 = vmul.f32 %v2340, %v2354
    %v2358 = vlaneseq
    %v2359 = vshrl.u32 %v2358, 7
    %v2360 = vsub.s32 0, %v2359
    %v2361 = vrot.slane %v2328, %v2360
    %v2363 = vmul.f32 %v2355, %v2361
    %v2364 = vmul.f32 %v2356, %v2361
    %v2366 = vlaneseq
    %v2367 = vshrl.u32 %v2366, 7
    %v2368 = vsub.s32 0, %v2367
    %v2369 = vrot.slane %v2330, %v2368
    %v2371 = vadd.f32 %v2363, %v2369
    %v2372 = vadd.f32 %v2364, %v2369
    %s2373 = scalar_lea.vmem %s10, 32
    %v2374 = vld [vmem:[%s2373] sm:$0xff]
    %v2375 = vld [vmem:[%s2373 + $0x8] sm:$0xff]
    %v2376 = vld [vmem:[%s2373 + $0x10] sm:$0xff]
    %v2377 = vld [vmem:[%s2373 + $0x18] sm:$0xff]
    %s2378 = scalar_lea.vmem [#allocation18], 1
    %v2379 = vld [vmem:[%s2378] sm:$0x1]
    %v2381 = vlaneseq
    %v2382 = vshrl.u32 %v2381, 7
    %v2383 = vsub.s32 0, %v2382
    %v2384 = vrot.slane %v2379, %v2383
    %v2387 = vsel %vm238, %v2371, 0
    %v2390 = vsel %vm238, %v2372, 0
    %2392 = vmatprep.subr.mxu0 0.0
    %2393 = vmatpush1.msra.mxu0 %v2374
    %2394 = vmatprep.subr.mxu0 0.0
    %2395 = vmatpush1.msra.mxu0 %v2375
    %2396 = vmatprep.subr.mxu0 0.0
    %2397 = vmatpush1.msra.mxu0 %v2376
    %2398 = vmatprep.subr.mxu0 0.0
    %2399 = vmatpush1.msra.mxu0 %v2377
    %2400 = vmatprep.subr.mxu0 0.0
    %2401 = vmatpush1.msra.mxu0 0.0
    %2402 = vmatprep.subr.mxu0 0.0
    %2403 = vmatpush1.msra.mxu0 0.0
    %2404 = vmatprep.subr.mxu0 0.0
    %2405 = vmatpush1.msra.mxu0 0.0
    %2406 = vmatprep.subr.mxu0 0.0
    %2407 = vmatpush1.msra.mxu0 0.0
    %2408 = vmatprep.subr.mxu0 0.0
    %2409 = vmatpush1.msra.mxu0 0.0
    %2410 = vmatprep.subr.mxu0 0.0
    %2411 = vmatpush1.msra.mxu0 0.0
    %2412 = vmatprep.subr.mxu0 0.0
    %2413 = vmatpush1.msra.mxu0 0.0
    %2414 = vmatprep.subr.mxu0 0.0
    %2415 = vmatpush1.msra.mxu0 0.0
    %2416 = vmatprep.subr.mxu0 0.0
    %2417 = vmatpush1.msra.mxu0 0.0
    %2418 = vmatprep.subr.mxu0 0.0
    %2419 = vmatpush1.msra.mxu0 0.0
    %2420 = vmatprep.subr.mxu0 0.0
    %2421 = vmatpush1.msra.mxu0 0.0
    %2422 = vmatprep.subr.mxu0 0.0
    %2423 = vmatpush1.msra.mxu0 0.0
    %2424 = vmatprep.subr.mxu0 0.0
    %2425 = vmatpush1.msra.mxu0 0.0
    %2426 = vmatprep.subr.mxu0 0.0
    %2427 = vmatpush1.msra.mxu0 0.0
    %2428 = vmatprep.subr.mxu0 0.0
    %2429 = vmatpush1.msra.mxu0 0.0
    %2430 = vmatprep.subr.mxu0 0.0
    %2431 = vmatpush1.msra.mxu0 0.0
    %2432 = vmatprep.subr.mxu0 0.0
    %2433 = vmatpush1.msra.mxu0 0.0
    %2434 = vmatprep.subr.mxu0 0.0
    %2435 = vmatpush1.msra.mxu0 0.0
    %2436 = vmatprep.subr.mxu0 0.0
    %2437 = vmatpush1.msra.mxu0 0.0
    %2438 = vmatprep.subr.mxu0 0.0
    %2439 = vmatpush1.msra.mxu0 0.0
    %2440 = vmatprep.subr.mxu0 0.0
    %2441 = vmatpush1.msra.mxu0 0.0
    %2442 = vmatprep.subr.mxu0 0.0
    %2443 = vmatpush1.msra.mxu0 0.0
    %2444 = vmatprep.subr.mxu0 0.0
    %2445 = vmatpush1.msra.mxu0 0.0
    %2446 = vmatprep.subr.mxu0 0.0
    %2447 = vmatpush1.msra.mxu0 0.0
    %2448 = vmatprep.subr.mxu0 0.0
    %2449 = vmatpush1.msra.mxu0 0.0
    %2450 = vmatprep.subr.mxu0 0.0
    %2451 = vmatpush1.msra.mxu0 0.0
    %2452 = vmatprep.subr.mxu0 0.0
    %2453 = vmatpush1.msra.mxu0 0.0
    %2454 = vmatprep.subr.mxu0 0.0
    %2455 = vmatpush1.msra.mxu0 0.0
    %2456 = vmatprep.mubr.f32.mxu0 0.0
    %2457 = vmatmul.mubr.f32.gmra.mrb[0].mxu0 %v2387
    %v2458 = vpop.f32.mrb[0].mxu0
    %v2459 = vadd.f32 %v2384, %v2458
    %v2460 = vpop.f32.mrb[0].mxu0
    %2461 = vmatprep.mubr.f32.mxu0 0.0
    %2462 = vmatmul.mubr.f32.gmra.mrb[0].mxu0 %v2390
    %v2463 = vpop.f32.mrb[0].mxu0
    %v2464 = vadd.f32 %v2384, %v2463
    %v2465 = vpop.f32.mrb[0].mxu0
    %2466 = vdwg.mxu0
    %v2467 = vmul.f32 %v2459, 0.5
    %v2468 = vmul.f32 %v2464, 0.5
    %v2469 = vmul.f32 %v2459, 0.044715
    %v2470 = vmul.f32 %v2464, 0.044715
    %v2471 = vmul.f32 %v2469, %v2459
    %v2472 = vmul.f32 %v2470, %v2464
    %v2473 = vmul.f32 %v2471, %v2459
    %v2474 = vmul.f32 %v2472, %v2464
    %v2475 = vadd.f32 %v2459, %v2473
    %v2476 = vadd.f32 %v2464, %v2474
    %v2477 = vmul.f32 %v2475, 0.7978846
    %v2478 = vmul.f32 %v2476, 0.7978846
    %v2479 = vtanh.pop %v2477
    %v2480 = vtanh.pop %v2478
    %v2481 = vadd.f32 %v2479, 1.0
    %v2482 = vadd.f32 %v2480, 1.0
    %v2483 = vmul.f32 %v2467, %v2481
    %v2484 = vmul.f32 %v2468, %v2482
    %s2485 = scalar_lea.vmem %s12, 64
    %v2486 = vld [vmem:[%s2485] sm:$0xff]
    %v2487 = vld [vmem:[%s2485 + $0x8] sm:$0xff]
    %v2488 = vld [vmem:[%s2485 + $0x10] sm:$0xff]
    %v2489 = vld [vmem:[%s2485 + $0x18] sm:$0xff]
    %v2490 = vld [vmem:[%s2485 + $0x20] sm:$0xff]
    %v2491 = vld [vmem:[%s2485 + $0x28] sm:$0xff]
    %v2492 = vld [vmem:[%s2485 + $0x30] sm:$0xff]
    %v2493 = vld [vmem:[%s2485 + $0x38] sm:$0xff]
    %s2494 = scalar_lea.vmem [#allocation19], 1
    %v2495 = vld [vmem:[%s2494] sm:$0x1]
    %v2497 = vlaneseq
    %v2498 = vshrl.u32 %v2497, 7
    %v2499 = vsub.s32 0, %v2498
    %v2500 = vrot.slane %v2495, %v2499
    %v2503 = vsel %vm1329, %v2483, 0
    %v2506 = vsel %vm1329, %v2484, 0
    %2508 = vmatprep.subr.mxu0 0.0
    %2509 = vmatpush1.msra.mxu0 %v2486
    %2510 = vmatprep.subr.mxu0 0.0
    %2511 = vmatpush1.msra.mxu0 %v2487
    %2512 = vmatprep.subr.mxu0 0.0
    %2513 = vmatpush1.msra.mxu0 %v2488
    %2514 = vmatprep.subr.mxu0 0.0
    %2515 = vmatpush1.msra.mxu0 %v2489
    %2516 = vmatprep.subr.mxu0 0.0
    %2517 = vmatpush1.msra.mxu0 %v2490
    %2518 = vmatprep.subr.mxu0 0.0
    %2519 = vmatpush1.msra.mxu0 %v2491
    %2520 = vmatprep.subr.mxu0 0.0
    %2521 = vmatpush1.msra.mxu0 %v2492
    %2522 = vmatprep.subr.mxu0 0.0
    %2523 = vmatpush1.msra.mxu0 %v2493
    %2524 = vmatprep.subr.mxu0 0.0
    %2525 = vmatpush1.msra.mxu0 0.0
    %2526 = vmatprep.subr.mxu0 0.0
    %2527 = vmatpush1.msra.mxu0 0.0
    %2528 = vmatprep.subr.mxu0 0.0
    %2529 = vmatpush1.msra.mxu0 0.0
    %2530 = vmatprep.subr.mxu0 0.0
    %2531 = vmatpush1.msra.mxu0 0.0
    %2532 = vmatprep.subr.mxu0 0.0
    %2533 = vmatpush1.msra.mxu0 0.0
    %2534 = vmatprep.subr.mxu0 0.0
    %2535 = vmatpush1.msra.mxu0 0.0
    %2536 = vmatprep.subr.mxu0 0.0
    %2537 = vmatpush1.msra.mxu0 0.0
    %2538 = vmatprep.subr.mxu0 0.0
    %2539 = vmatpush1.msra.mxu0 0.0
    %2540 = vmatprep.subr.mxu0 0.0
    %2541 = vmatpush1.msra.mxu0 0.0
    %2542 = vmatprep.subr.mxu0 0.0
    %2543 = vmatpush1.msra.mxu0 0.0
    %2544 = vmatprep.subr.mxu0 0.0
    %2545 = vmatpush1.msra.mxu0 0.0
    %2546 = vmatprep.subr.mxu0 0.0
    %2547 = vmatpush1.msra.mxu0 0.0
    %2548 = vmatprep.subr.mxu0 0.0
    %2549 = vmatpush1.msra.mxu0 0.0
    %2550 = vmatprep.subr.mxu0 0.0
    %2551 = vmatpush1.msra.mxu0 0.0
    %2552 = vmatprep.subr.mxu0 0.0
    %2553 = vmatpush1.msra.mxu0 0.0
    %2554 = vmatprep.subr.mxu0 0.0
    %2555 = vmatpush1.msra.mxu0 0.0
    %2556 = vmatprep.subr.mxu0 0.0
    %2557 = vmatpush1.msra.mxu0 0.0
    %2558 = vmatprep.subr.mxu0 0.0
    %2559 = vmatpush1.msra.mxu0 0.0
    %2560 = vmatprep.subr.mxu0 0.0
    %2561 = vmatpush1.msra.mxu0 0.0
    %2562 = vmatprep.subr.mxu0 0.0
    %2563 = vmatpush1.msra.mxu0 0.0
    %2564 = vmatprep.subr.mxu0 0.0
    %2565 = vmatpush1.msra.mxu0 0.0
    %2566 = vmatprep.subr.mxu0 0.0
    %2567 = vmatpush1.msra.mxu0 0.0
    %2568 = vmatprep.subr.mxu0 0.0
    %2569 = vmatpush1.msra.mxu0 0.0
    %2570 = vmatprep.subr.mxu0 0.0
    %2571 = vmatpush1.msra.mxu0 0.0
    %2572 = vmatprep.mubr.f32.mxu0 0.0
    %2573 = vmatmul.mubr.f32.gmra.mrb[0].mxu0 %v2503
    %v2574 = vpop.f32.mrb[0].mxu0
    %v2575 = vadd.f32 %v2500, %v2574
    %v2576 = vpop.f32.mrb[0].mxu0
    %2577 = vmatprep.mubr.f32.mxu0 0.0
    %2578 = vmatmul.mubr.f32.gmra.mrb[0].mxu0 %v2506
    %v2579 = vpop.f32.mrb[0].mxu0
    %v2580 = vadd.f32 %v2500, %v2579
    %v2581 = vpop.f32.mrb[0].mxu0
    %2582 = vdwg.mxu0
    %v2583 = vadd.f32 %v2575, %v2371
    %v2584 = vadd.f32 %v2580, %v2372
    %s2585 = scalar_lea.vmem [#allocation21], 1
    %v2586 = vld [vmem:[%s2585] sm:$0x1]
    %s2587 = scalar_lea.vmem [#allocation22], 1
    %v2588 = vld [vmem:[%s2587] sm:$0x1]
    %v2589 = vsel %vm238, %v2583, 0.0
    %2590 = vadd.xlane.f32.xlu0 %v2589
    %v2591 = vpop.xlane.xlu0 %2590
    %v2592 = vsel %vm238, %v2584, 0.0
    %2593 = vadd.xlane.f32.xlu0 %v2592
    %v2594 = vpop.xlane.xlu0 %2593
    %v2595 = vmul.f32 %v2591, %v245
    %v2596 = vmul.f32 %v2594, %v245
    %v2597 = vsub.f32 %v2583, %v2595
    %v2598 = vsub.f32 %v2584, %v2596
    %v2599 = vmul.f32 %v2597, %v2597
    %v2600 = vmul.f32 %v2598, %v2598
    %v2601 = vsel %vm238, %v2599, 0.0
    %2602 = vadd.xlane.f32.xlu0 %v2601
    %v2603 = vpop.xlane.xlu0 %2602
    %v2604 = vsel %vm238, %v2600, 0.0
    %2605 = vadd.xlane.f32.xlu0 %v2604
    %v2606 = vpop.xlane.xlu0 %2605
    %v2607 = vmul.f32 %v2603, %v245
    %v2608 = vmul.f32 %v2606, %v245
    %v2609 = vadd.f32 %v2607, 1e-12
    %v2610 = vadd.f32 %v2608, 1e-12
    %v2611 = vrsqrt.pop %v2609
    %v2612 = vrsqrt.pop %v2610
    %v2613 = vmul.f32 %v2597, %v2611
    %v2614 = vmul.f32 %v2598, %v2612
    %v2616 = vlaneseq
    %v2617 = vshrl.u32 %v2616, 7
    %v2618 = vsub.s32 0, %v2617
    %v2619 = vrot.slane %v2586, %v2618
    %v2621 = vmul.f32 %v2613, %v2619
    %v2622 = vmul.f32 %v2614, %v2619
    %v2624 = vlaneseq
    %v2625 = vshrl.u32 %v2624, 7
    %v2626 = vsub.s32 0, %v2625
    %v2627 = vrot.slane %v2588, %v2626
    %v2629 = vadd.f32 %v2621, %v2627
    %v2630 = vadd.f32 %v2622, %v2627
    %vm2631 = vcmask 253952
    %2632 = vst.msk [vmem:[#allocation3] sm:$0x1] %vm2631, %v2629
    %2633 = vst.msk [vmem:[#allocation3 + $0x1] sm:$0x1] %vm2631, %v2630
    %v2634 = vld [vmem:[#allocation3] sm:$0x3]
    %v2635 = vld [vmem:[%s16] sm:$0xff]
    %v2636 = vld [vmem:[%s16 + $0x8] sm:$0xff]
    %v2637 = vld [vmem:[%s16 + $0x10] sm:$0xff]
    %v2638 = vld [vmem:[%s16 + $0x18] sm:$0xff]
    %v2639 = vld [vmem:[#allocation24] sm:$0x1]
    %v2641 = vlaneseq
    %v2642 = vshrl.u32 %v2641, 7
    %v2643 = vsub.s32 0, %v2642
    %v2644 = vrot.slane %v2639, %v2643
    %v2647 = vsel %vm238, %v2634, 0
    %2649 = vmatprep.subr.mxu0 0.0
    %2650 = vmatpush1.msra.mxu0 %v2635
    %2651 = vmatprep.subr.mxu0 0.0
    %2652 = vmatpush1.msra.mxu0 %v2636
    %2653 = vmatprep.subr.mxu0 0.0
    %2654 = vmatpush1.msra.mxu0 %v2637
    %2655 = vmatprep.subr.mxu0 0.0
    %2656 = vmatpush1.msra.mxu0 %v2638
    %2657 = vmatprep.subr.mxu0 0.0
    %2658 = vmatpush1.msra.mxu0 0.0
    %2659 = vmatprep.subr.mxu0 0.0
    %2660 = vmatpush1.msra.mxu0 0.0
    %2661 = vmatprep.subr.mxu0 0.0
    %2662 = vmatpush1.msra.mxu0 0.0
    %2663 = vmatprep.subr.mxu0 0.0
    %2664 = vmatpush1.msra.mxu0 0.0
    %2665 = vmatprep.subr.mxu0 0.0
    %2666 = vmatpush1.msra.mxu0 0.0
    %2667 = vmatprep.subr.mxu0 0.0
    %2668 = vmatpush1.msra.mxu0 0.0
    %2669 = vmatprep.subr.mxu0 0.0
    %2670 = vmatpush1.msra.mxu0 0.0
    %2671 = vmatprep.subr.mxu0 0.0
    %2672 = vmatpush1.msra.mxu0 0.0
    %2673 = vmatprep.subr.mxu0 0.0
    %2674 = vmatpush1.msra.mxu0 0.0
    %2675 = vmatprep.subr.mxu0 0.0
    %2676 = vmatpush1.msra.mxu0 0.0
    %2677 = vmatprep.subr.mxu0 0.0
    %2678 = vmatpush1.msra.mxu0 0.0
    %2679 = vmatprep.subr.mxu0 0.0
    %2680 = vmatpush1.msra.mxu0 0.0
    %2681 = vmatprep.subr.mxu0 0.0
    %2682 = vmatpush1.msra.mxu0 0.0
    %2683 = vmatprep.subr.mxu0 0.0
    %2684 = vmatpush1.msra.mxu0 0.0
    %2685 = vmatprep.subr.mxu0 0.0
    %2686 = vmatpush1.msra.mxu0 0.0
    %2687 = vmatprep.subr.mxu0 0.0
    %2688 = vmatpush1.msra.mxu0 0.0
    %2689 = vmatprep.subr.mxu0 0.0
    %2690 = vmatpush1.msra.mxu0 0.0
    %2691 = vmatprep.subr.mxu0 0.0
    %2692 = vmatpush1.msra.mxu0 0.0
    %2693 = vmatprep.subr.mxu0 0.0
    %2694 = vmatpush1.msra.mxu0 0.0
    %2695 = vmatprep.subr.mxu0 0.0
    %2696 = vmatpush1.msra.mxu0 0.0
    %2697 = vmatprep.subr.mxu0 0.0
    %2698 = vmatpush1.msra.mxu0 0.0
    %2699 = vmatprep.subr.mxu0 0.0
    %2700 = vmatpush1.msra.mxu0 0.0
    %2701 = vmatprep.subr.mxu0 0.0
    %2702 = vmatpush1.msra.mxu0 0.0
    %2703 = vmatprep.subr.mxu0 0.0
    %2704 = vmatpush1.msra.mxu0 0.0
    %2705 = vmatprep.subr.mxu0 0.0
    %2706 = vmatpush1.msra.mxu0 0.0
    %2707 = vmatprep.subr.mxu0 0.0
    %2708 = vmatpush1.msra.mxu0 0.0
    %2709 = vmatprep.subr.mxu0 0.0
    %2710 = vmatpush1.msra.mxu0 0.0
    %2711 = vmatprep.subr.mxu0 0.0
    %2712 = vmatpush1.msra.mxu0 0.0
    %2713 = vmatprep.mubr.f32.mxu0 0.0
    %2714 = vmatmul.mubr.f32.gmra.mrb[0].mxu0 %v2647
    %v2715 = vpop.f32.mrb[0].mxu0
    %v2716 = vadd.f32 %v2644, %v2715
    %v2717 = vpop.f32.mrb[0].mxu0
    %2718 = vdwg.mxu0
    %v2719 = vtanh.pop %v2716
    %v2720 = vld [vmem:[%s18] sm:$0xff]
    %v2721 = vld [vmem:[%s18 + $0x8] sm:$0xff]
    %v2722 = vld [vmem:[%s18 + $0x10] sm:$0xff]
    %v2723 = vld [vmem:[%s18 + $0x18] sm:$0xff]
    %v2724 = vld [vmem:[%s19] sm:$0x1]
    %v2726 = vlaneseq
    %v2727 = vshrl.u32 %v2726, 7
    %v2728 = vsub.s32 0, %v2727
    %v2729 = vrot.slane %v2724, %v2728
    %v2732 = vsel %vm238, %v2719, 0
    %2734 = vmatprep.subr.mxu0 0.0
    %2735 = vmatpush1.msra.mxu0 %v2720
    %2736 = vmatprep.subr.mxu0 0.0
    %2737 = vmatpush1.msra.mxu0 %v2721
    %2738 = vmatprep.subr.mxu0 0.0
    %2739 = vmatpush1.msra.mxu0 %v2722
    %2740 = vmatprep.subr.mxu0 0.0
    %2741 = vmatpush1.msra.mxu0 %v2723
    %2742 = vmatprep.subr.mxu0 0.0
    %2743 = vmatpush1.msra.mxu0 0.0
    %2744 = vmatprep.subr.mxu0 0.0
    %2745 = vmatpush1.msra.mxu0 0.0
    %2746 = vmatprep.subr.mxu0 0.0
    %2747 = vmatpush1.msra.mxu0 0.0
    %2748 = vmatprep.subr.mxu0 0.0
    %2749 = vmatpush1.msra.mxu0 0.0
    %2750 = vmatprep.subr.mxu0 0.0
    %2751 = vmatpush1.msra.mxu0 0.0
    %2752 = vmatprep.subr.mxu0 0.0
    %2753 = vmatpush1.msra.mxu0 0.0
    %2754 = vmatprep.subr.mxu0 0.0
    %2755 = vmatpush1.msra.mxu0 0.0
    %2756 = vmatprep.subr.mxu0 0.0
    %2757 = vmatpush1.msra.mxu0 0.0
    %2758 = vmatprep.subr.mxu0 0.0
    %2759 = vmatpush1.msra.mxu0 0.0
    %2760 = vmatprep.subr.mxu0 0.0
    %2761 = vmatpush1.msra.mxu0 0.0
    %2762 = vmatprep.subr.mxu0 0.0
    %2763 = vmatpush1.msra.mxu0 0.0
    %2764 = vmatprep.subr.mxu0 0.0
    %2765 = vmatpush1.msra.mxu0 0.0
    %2766 = vmatprep.subr.mxu0 0.0
    %2767 = vmatpush1.msra.mxu0 0.0
    %2768 = vmatprep.subr.mxu0 0.0
    %2769 = vmatpush1.msra.mxu0 0.0
    %2770 = vmatprep.subr.mxu0 0.0
    %2771 = vmatpush1.msra.mxu0 0.0
    %2772 = vmatprep.subr.mxu0 0.0
    %2773 = vmatpush1.msra.mxu0 0.0
    %2774 = vmatprep.subr.mxu0 0.0
    %2775 = vmatpush1.msra.mxu0 0.0
    %2776 = vmatprep.subr.mxu0 0.0
    %2777 = vmatpush1.msra.mxu0 0.0
    %2778 = vmatprep.subr.mxu0 0.0
    %2779 = vmatpush1.msra.mxu0 0.0
    %2780 = vmatprep.subr.mxu0 0.0
    %2781 = vmatpush1.msra.mxu0 0.0
    %2782 = vmatprep.subr.mxu0 0.0
    %2783 = vmatpush1.msra.mxu0 0.0
    %2784 = vmatprep.subr.mxu0 0.0
    %2785 = vmatpush1.msra.mxu0 0.0
    %2786 = vmatprep.subr.mxu0 0.0
    %2787 = vmatpush1.msra.mxu0 0.0
    %2788 = vmatprep.subr.mxu0 0.0
    %2789 = vmatpush1.msra.mxu0 0.0
    %2790 = vmatprep.subr.mxu0 0.0
    %2791 = vmatpush1.msra.mxu0 0.0
    %2792 = vmatprep.subr.mxu0 0.0
    %2793 = vmatpush1.msra.mxu0 0.0
    %2794 = vmatprep.subr.mxu0 0.0
    %2795 = vmatpush1.msra.mxu0 0.0
    %2796 = vmatprep.subr.mxu0 0.0
    %2797 = vmatpush1.msra.mxu0 0.0
    %2798 = vmatprep.mubr.f32.mxu0 0.0
    %2799 = vmatmul.mubr.f32.gmra.mrb[0].mxu0 %v2732
    %v2800 = vpop.f32.mrb[0].mxu0
    %v2801 = vadd.f32 %v2729, %v2800
    %v2802 = vpop.f32.mrb[0].mxu0
    %2803 = vdwg.mxu0
    %v2804 = vmax.f32 %v2801, 0.0
    %vm2805 = vcmask 123904
    %2806 = vst.msk [vmem:[#allocation25] sm:$0x3] %vm2805, %v2804
    // Predicated region
    $region134: #{tpu_custom_call.1} parent=1 // pred_check
      _
    $region135: #{tpu_custom_call.1} parent=1 // pred_check_branch
      %2808 = sbr.rel (0) target = $region137
    $region136: #{tpu_custom_call.1} parent=1 // pred_region
      %s2810 = ssub.s32 32, 32
      %2811 = vsyncadd [#allocation6], %s2810
      %s2813 = sshll.u32 [#allocation25], 4
      %s2814 = int_to_ptr.vmem [resolvable:$true] %s2813
      %2816 = dma.vmem_to_hbm [thread:$0]  %s2814, 32, %s20, [#allocation6]
    $region137: #{tpu_custom_call.1} parent=1 // pred_fallthru
      _
    // Predicated region
    $region138: #{tpu_custom_call.1} parent=1 // pred_check
      _
    $region139: #{tpu_custom_call.1} parent=1 // pred_check_branch
      %2818 = sbr.rel (0) target = $region141
    $region140: #{tpu_custom_call.1} parent=1 // pred_region
      %2819 = dma.done [#allocation6], 32
    $region141: #{tpu_custom_call.1} parent=1 // pred_fallthru
      _
    %2820 = vsyncpa [#allocation5], 1
    %2821 = vsyncpa [#allocation8], 1
    %2822 = vsyncpa [#allocation11], 1
    %2823 = vsyncpa [#allocation14], 1
    %2824 = vsyncpa [#allocation17], 1
    %2825 = vsyncpa [#allocation20], 1
    %2826 = vsyncpa [#allocation23], 1
    %2827 = vsyncpa [#allocation6], 1

</llo_original>
